<compile_context>
chip_gen: v5e
topology: v5e:2x2
jax: 0.10.0
libtpu: 0.0.40
codegen_flags: <defaults>
</compile_context>

<pallas_src>
import functools

import jax
import jax.numpy as jnp
from jax.experimental import pallas as pl
from jax.experimental.pallas import tpu as pltpu


# ----------------------------------------------------------------------------
# Fused kernel: all LSTM layers + attention + online-softmax pooling
# ----------------------------------------------------------------------------
def fused_attention_lstm_kernel(*args, num_layers, hidden, seq_len, block_batch,
                                matmul_dtype):
    """Refs layout:
         in : xg0 [T, TB, 4H] (layer-0 input projection, precomputed outside),
              w_hh0 [H, 4H],
              (w_ih_l [H,4H], w_hh_l [H,4H], b_l [1,4H]) for l = 1..L-1,
              w1 [H, H], b1 [1, H], w2 [H, 1], b2 [1, 1]
         out: ctx [TB, H]      (attention-pooled context; FC head done outside)
         scr: xg_scr [T*TB, 4H] (only if L > 1), seq_scr [T*TB, H]
    """
    H = hidden
    T = seq_len
    TB = block_batch
    md = matmul_dtype

    n_extra = 3 * (num_layers - 1)
    xg0_ref, w_hh0_ref = args[0], args[1]
    layer_refs = args[2:2 + n_extra]
    w1_ref, b1_ref, w2_ref, b2_ref = args[2 + n_extra:2 + n_extra + 4]
    ctx_ref = args[2 + n_extra + 4]
    scratch = args[2 + n_extra + 5:]
    if num_layers > 1:
        xg_scr, seq_scr = scratch
    else:
        xg_scr = None
        (seq_scr,) = scratch

    # Two independent (h, c) chains per step fill the MXU/EUP/VPU latency bubbles of
    # the serially-dependent recurrence when the batch tile is big enough to split.
    n_chains = 2 if (TB >= 16 and TB % 16 == 0) else 1
    TBC = TB // n_chains
    unrolled = T <= 16           # fully unroll short static sequences (LLO visibility)

    def row_start(t):
        row = t * TB
        if not isinstance(row, int):                 # dynamic index (fori path)
            row = pl.multiple_of(row, TB)
        return row

    # ---------------------------------------------------------------- recurrence ----
    def run_recurrence(get_xg_chunk, w_hh):
        """Serial LSTM time loop: one h@W_hh matmul per step and chain (input
        projections hoisted); gate math and cell state stay f32."""

        def step(t, carry):
            row = row_start(t)
            new = []
            for ci in range(n_chains):
                h, c = carry[2 * ci], carry[2 * ci + 1]
                gates = get_xg_chunk(t, ci) + jnp.dot(
                    h.astype(md), w_hh, preferred_element_type=jnp.float32)
                i_g = jax.nn.sigmoid(gates[:, 0 * H:1 * H])
                f_g = jax.nn.sigmoid(gates[:, 1 * H:2 * H])
                g_g = jnp.tanh(gates[:, 2 * H:3 * H])
                o_g = jax.nn.sigmoid(gates[:, 3 * H:4 * H])
                c_new = f_g * c + i_g * g_g                    # f32 cell state
                h_new = o_g * jnp.tanh(c_new)
                seq_scr[pl.ds(row + ci * TBC, TBC), :] = h_new.astype(seq_scr.dtype)
                new += [h_new, c_new]
            return tuple(new)

        carry0 = tuple(jnp.zeros((TBC, H), jnp.float32) for _ in range(2 * n_chains))
        if unrolled:
            carry = carry0
            for t in range(T):
                carry = step(t, carry)
        else:
            jax.lax.fori_loop(0, T, step, carry0, unroll=2)

    # ---- layer 0: x@W_ih (+bias) precomputed outside as one big matmul -------------
    def xg0_chunk(t, ci):
        slab = xg0_ref[t]                                       # [TB, 4H]
        return slab[ci * TBC:(ci + 1) * TBC, :].astype(jnp.float32)

    run_recurrence(xg0_chunk, w_hh0_ref[...])

    # ---- layers 1..L-1: hoist the full-sequence input projection (per-t chunks) ----
    def xg_scr_chunk(t, ci):
        row = row_start(t)
        return xg_scr[pl.ds(row + ci * TBC, TBC), :].astype(jnp.float32)

    def project_layer(w_ih, b_row):
        def body(t):
            row = row_start(t)
            h_t = seq_scr[pl.ds(row, TB), :]
            xg = jnp.dot(h_t.astype(md), w_ih,
                         preferred_element_type=jnp.float32) + b_row
            xg_scr[pl.ds(row, TB), :] = xg.astype(xg_scr.dtype)

        if unrolled:
            for t in range(T):
                body(t)
        else:
            @pl.loop(0, T)
            def _(t):
                body(t)

    for l in range(1, num_layers):
        w_ih_ref, w_hh_ref, b_ref = layer_refs[3 * (l - 1):3 * l]
        project_layer(w_ih_ref[...], b_ref[...])
        run_recurrence(xg_scr_chunk, w_hh_ref[...])

    # ---- attention head: per-timestep score matmuls + online softmax pooling -------
    w1 = w1_ref[...]
    b1 = b1_ref[...]
    w2 = w2_ref[...]
    b2 = b2_ref[...]

    def att_step(t, carry):
        m, l_sum, ctx = carry
        row = row_start(t)
        h_t = seq_scr[pl.ds(row, TB), :]
        e = jnp.tanh(jnp.dot(h_t.astype(md), w1,
                             preferred_element_type=jnp.float32) + b1)
        s = jnp.dot(e.astype(md), w2,
                    preferred_element_type=jnp.float32) + b2          # [TB, 1]
        m_new = jnp.maximum(m, s)
        alpha = jnp.exp(m - m_new)
        p = jnp.exp(s - m_new)
        return (m_new, alpha * l_sum + p, alpha * ctx + p * h_t.astype(jnp.float32))

    init = (jnp.full((TB, 1), -jnp.inf, jnp.float32),
            jnp.zeros((TB, 1), jnp.float32),
            jnp.zeros((TB, H), jnp.float32))
    if unrolled:
        carry = init
        for t in range(T):
            carry = att_step(t, carry)
    else:
        carry = jax.lax.fori_loop(0, T, att_step, init)
    _, l_sum, ctx = carry
    ctx_ref[...] = ctx / l_sum


# ----------------------------------------------------------------------------
# Parameter preparation (transpose / cast ONCE, outside the forward)
# ----------------------------------------------------------------------------
def prepare_params(params, matmul_dtype=jnp.float32, store_dtype=None):
    if store_dtype is None:
        store_dtype = (jnp.bfloat16 if jnp.dtype(matmul_dtype) == jnp.dtype(jnp.bfloat16)
                       else jnp.float32)
    layers = []
    for (w_ih, w_hh, b_ih, b_hh) in params["lstm"]:
        layers.append((
            jnp.asarray(w_ih.T, matmul_dtype),               # [Din, 4H]
            jnp.asarray(w_hh.T, matmul_dtype),               # [H, 4H]
            (b_ih + b_hh)[None, :].astype(jnp.float32),      # [1, 4H]
        ))
    return {
        "lstm": tuple(layers),
        "w1": jnp.asarray(params["w1"].T, matmul_dtype),     # [H, H]
        "b1": params["b1"][None, :].astype(jnp.float32),     # [1, H]
        "w2": jnp.asarray(params["w2"].T, matmul_dtype),     # [H, 1]
        "b2": params["b2"][None, :].astype(jnp.float32),     # [1, 1]
        "fcw": jnp.asarray(params["fcw"].T, jnp.float32),    # [H, 2]  (FC done in XLA)
        "fcb": params["fcb"][None, :].astype(jnp.float32),   # [1, 2]
        "matmul_dtype": matmul_dtype,
        "store_dtype": store_dtype,
    }


# ----------------------------------------------------------------------------
# Forward pass (PyTorch-compatible semantics, lengths=None path)
# ----------------------------------------------------------------------------
def attention_lstm_forward(x_btd, prepared, *, block_b=None):
    """x_btd: [B, T, D] (batch_first). Returns predictions [B, 2]."""
    # TODO(synk): variable-length (pack_padded_sequence) path not implemented.
    layers = prepared["lstm"]
    L = len(layers)
    md = prepared["matmul_dtype"]
    sd = prepared["store_dtype"]
    B, T, D = x_btd.shape
    H = layers[0][1].shape[0]                        # w_hh is [H, 4H]
    G = 4 * H

    if block_b is None:
        if B <= 128:
            block_b = B                              # toy / small batches: one tile
        else:
            block_b = B
            for cand in (256, 128, 64, 32, 16, 8):   # keep >=2 tiles (v7x 2 TCs), mult of 8
                if B % cand == 0:
                    block_b = cand
                    break
    grid_b = pl.cdiv(B, block_b)

    # Layer-0 input projection hoisted into one big MXU-friendly matmul.  The raw
    # D-wide input is transposed to time-major BEFORE the projection so the 4H-wide
    # xg0 is emitted already in the layout the kernel consumes.
    w_ih0, w_hh0, b0 = layers[0]
    x_tbd = jnp.transpose(x_btd, (1, 0, 2)).reshape(T * B, D)
    xg0 = (jnp.dot(x_tbd.astype(md), w_ih0, preferred_element_type=jnp.float32) + b0)
    xg0 = xg0.reshape(T, B, G).astype(sd)            # bf16 storage halves the DMA

    args = [xg0, w_hh0]
    in_specs = [
        pl.BlockSpec((T, block_b, G), lambda b: (0, b, 0)),
        pl.BlockSpec(w_hh0.shape, lambda b: (0, 0)),
    ]
    for (w_ih, w_hh, b_row) in layers[1:]:
        for w in (w_ih, w_hh, b_row):
            args.append(w)
            in_specs.append(pl.BlockSpec(w.shape, lambda b: (0, 0)))
    for name in ("w1", "b1", "w2", "b2"):
        w = prepared[name]
        args.append(w)
        in_specs.append(pl.BlockSpec(w.shape, lambda b: (0, 0)))

    scratch_shapes = []
    if L > 1:
        scratch_shapes.append(pltpu.VMEM((T * block_b, G), sd))   # hoisted x-gates
    scratch_shapes.append(pltpu.VMEM((T * block_b, H), sd))       # hidden states

    # Generation-aware VMEM budget (xg0 block is double-buffered by the pipeline).
    sd_bytes = jnp.dtype(sd).itemsize
    md_bytes = jnp.dtype(md).itemsize
    needed = (2 * T * block_b * G * sd_bytes
              + (T * block_b * G * sd_bytes if L > 1 else 0)
              + T * block_b * H * sd_bytes
              + (2 * L + 4) * H * G * md_bytes
              + 2 * block_b * H * 4)
    cap = 64 * 1024 * 1024                                        # safe v7x fallback
    try:
        cap = int(getattr(pltpu.get_tpu_info(), "vmem_capacity_bytes", cap))
    except Exception:
        pass
    vmem_limit = min(int(cap * 0.9), max(32 * 1024 * 1024, needed + (8 << 20)))

    kern = functools.partial(
        fused_attention_lstm_kernel,
        num_layers=L, hidden=H, seq_len=T, block_batch=block_b, matmul_dtype=md)

    ctx = pl.pallas_call(
        kern,
        out_shape=jax.ShapeDtypeStruct((B, H), jnp.float32),      # lane-dense output
        grid=(grid_b,),
        in_specs=in_specs,
        out_specs=pl.BlockSpec((block_b, H), lambda b: (b, 0)),
        scratch_shapes=scratch_shapes,
        compiler_params=pltpu.CompilerParams(
            dimension_semantics=("parallel",),       # batch axis -> megacore / 2 TCs
            vmem_limit_bytes=vmem_limit,
        ),
    )(*args)

    # Tiny [H, 2] FC head in XLA (keeps the kernel output lane-dense).
    return ctx @ prepared["fcw"] + prepared["fcb"]


# ----------------------------------------------------------------------------
# Pure-JAX reference (mirrors the PyTorch forward)
# ----------------------------------------------------------------------------
def ref_forward(x_btd, params):
    outs = x_btd
    for (w_ih, w_hh, b_ih, b_hh) in params["lstm"]:
        B = outs.shape[0]
        H = w_hh.shape[1]

        def cell(carry, xt, w_ih=w_ih, w_hh=w_hh, b_ih=b_ih, b_hh=b_hh):
            hh, cc = carry
            gates = xt @ w_ih.T + hh @ w_hh.T + b_ih + b_hh
            i, f, g, o = jnp.split(gates, 4, axis=-1)
            cc = jax.nn.sigmoid(f) * cc + jax.nn.sigmoid(i) * jnp.tanh(g)
            hh = jax.nn.sigmoid(o) * jnp.tanh(cc)
            return (hh, cc), hh

        h0 = jnp.zeros((B, H), jnp.float32)
        c0 = jnp.zeros((B, H), jnp.float32)
        _, ys = jax.lax.scan(cell, (h0, c0), jnp.swapaxes(outs, 0, 1))
        outs = jnp.swapaxes(ys, 0, 1)                 # [B, T, H]

    e = jnp.tanh(outs @ params["w1"].T + params["b1"])
    scores = e @ params["w2"].T + params["b2"]        # [B, T, 1]
    attn = jax.nn.softmax(scores, axis=1)
    context = jnp.sum(outs * attn, axis=1)            # [B, H]
    return context @ params["fcw"].T + params["fcb"]  # [B, 2]


# ----------------------------------------------------------------------------
# Deterministic parameter init (PyTorch-style uniform bounds)
# ----------------------------------------------------------------------------
def init_params(key, input_size, hidden_size, num_layers):
    bound = hidden_size ** -0.5
    lstm = []
    d = input_size
    for _ in range(num_layers):
        key, k1, k2, k3, k4 = jax.random.split(key, 5)
        w_ih = jax.random.uniform(k1, (4 * hidden_size, d), jnp.float32, -bound, bound)
        w_hh = jax.random.uniform(k2, (4 * hidden_size, hidden_size), jnp.float32, -bound, bound)
        b_ih = jax.random.uniform(k3, (4 * hidden_size,), jnp.float32, -bound, bound)
        b_hh = jax.random.uniform(k4, (4 * hidden_size,), jnp.float32, -bound, bound)
        lstm.append((w_ih, w_hh, b_ih, b_hh))
        d = hidden_size
    key, k1, k2, k3, k4, k5, k6 = jax.random.split(key, 7)
    return {
        "lstm": lstm,
        "w1": jax.random.uniform(k1, (hidden_size, hidden_size), jnp.float32, -bound, bound),
        "b1": jax.random.uniform(k2, (hidden_size,), jnp.float32, -bound, bound),
        "w2": jax.random.uniform(k3, (1, hidden_size), jnp.float32, -bound, bound),
        "b2": jax.random.uniform(k4, (1,), jnp.float32, -bound, bound),
        "fcw": jax.random.uniform(k5, (2, hidden_size), jnp.float32, -bound, bound),
        "fcb": jax.random.uniform(k6, (2,), jnp.float32, -bound, bound),
    }


if __name__ == "__main__":
    B, T, D, H, LAYERS = 2, 8, 16, 32, 2

    key = jax.random.PRNGKey(0)
    key, kx = jax.random.split(key)
    x = jax.random.normal(kx, (B, T, D), jnp.float32)     # batch_first [B, T, D]
    params = init_params(key, D, H, LAYERS)

    ref = ref_forward(x, params)

    # 1) f32 path (f32 matmuls, f32 storage): tight check vs the pure-JAX reference.
    pred = attention_lstm_forward(x, prepare_params(params, jnp.float32))
    pred = jax.block_until_ready(pred)
    assert pred.shape == (B, 2)
    assert jnp.allclose(pred, ref, atol=1e-3, rtol=1e-3), (pred, ref)

    # 2) bf16 path (bf16 matmul operands + bf16 activation storage, f32 accumulation,
    #    f32 gate math / cell state): looser check.
    pred_bf16 = attention_lstm_forward(x, prepare_params(params, jnp.bfloat16))
    pred_bf16 = jax.block_until_ready(pred_bf16)
    assert jnp.allclose(pred_bf16, ref, atol=1e-1, rtol=1e-1), (pred_bf16, ref)

    print("KERNEL_OK")
</pallas_src>

<mosaic_0001>
module attributes {stable_mosaic.version = 11 : i64} {
  func.func @fused_attention_lstm_kernel(%arg0: i32, %arg1: memref<8x2x128xf32, #tpu.memory_space<vmem>>, %arg2: memref<32x128xf32, #tpu.memory_space<vmem>>, %arg3: memref<32x128xf32, #tpu.memory_space<vmem>>, %arg4: memref<32x128xf32, #tpu.memory_space<vmem>>, %arg5: memref<1x128xf32, #tpu.memory_space<vmem>>, %arg6: memref<32x32xf32, #tpu.memory_space<vmem>>, %arg7: memref<1x32xf32, #tpu.memory_space<vmem>>, %arg8: memref<32x1xf32, #tpu.memory_space<vmem>>, %arg9: memref<1x1xf32, #tpu.memory_space<vmem>>, %arg10: memref<2x32xf32, #tpu.memory_space<vmem>>, %arg11: memref<16x128xf32, #tpu.memory_space<vmem>>, %arg12: memref<16x32xf32, #tpu.memory_space<vmem>>) attributes {dimension_semantics = [#tpu.dimension_semantics<parallel>], iteration_bounds = array<i64: 1>, scalar_prefetch = 0 : i64, scratch_operands = 2 : i64, tpu.core_type = #tpu.core_type<tc>, window_params = [{transform_indices = @transform_0, window_bounds = array<i64: 8, 2, 128>}, {pipeline_mode = #tpu.pipeline_mode<synchronous>, transform_indices = @transform_1, window_bounds = array<i64: 32, 128>}, {pipeline_mode = #tpu.pipeline_mode<synchronous>, transform_indices = @transform_2, window_bounds = array<i64: 32, 128>}, {pipeline_mode = #tpu.pipeline_mode<synchronous>, transform_indices = @transform_3, window_bounds = array<i64: 32, 128>}, {pipeline_mode = #tpu.pipeline_mode<synchronous>, transform_indices = @transform_4, window_bounds = array<i64: 1, 128>}, {pipeline_mode = #tpu.pipeline_mode<synchronous>, transform_indices = @transform_5, window_bounds = array<i64: 32, 32>}, {pipeline_mode = #tpu.pipeline_mode<synchronous>, transform_indices = @transform_6, window_bounds = array<i64: 1, 32>}, {pipeline_mode = #tpu.pipeline_mode<synchronous>, transform_indices = @transform_7, window_bounds = array<i64: 32, 1>}, {pipeline_mode = #tpu.pipeline_mode<synchronous>, transform_indices = @transform_8, window_bounds = array<i64: 1, 1>}, {transform_indices = @transform_9, window_bounds = array<i64: 2, 32>}]} {
    %c0 = arith.constant 0 : index
    %c0_0 = arith.constant 0 : index
    %0 = vector.load %arg2[%c0, %c0_0] : memref<32x128xf32, #tpu.memory_space<vmem>>, vector<32x128xf32>
    %cst = arith.constant 0.000000e+00 : f32
    %1 = vector.broadcast %cst : f32 to vector<2x32xf32>
    %cst_1 = arith.constant 0.000000e+00 : f32
    %2 = vector.broadcast %cst_1 : f32 to vector<2x32xf32>
    %c0_2 = arith.constant 0 : index
    %c0_3 = arith.constant 0 : index
    %c0_4 = arith.constant 0 : index
    %3 = vector.load %arg1[%c0_2, %c0_3, %c0_4] : memref<8x2x128xf32, #tpu.memory_space<vmem>>, vector<1x2x128xf32>
    %4 = vector.shape_cast %3 : vector<1x2x128xf32> to vector<2x128xf32>
    %cst_5 = arith.constant dense<0.000000e+00> : vector<2x128xf32>
    %5 = tpu.matmul %1, %0, %cst_5 {dimension_numbers = #tpu.dot_dimension_numbers<[1], [0], [0], [1], [0, 0, 1, 1], [], []>} : vector<2x32xf32>, vector<32x128xf32>, vector<2x128xf32> -> vector<2x128xf32>
    %6 = arith.addf %4, %5 : vector<2x128xf32>
    %7 = vector.extract_strided_slice %6 {offsets = [0, 0], sizes = [2, 32], strides = [1, 1]} : vector<2x128xf32> to vector<2x32xf32>
    %8 = arith.negf %7 : vector<2x32xf32>
    %9 = math.exp %8 : vector<2x32xf32>
    %cst_6 = arith.constant 1.000000e+00 : f32
    %10 = vector.broadcast %cst_6 : f32 to vector<2x32xf32>
    %11 = arith.addf %10, %9 : vector<2x32xf32>
    %12 = arith.divf %10, %11 : vector<2x32xf32>
    %13 = vector.extract_strided_slice %6 {offsets = [0, 32], sizes = [2, 32], strides = [1, 1]} : vector<2x128xf32> to vector<2x32xf32>
    %14 = arith.negf %13 : vector<2x32xf32>
    %15 = math.exp %14 : vector<2x32xf32>
    %cst_7 = arith.constant 1.000000e+00 : f32
    %16 = vector.broadcast %cst_7 : f32 to vector<2x32xf32>
    %17 = arith.addf %16, %15 : vector<2x32xf32>
    %18 = arith.divf %16, %17 : vector<2x32xf32>
    %19 = vector.extract_strided_slice %6 {offsets = [0, 64], sizes = [2, 32], strides = [1, 1]} : vector<2x128xf32> to vector<2x32xf32>
    %20 = math.tanh %19 : vector<2x32xf32>
    %21 = vector.extract_strided_slice %6 {offsets = [0, 96], sizes = [2, 32], strides = [1, 1]} : vector<2x128xf32> to vector<2x32xf32>
    %22 = arith.negf %21 : vector<2x32xf32>
    %23 = math.exp %22 : vector<2x32xf32>
    %cst_8 = arith.constant 1.000000e+00 : f32
    %24 = vector.broadcast %cst_8 : f32 to vector<2x32xf32>
    %25 = arith.addf %24, %23 : vector<2x32xf32>
    %26 = arith.divf %24, %25 : vector<2x32xf32>
    %27 = arith.mulf %18, %2 : vector<2x32xf32>
    %28 = arith.mulf %12, %20 : vector<2x32xf32>
    %29 = arith.addf %27, %28 : vector<2x32xf32>
    %30 = math.tanh %29 : vector<2x32xf32>
    %31 = arith.mulf %26, %30 : vector<2x32xf32>
    %c0_9 = arith.constant 0 : index
    %c0_10 = arith.constant 0 : index
    %32 = vector.load %arg12[%c0_9, %c0_10] : memref<16x32xf32, #tpu.memory_space<vmem>>, vector<2x32xf32>
    tpu.vector_store %arg12[%c0_9, %c0_10], %31 {strides = array<i32>} : memref<16x32xf32, #tpu.memory_space<vmem>>, vector<2x32xf32>,
    %c1 = arith.constant 1 : index
    %c0_11 = arith.constant 0 : index
    %c0_12 = arith.constant 0 : index
    %33 = vector.load %arg1[%c1, %c0_11, %c0_12] : memref<8x2x128xf32, #tpu.memory_space<vmem>>, vector<1x2x128xf32>
    %34 = vector.shape_cast %33 : vector<1x2x128xf32> to vector<2x128xf32>
    %cst_13 = arith.constant dense<0.000000e+00> : vector<2x128xf32>
    %35 = tpu.matmul %31, %0, %cst_13 {dimension_numbers = #tpu.dot_dimension_numbers<[1], [0], [0], [1], [0, 0, 1, 1], [], []>} : vector<2x32xf32>, vector<32x128xf32>, vector<2x128xf32> -> vector<2x128xf32>
    %36 = arith.addf %34, %35 : vector<2x128xf32>
    %37 = vector.extract_strided_slice %36 {offsets = [0, 0], sizes = [2, 32], strides = [1, 1]} : vector<2x128xf32> to vector<2x32xf32>
    %38 = arith.negf %37 : vector<2x32xf32>
    %39 = math.exp %38 : vector<2x32xf32>
    %cst_14 = arith.constant 1.000000e+00 : f32
    %40 = vector.broadcast %cst_14 : f32 to vector<2x32xf32>
    %41 = arith.addf %40, %39 : vector<2x32xf32>
    %42 = arith.divf %40, %41 : vector<2x32xf32>
    %43 = vector.extract_strided_slice %36 {offsets = [0, 32], sizes = [2, 32], strides = [1, 1]} : vector<2x128xf32> to vector<2x32xf32>
    %44 = arith.negf %43 : vector<2x32xf32>
    %45 = math.exp %44 : vector<2x32xf32>
    %cst_15 = arith.constant 1.000000e+00 : f32
    %46 = vector.broadcast %cst_15 : f32 to vector<2x32xf32>
    %47 = arith.addf %46, %45 : vector<2x32xf32>
    %48 = arith.divf %46, %47 : vector<2x32xf32>
    %49 = vector.extract_strided_slice %36 {offsets = [0, 64], sizes = [2, 32], strides = [1, 1]} : vector<2x128xf32> to vector<2x32xf32>
    %50 = math.tanh %49 : vector<2x32xf32>
    %51 = vector.extract_strided_slice %36 {offsets = [0, 96], sizes = [2, 32], strides = [1, 1]} : vector<2x128xf32> to vector<2x32xf32>
    %52 = arith.negf %51 : vector<2x32xf32>
    %53 = math.exp %52 : vector<2x32xf32>
    %cst_16 = arith.constant 1.000000e+00 : f32
    %54 = vector.broadcast %cst_16 : f32 to vector<2x32xf32>
    %55 = arith.addf %54, %53 : vector<2x32xf32>
    %56 = arith.divf %54, %55 : vector<2x32xf32>
    %57 = arith.mulf %48, %29 : vector<2x32xf32>
    %58 = arith.mulf %42, %50 : vector<2x32xf32>
    %59 = arith.addf %57, %58 : vector<2x32xf32>
    %60 = math.tanh %59 : vector<2x32xf32>
    %61 = arith.mulf %56, %60 : vector<2x32xf32>
    %c2 = arith.constant 2 : index
    %c0_17 = arith.constant 0 : index
    %62 = vector.load %arg12[%c2, %c0_17] : memref<16x32xf32, #tpu.memory_space<vmem>>, vector<2x32xf32>
    tpu.vector_store %arg12[%c2, %c0_17], %61 {strides = array<i32>} : memref<16x32xf32, #tpu.memory_space<vmem>>, vector<2x32xf32>,
    %c2_18 = arith.constant 2 : index
    %c0_19 = arith.constant 0 : index
    %c0_20 = arith.constant 0 : index
    %63 = vector.load %arg1[%c2_18, %c0_19, %c0_20] : memref<8x2x128xf32, #tpu.memory_space<vmem>>, vector<1x2x128xf32>
    %64 = vector.shape_cast %63 : vector<1x2x128xf32> to vector<2x128xf32>
    %cst_21 = arith.constant dense<0.000000e+00> : vector<2x128xf32>
    %65 = tpu.matmul %61, %0, %cst_21 {dimension_numbers = #tpu.dot_dimension_numbers<[1], [0], [0], [1], [0, 0, 1, 1], [], []>} : vector<2x32xf32>, vector<32x128xf32>, vector<2x128xf32> -> vector<2x128xf32>
    %66 = arith.addf %64, %65 : vector<2x128xf32>
    %67 = vector.extract_strided_slice %66 {offsets = [0, 0], sizes = [2, 32], strides = [1, 1]} : vector<2x128xf32> to vector<2x32xf32>
    %68 = arith.negf %67 : vector<2x32xf32>
    %69 = math.exp %68 : vector<2x32xf32>
    %cst_22 = arith.constant 1.000000e+00 : f32
    %70 = vector.broadcast %cst_22 : f32 to vector<2x32xf32>
    %71 = arith.addf %70, %69 : vector<2x32xf32>
    %72 = arith.divf %70, %71 : vector<2x32xf32>
    %73 = vector.extract_strided_slice %66 {offsets = [0, 32], sizes = [2, 32], strides = [1, 1]} : vector<2x128xf32> to vector<2x32xf32>
    %74 = arith.negf %73 : vector<2x32xf32>
    %75 = math.exp %74 : vector<2x32xf32>
    %cst_23 = arith.constant 1.000000e+00 : f32
    %76 = vector.broadcast %cst_23 : f32 to vector<2x32xf32>
    %77 = arith.addf %76, %75 : vector<2x32xf32>
    %78 = arith.divf %76, %77 : vector<2x32xf32>
    %79 = vector.extract_strided_slice %66 {offsets = [0, 64], sizes = [2, 32], strides = [1, 1]} : vector<2x128xf32> to vector<2x32xf32>
    %80 = math.tanh %79 : vector<2x32xf32>
    %81 = vector.extract_strided_slice %66 {offsets = [0, 96], sizes = [2, 32], strides = [1, 1]} : vector<2x128xf32> to vector<2x32xf32>
    %82 = arith.negf %81 : vector<2x32xf32>
    %83 = math.exp %82 : vector<2x32xf32>
    %cst_24 = arith.constant 1.000000e+00 : f32
    %84 = vector.broadcast %cst_24 : f32 to vector<2x32xf32>
    %85 = arith.addf %84, %83 : vector<2x32xf32>
    %86 = arith.divf %84, %85 : vector<2x32xf32>
    %87 = arith.mulf %78, %59 : vector<2x32xf32>
    %88 = arith.mulf %72, %80 : vector<2x32xf32>
    %89 = arith.addf %87, %88 : vector<2x32xf32>
    %90 = math.tanh %89 : vector<2x32xf32>
    %91 = arith.mulf %86, %90 : vector<2x32xf32>
    %c4 = arith.constant 4 : index
    %c0_25 = arith.constant 0 : index
    %92 = vector.load %arg12[%c4, %c0_25] : memref<16x32xf32, #tpu.memory_space<vmem>>, vector<2x32xf32>
    tpu.vector_store %arg12[%c4, %c0_25], %91 {strides = array<i32>} : memref<16x32xf32, #tpu.memory_space<vmem>>, vector<2x32xf32>,
    %c3 = arith.constant 3 : index
    %c0_26 = arith.constant 0 : index
    %c0_27 = arith.constant 0 : index
    %93 = vector.load %arg1[%c3, %c0_26, %c0_27] : memref<8x2x128xf32, #tpu.memory_space<vmem>>, vector<1x2x128xf32>
    %94 = vector.shape_cast %93 : vector<1x2x128xf32> to vector<2x128xf32>
    %cst_28 = arith.constant dense<0.000000e+00> : vector<2x128xf32>
    %95 = tpu.matmul %91, %0, %cst_28 {dimension_numbers = #tpu.dot_dimension_numbers<[1], [0], [0], [1], [0, 0, 1, 1], [], []>} : vector<2x32xf32>, vector<32x128xf32>, vector<2x128xf32> -> vector<2x128xf32>
    %96 = arith.addf %94, %95 : vector<2x128xf32>
    %97 = vector.extract_strided_slice %96 {offsets = [0, 0], sizes = [2, 32], strides = [1, 1]} : vector<2x128xf32> to vector<2x32xf32>
    %98 = arith.negf %97 : vector<2x32xf32>
    %99 = math.exp %98 : vector<2x32xf32>
    %cst_29 = arith.constant 1.000000e+00 : f32
    %100 = vector.broadcast %cst_29 : f32 to vector<2x32xf32>
    %101 = arith.addf %100, %99 : vector<2x32xf32>
    %102 = arith.divf %100, %101 : vector<2x32xf32>
    %103 = vector.extract_strided_slice %96 {offsets = [0, 32], sizes = [2, 32], strides = [1, 1]} : vector<2x128xf32> to vector<2x32xf32>
    %104 = arith.negf %103 : vector<2x32xf32>
    %105 = math.exp %104 : vector<2x32xf32>
    %cst_30 = arith.constant 1.000000e+00 : f32
    %106 = vector.broadcast %cst_30 : f32 to vector<2x32xf32>
    %107 = arith.addf %106, %105 : vector<2x32xf32>
    %108 = arith.divf %106, %107 : vector<2x32xf32>
    %109 = vector.extract_strided_slice %96 {offsets = [0, 64], sizes = [2, 32], strides = [1, 1]} : vector<2x128xf32> to vector<2x32xf32>
    %110 = math.tanh %109 : vector<2x32xf32>
    %111 = vector.extract_strided_slice %96 {offsets = [0, 96], sizes = [2, 32], strides = [1, 1]} : vector<2x128xf32> to vector<2x32xf32>
    %112 = arith.negf %111 : vector<2x32xf32>
    %113 = math.exp %112 : vector<2x32xf32>
    %cst_31 = arith.constant 1.000000e+00 : f32
    %114 = vector.broadcast %cst_31 : f32 to vector<2x32xf32>
    %115 = arith.addf %114, %113 : vector<2x32xf32>
    %116 = arith.divf %114, %115 : vector<2x32xf32>
    %117 = arith.mulf %108, %89 : vector<2x32xf32>
    %118 = arith.mulf %102, %110 : vector<2x32xf32>
    %119 = arith.addf %117, %118 : vector<2x32xf32>
    %120 = math.tanh %119 : vector<2x32xf32>
    %121 = arith.mulf %116, %120 : vector<2x32xf32>
    %c6 = arith.constant 6 : index
    %c0_32 = arith.constant 0 : index
    %122 = vector.load %arg12[%c6, %c0_32] : memref<16x32xf32, #tpu.memory_space<vmem>>, vector<2x32xf32>
    tpu.vector_store %arg12[%c6, %c0_32], %121 {strides = array<i32>} : memref<16x32xf32, #tpu.memory_space<vmem>>, vector<2x32xf32>,
    %c4_33 = arith.constant 4 : index
    %c0_34 = arith.constant 0 : index
    %c0_35 = arith.constant 0 : index
    %123 = vector.load %arg1[%c4_33, %c0_34, %c0_35] : memref<8x2x128xf32, #tpu.memory_space<vmem>>, vector<1x2x128xf32>
    %124 = vector.shape_cast %123 : vector<1x2x128xf32> to vector<2x128xf32>
    %cst_36 = arith.constant dense<0.000000e+00> : vector<2x128xf32>
    %125 = tpu.matmul %121, %0, %cst_36 {dimension_numbers = #tpu.dot_dimension_numbers<[1], [0], [0], [1], [0, 0, 1, 1], [], []>} : vector<2x32xf32>, vector<32x128xf32>, vector<2x128xf32> -> vector<2x128xf32>
    %126 = arith.addf %124, %125 : vector<2x128xf32>
    %127 = vector.extract_strided_slice %126 {offsets = [0, 0], sizes = [2, 32], strides = [1, 1]} : vector<2x128xf32> to vector<2x32xf32>
    %128 = arith.negf %127 : vector<2x32xf32>
    %129 = math.exp %128 : vector<2x32xf32>
    %cst_37 = arith.constant 1.000000e+00 : f32
    %130 = vector.broadcast %cst_37 : f32 to vector<2x32xf32>
    %131 = arith.addf %130, %129 : vector<2x32xf32>
    %132 = arith.divf %130, %131 : vector<2x32xf32>
    %133 = vector.extract_strided_slice %126 {offsets = [0, 32], sizes = [2, 32], strides = [1, 1]} : vector<2x128xf32> to vector<2x32xf32>
    %134 = arith.negf %133 : vector<2x32xf32>
    %135 = math.exp %134 : vector<2x32xf32>
    %cst_38 = arith.constant 1.000000e+00 : f32
    %136 = vector.broadcast %cst_38 : f32 to vector<2x32xf32>
    %137 = arith.addf %136, %135 : vector<2x32xf32>
    %138 = arith.divf %136, %137 : vector<2x32xf32>
    %139 = vector.extract_strided_slice %126 {offsets = [0, 64], sizes = [2, 32], strides = [1, 1]} : vector<2x128xf32> to vector<2x32xf32>
    %140 = math.tanh %139 : vector<2x32xf32>
    %141 = vector.extract_strided_slice %126 {offsets = [0, 96], sizes = [2, 32], strides = [1, 1]} : vector<2x128xf32> to vector<2x32xf32>
    %142 = arith.negf %141 : vector<2x32xf32>
    %143 = math.exp %142 : vector<2x32xf32>
    %cst_39 = arith.constant 1.000000e+00 : f32
    %144 = vector.broadcast %cst_39 : f32 to vector<2x32xf32>
    %145 = arith.addf %144, %143 : vector<2x32xf32>
    %146 = arith.divf %144, %145 : vector<2x32xf32>
    %147 = arith.mulf %138, %119 : vector<2x32xf32>
    %148 = arith.mulf %132, %140 : vector<2x32xf32>
    %149 = arith.addf %147, %148 : vector<2x32xf32>
    %150 = math.tanh %149 : vector<2x32xf32>
    %151 = arith.mulf %146, %150 : vector<2x32xf32>
    %c8 = arith.constant 8 : index
    %c0_40 = arith.constant 0 : index
    %152 = vector.load %arg12[%c8, %c0_40] : memref<16x32xf32, #tpu.memory_space<vmem>>, vector<2x32xf32>
    tpu.vector_store %arg12[%c8, %c0_40], %151 {strides = array<i32>} : memref<16x32xf32, #tpu.memory_space<vmem>>, vector<2x32xf32>,
    %c5 = arith.constant 5 : index
    %c0_41 = arith.constant 0 : index
    %c0_42 = arith.constant 0 : index
    %153 = vector.load %arg1[%c5, %c0_41, %c0_42] : memref<8x2x128xf32, #tpu.memory_space<vmem>>, vector<1x2x128xf32>
    %154 = vector.shape_cast %153 : vector<1x2x128xf32> to vector<2x128xf32>
    %cst_43 = arith.constant dense<0.000000e+00> : vector<2x128xf32>
    %155 = tpu.matmul %151, %0, %cst_43 {dimension_numbers = #tpu.dot_dimension_numbers<[1], [0], [0], [1], [0, 0, 1, 1], [], []>} : vector<2x32xf32>, vector<32x128xf32>, vector<2x128xf32> -> vector<2x128xf32>
    %156 = arith.addf %154, %155 : vector<2x128xf32>
    %157 = vector.extract_strided_slice %156 {offsets = [0, 0], sizes = [2, 32], strides = [1, 1]} : vector<2x128xf32> to vector<2x32xf32>
    %158 = arith.negf %157 : vector<2x32xf32>
    %159 = math.exp %158 : vector<2x32xf32>
    %cst_44 = arith.constant 1.000000e+00 : f32
    %160 = vector.broadcast %cst_44 : f32 to vector<2x32xf32>
    %161 = arith.addf %160, %159 : vector<2x32xf32>
    %162 = arith.divf %160, %161 : vector<2x32xf32>
    %163 = vector.extract_strided_slice %156 {offsets = [0, 32], sizes = [2, 32], strides = [1, 1]} : vector<2x128xf32> to vector<2x32xf32>
    %164 = arith.negf %163 : vector<2x32xf32>
    %165 = math.exp %164 : vector<2x32xf32>
    %cst_45 = arith.constant 1.000000e+00 : f32
    %166 = vector.broadcast %cst_45 : f32 to vector<2x32xf32>
    %167 = arith.addf %166, %165 : vector<2x32xf32>
    %168 = arith.divf %166, %167 : vector<2x32xf32>
    %169 = vector.extract_strided_slice %156 {offsets = [0, 64], sizes = [2, 32], strides = [1, 1]} : vector<2x128xf32> to vector<2x32xf32>
    %170 = math.tanh %169 : vector<2x32xf32>
    %171 = vector.extract_strided_slice %156 {offsets = [0, 96], sizes = [2, 32], strides = [1, 1]} : vector<2x128xf32> to vector<2x32xf32>
    %172 = arith.negf %171 : vector<2x32xf32>
    %173 = math.exp %172 : vector<2x32xf32>
    %cst_46 = arith.constant 1.000000e+00 : f32
    %174 = vector.broadcast %cst_46 : f32 to vector<2x32xf32>
    %175 = arith.addf %174, %173 : vector<2x32xf32>
    %176 = arith.divf %174, %175 : vector<2x32xf32>
    %177 = arith.mulf %168, %149 : vector<2x32xf32>
    %178 = arith.mulf %162, %170 : vector<2x32xf32>
    %179 = arith.addf %177, %178 : vector<2x32xf32>
    %180 = math.tanh %179 : vector<2x32xf32>
    %181 = arith.mulf %176, %180 : vector<2x32xf32>
    %c10 = arith.constant 10 : index
    %c0_47 = arith.constant 0 : index
    %182 = vector.load %arg12[%c10, %c0_47] : memref<16x32xf32, #tpu.memory_space<vmem>>, vector<2x32xf32>
    tpu.vector_store %arg12[%c10, %c0_47], %181 {strides = array<i32>} : memref<16x32xf32, #tpu.memory_space<vmem>>, vector<2x32xf32>,
    %c6_48 = arith.constant 6 : index
    %c0_49 = arith.constant 0 : index
    %c0_50 = arith.constant 0 : index
    %183 = vector.load %arg1[%c6_48, %c0_49, %c0_50] : memref<8x2x128xf32, #tpu.memory_space<vmem>>, vector<1x2x128xf32>
    %184 = vector.shape_cast %183 : vector<1x2x128xf32> to vector<2x128xf32>
    %cst_51 = arith.constant dense<0.000000e+00> : vector<2x128xf32>
    %185 = tpu.matmul %181, %0, %cst_51 {dimension_numbers = #tpu.dot_dimension_numbers<[1], [0], [0], [1], [0, 0, 1, 1], [], []>} : vector<2x32xf32>, vector<32x128xf32>, vector<2x128xf32> -> vector<2x128xf32>
    %186 = arith.addf %184, %185 : vector<2x128xf32>
    %187 = vector.extract_strided_slice %186 {offsets = [0, 0], sizes = [2, 32], strides = [1, 1]} : vector<2x128xf32> to vector<2x32xf32>
    %188 = arith.negf %187 : vector<2x32xf32>
    %189 = math.exp %188 : vector<2x32xf32>
    %cst_52 = arith.constant 1.000000e+00 : f32
    %190 = vector.broadcast %cst_52 : f32 to vector<2x32xf32>
    %191 = arith.addf %190, %189 : vector<2x32xf32>
    %192 = arith.divf %190, %191 : vector<2x32xf32>
    %193 = vector.extract_strided_slice %186 {offsets = [0, 32], sizes = [2, 32], strides = [1, 1]} : vector<2x128xf32> to vector<2x32xf32>
    %194 = arith.negf %193 : vector<2x32xf32>
    %195 = math.exp %194 : vector<2x32xf32>
    %cst_53 = arith.constant 1.000000e+00 : f32
    %196 = vector.broadcast %cst_53 : f32 to vector<2x32xf32>
    %197 = arith.addf %196, %195 : vector<2x32xf32>
    %198 = arith.divf %196, %197 : vector<2x32xf32>
    %199 = vector.extract_strided_slice %186 {offsets = [0, 64], sizes = [2, 32], strides = [1, 1]} : vector<2x128xf32> to vector<2x32xf32>
    %200 = math.tanh %199 : vector<2x32xf32>
    %201 = vector.extract_strided_slice %186 {offsets = [0, 96], sizes = [2, 32], strides = [1, 1]} : vector<2x128xf32> to vector<2x32xf32>
    %202 = arith.negf %201 : vector<2x32xf32>
    %203 = math.exp %202 : vector<2x32xf32>
    %cst_54 = arith.constant 1.000000e+00 : f32
    %204 = vector.broadcast %cst_54 : f32 to vector<2x32xf32>
    %205 = arith.addf %204, %203 : vector<2x32xf32>
    %206 = arith.divf %204, %205 : vector<2x32xf32>
    %207 = arith.mulf %198, %179 : vector<2x32xf32>
    %208 = arith.mulf %192, %200 : vector<2x32xf32>
    %209 = arith.addf %207, %208 : vector<2x32xf32>
    %210 = math.tanh %209 : vector<2x32xf32>
    %211 = arith.mulf %206, %210 : vector<2x32xf32>
    %c12 = arith.constant 12 : index
    %c0_55 = arith.constant 0 : index
    %212 = vector.load %arg12[%c12, %c0_55] : memref<16x32xf32, #tpu.memory_space<vmem>>, vector<2x32xf32>
    tpu.vector_store %arg12[%c12, %c0_55], %211 {strides = array<i32>} : memref<16x32xf32, #tpu.memory_space<vmem>>, vector<2x32xf32>,
    %c7 = arith.constant 7 : index
    %c0_56 = arith.constant 0 : index
    %c0_57 = arith.constant 0 : index
    %213 = vector.load %arg1[%c7, %c0_56, %c0_57] : memref<8x2x128xf32, #tpu.memory_space<vmem>>, vector<1x2x128xf32>
    %214 = vector.shape_cast %213 : vector<1x2x128xf32> to vector<2x128xf32>
    %cst_58 = arith.constant dense<0.000000e+00> : vector<2x128xf32>
    %215 = tpu.matmul %211, %0, %cst_58 {dimension_numbers = #tpu.dot_dimension_numbers<[1], [0], [0], [1], [0, 0, 1, 1], [], []>} : vector<2x32xf32>, vector<32x128xf32>, vector<2x128xf32> -> vector<2x128xf32>
    %216 = arith.addf %214, %215 : vector<2x128xf32>
    %217 = vector.extract_strided_slice %216 {offsets = [0, 0], sizes = [2, 32], strides = [1, 1]} : vector<2x128xf32> to vector<2x32xf32>
    %218 = arith.negf %217 : vector<2x32xf32>
    %219 = math.exp %218 : vector<2x32xf32>
    %cst_59 = arith.constant 1.000000e+00 : f32
    %220 = vector.broadcast %cst_59 : f32 to vector<2x32xf32>
    %221 = arith.addf %220, %219 : vector<2x32xf32>
    %222 = arith.divf %220, %221 : vector<2x32xf32>
    %223 = vector.extract_strided_slice %216 {offsets = [0, 32], sizes = [2, 32], strides = [1, 1]} : vector<2x128xf32> to vector<2x32xf32>
    %224 = arith.negf %223 : vector<2x32xf32>
    %225 = math.exp %224 : vector<2x32xf32>
    %cst_60 = arith.constant 1.000000e+00 : f32
    %226 = vector.broadcast %cst_60 : f32 to vector<2x32xf32>
    %227 = arith.addf %226, %225 : vector<2x32xf32>
    %228 = arith.divf %226, %227 : vector<2x32xf32>
    %229 = vector.extract_strided_slice %216 {offsets = [0, 64], sizes = [2, 32], strides = [1, 1]} : vector<2x128xf32> to vector<2x32xf32>
    %230 = math.tanh %229 : vector<2x32xf32>
    %231 = vector.extract_strided_slice %216 {offsets = [0, 96], sizes = [2, 32], strides = [1, 1]} : vector<2x128xf32> to vector<2x32xf32>
    %232 = arith.negf %231 : vector<2x32xf32>
    %233 = math.exp %232 : vector<2x32xf32>
    %cst_61 = arith.constant 1.000000e+00 : f32
    %234 = vector.broadcast %cst_61 : f32 to vector<2x32xf32>
    %235 = arith.addf %234, %233 : vector<2x32xf32>
    %236 = arith.divf %234, %235 : vector<2x32xf32>
    %237 = arith.mulf %228, %209 : vector<2x32xf32>
    %238 = arith.mulf %222, %230 : vector<2x32xf32>
    %239 = arith.addf %237, %238 : vector<2x32xf32>
    %240 = math.tanh %239 : vector<2x32xf32>
    %241 = arith.mulf %236, %240 : vector<2x32xf32>
    %c14 = arith.constant 14 : index
    %c0_62 = arith.constant 0 : index
    %242 = vector.load %arg12[%c14, %c0_62] : memref<16x32xf32, #tpu.memory_space<vmem>>, vector<2x32xf32>
    tpu.vector_store %arg12[%c14, %c0_62], %241 {strides = array<i32>} : memref<16x32xf32, #tpu.memory_space<vmem>>, vector<2x32xf32>,
    %c0_63 = arith.constant 0 : index
    %c0_64 = arith.constant 0 : index
    %243 = vector.load %arg3[%c0_63, %c0_64] : memref<32x128xf32, #tpu.memory_space<vmem>>, vector<32x128xf32>
    %c0_65 = arith.constant 0 : index
    %c0_66 = arith.constant 0 : index
    %244 = vector.load %arg5[%c0_65, %c0_66] : memref<1x128xf32, #tpu.memory_space<vmem>>, vector<1x128xf32>
    %c0_67 = arith.constant 0 : index
    %c0_68 = arith.constant 0 : index
    %245 = vector.load %arg12[%c0_67, %c0_68] : memref<16x32xf32, #tpu.memory_space<vmem>>, vector<2x32xf32>
    %cst_69 = arith.constant dense<0.000000e+00> : vector<2x128xf32>
    %246 = tpu.matmul %245, %243, %cst_69 {dimension_numbers = #tpu.dot_dimension_numbers<[1], [0], [0], [1], [0, 0, 1, 1], [], []>} : vector<2x32xf32>, vector<32x128xf32>, vector<2x128xf32> -> vector<2x128xf32>
    %247 = vector.broadcast %244 : vector<1x128xf32> to vector<2x128xf32>
    %248 = arith.addf %246, %247 : vector<2x128xf32>
    %c0_70 = arith.constant 0 : index
    %c0_71 = arith.constant 0 : index
    %249 = vector.load %arg11[%c0_70, %c0_71] : memref<16x128xf32, #tpu.memory_space<vmem>>, vector<2x128xf32>
    tpu.vector_store %arg11[%c0_70, %c0_71], %248 {strides = array<i32>} : memref<16x128xf32, #tpu.memory_space<vmem>>, vector<2x128xf32>,
    %c2_72 = arith.constant 2 : index
    %c0_73 = arith.constant 0 : index
    %250 = vector.load %arg12[%c2_72, %c0_73] : memref<16x32xf32, #tpu.memory_space<vmem>>, vector<2x32xf32>
    %cst_74 = arith.constant dense<0.000000e+00> : vector<2x128xf32>
    %251 = tpu.matmul %250, %243, %cst_74 {dimension_numbers = #tpu.dot_dimension_numbers<[1], [0], [0], [1], [0, 0, 1, 1], [], []>} : vector<2x32xf32>, vector<32x128xf32>, vector<2x128xf32> -> vector<2x128xf32>
    %252 = vector.broadcast %244 : vector<1x128xf32> to vector<2x128xf32>
    %253 = arith.addf %251, %252 : vector<2x128xf32>
    %c2_75 = arith.constant 2 : index
    %c0_76 = arith.constant 0 : index
    %254 = vector.load %arg11[%c2_75, %c0_76] : memref<16x128xf32, #tpu.memory_space<vmem>>, vector<2x128xf32>
    tpu.vector_store %arg11[%c2_75, %c0_76], %253 {strides = array<i32>} : memref<16x128xf32, #tpu.memory_space<vmem>>, vector<2x128xf32>,
    %c4_77 = arith.constant 4 : index
    %c0_78 = arith.constant 0 : index
    %255 = vector.load %arg12[%c4_77, %c0_78] : memref<16x32xf32, #tpu.memory_space<vmem>>, vector<2x32xf32>
    %cst_79 = arith.constant dense<0.000000e+00> : vector<2x128xf32>
    %256 = tpu.matmul %255, %243, %cst_79 {dimension_numbers = #tpu.dot_dimension_numbers<[1], [0], [0], [1], [0, 0, 1, 1], [], []>} : vector<2x32xf32>, vector<32x128xf32>, vector<2x128xf32> -> vector<2x128xf32>
    %257 = vector.broadcast %244 : vector<1x128xf32> to vector<2x128xf32>
    %258 = arith.addf %256, %257 : vector<2x128xf32>
    %c4_80 = arith.constant 4 : index
    %c0_81 = arith.constant 0 : index
    %259 = vector.load %arg11[%c4_80, %c0_81] : memref<16x128xf32, #tpu.memory_space<vmem>>, vector<2x128xf32>
    tpu.vector_store %arg11[%c4_80, %c0_81], %258 {strides = array<i32>} : memref<16x128xf32, #tpu.memory_space<vmem>>, vector<2x128xf32>,
    %c6_82 = arith.constant 6 : index
    %c0_83 = arith.constant 0 : index
    %260 = vector.load %arg12[%c6_82, %c0_83] : memref<16x32xf32, #tpu.memory_space<vmem>>, vector<2x32xf32>
    %cst_84 = arith.constant dense<0.000000e+00> : vector<2x128xf32>
    %261 = tpu.matmul %260, %243, %cst_84 {dimension_numbers = #tpu.dot_dimension_numbers<[1], [0], [0], [1], [0, 0, 1, 1], [], []>} : vector<2x32xf32>, vector<32x128xf32>, vector<2x128xf32> -> vector<2x128xf32>
    %262 = vector.broadcast %244 : vector<1x128xf32> to vector<2x128xf32>
    %263 = arith.addf %261, %262 : vector<2x128xf32>
    %c6_85 = arith.constant 6 : index
    %c0_86 = arith.constant 0 : index
    %264 = vector.load %arg11[%c6_85, %c0_86] : memref<16x128xf32, #tpu.memory_space<vmem>>, vector<2x128xf32>
    tpu.vector_store %arg11[%c6_85, %c0_86], %263 {strides = array<i32>} : memref<16x128xf32, #tpu.memory_space<vmem>>, vector<2x128xf32>,
    %c8_87 = arith.constant 8 : index
    %c0_88 = arith.constant 0 : index
    %265 = vector.load %arg12[%c8_87, %c0_88] : memref<16x32xf32, #tpu.memory_space<vmem>>, vector<2x32xf32>
    %cst_89 = arith.constant dense<0.000000e+00> : vector<2x128xf32>
    %266 = tpu.matmul %265, %243, %cst_89 {dimension_numbers = #tpu.dot_dimension_numbers<[1], [0], [0], [1], [0, 0, 1, 1], [], []>} : vector<2x32xf32>, vector<32x128xf32>, vector<2x128xf32> -> vector<2x128xf32>
    %267 = vector.broadcast %244 : vector<1x128xf32> to vector<2x128xf32>
    %268 = arith.addf %266, %267 : vector<2x128xf32>
    %c8_90 = arith.constant 8 : index
    %c0_91 = arith.constant 0 : index
    %269 = vector.load %arg11[%c8_90, %c0_91] : memref<16x128xf32, #tpu.memory_space<vmem>>, vector<2x128xf32>
    tpu.vector_store %arg11[%c8_90, %c0_91], %268 {strides = array<i32>} : memref<16x128xf32, #tpu.memory_space<vmem>>, vector<2x128xf32>,
    %c10_92 = arith.constant 10 : index
    %c0_93 = arith.constant 0 : index
    %270 = vector.load %arg12[%c10_92, %c0_93] : memref<16x32xf32, #tpu.memory_space<vmem>>, vector<2x32xf32>
    %cst_94 = arith.constant dense<0.000000e+00> : vector<2x128xf32>
    %271 = tpu.matmul %270, %243, %cst_94 {dimension_numbers = #tpu.dot_dimension_numbers<[1], [0], [0], [1], [0, 0, 1, 1], [], []>} : vector<2x32xf32>, vector<32x128xf32>, vector<2x128xf32> -> vector<2x128xf32>
    %272 = vector.broadcast %244 : vector<1x128xf32> to vector<2x128xf32>
    %273 = arith.addf %271, %272 : vector<2x128xf32>
    %c10_95 = arith.constant 10 : index
    %c0_96 = arith.constant 0 : index
    %274 = vector.load %arg11[%c10_95, %c0_96] : memref<16x128xf32, #tpu.memory_space<vmem>>, vector<2x128xf32>
    tpu.vector_store %arg11[%c10_95, %c0_96], %273 {strides = array<i32>} : memref<16x128xf32, #tpu.memory_space<vmem>>, vector<2x128xf32>,
    %c12_97 = arith.constant 12 : index
    %c0_98 = arith.constant 0 : index
    %275 = vector.load %arg12[%c12_97, %c0_98] : memref<16x32xf32, #tpu.memory_space<vmem>>, vector<2x32xf32>
    %cst_99 = arith.constant dense<0.000000e+00> : vector<2x128xf32>
    %276 = tpu.matmul %275, %243, %cst_99 {dimension_numbers = #tpu.dot_dimension_numbers<[1], [0], [0], [1], [0, 0, 1, 1], [], []>} : vector<2x32xf32>, vector<32x128xf32>, vector<2x128xf32> -> vector<2x128xf32>
    %277 = vector.broadcast %244 : vector<1x128xf32> to vector<2x128xf32>
    %278 = arith.addf %276, %277 : vector<2x128xf32>
    %c12_100 = arith.constant 12 : index
    %c0_101 = arith.constant 0 : index
    %279 = vector.load %arg11[%c12_100, %c0_101] : memref<16x128xf32, #tpu.memory_space<vmem>>, vector<2x128xf32>
    tpu.vector_store %arg11[%c12_100, %c0_101], %278 {strides = array<i32>} : memref<16x128xf32, #tpu.memory_space<vmem>>, vector<2x128xf32>,
    %c14_102 = arith.constant 14 : index
    %c0_103 = arith.constant 0 : index
    %280 = vector.load %arg12[%c14_102, %c0_103] : memref<16x32xf32, #tpu.memory_space<vmem>>, vector<2x32xf32>
    %cst_104 = arith.constant dense<0.000000e+00> : vector<2x128xf32>
    %281 = tpu.matmul %280, %243, %cst_104 {dimension_numbers = #tpu.dot_dimension_numbers<[1], [0], [0], [1], [0, 0, 1, 1], [], []>} : vector<2x32xf32>, vector<32x128xf32>, vector<2x128xf32> -> vector<2x128xf32>
    %282 = vector.broadcast %244 : vector<1x128xf32> to vector<2x128xf32>
    %283 = arith.addf %281, %282 : vector<2x128xf32>
    %c14_105 = arith.constant 14 : index
    %c0_106 = arith.constant 0 : index
    %284 = vector.load %arg11[%c14_105, %c0_106] : memref<16x128xf32, #tpu.memory_space<vmem>>, vector<2x128xf32>
    tpu.vector_store %arg11[%c14_105, %c0_106], %283 {strides = array<i32>} : memref<16x128xf32, #tpu.memory_space<vmem>>, vector<2x128xf32>,
    %c0_107 = arith.constant 0 : index
    %c0_108 = arith.constant 0 : index
    %285 = vector.load %arg4[%c0_107, %c0_108] : memref<32x128xf32, #tpu.memory_space<vmem>>, vector<32x128xf32>
    %cst_109 = arith.constant 0.000000e+00 : f32
    %286 = vector.broadcast %cst_109 : f32 to vector<2x32xf32>
    %cst_110 = arith.constant 0.000000e+00 : f32
    %287 = vector.broadcast %cst_110 : f32 to vector<2x32xf32>
    %c0_111 = arith.constant 0 : index
    %c0_112 = arith.constant 0 : index
    %288 = vector.load %arg11[%c0_111, %c0_112] : memref<16x128xf32, #tpu.memory_space<vmem>>, vector<2x128xf32>
    %cst_113 = arith.constant dense<0.000000e+00> : vector<2x128xf32>
    %289 = tpu.matmul %286, %285, %cst_113 {dimension_numbers = #tpu.dot_dimension_numbers<[1], [0], [0], [1], [0, 0, 1, 1], [], []>} : vector<2x32xf32>, vector<32x128xf32>, vector<2x128xf32> -> vector<2x128xf32>
    %290 = arith.addf %288, %289 : vector<2x128xf32>
    %291 = vector.extract_strided_slice %290 {offsets = [0, 0], sizes = [2, 32], strides = [1, 1]} : vector<2x128xf32> to vector<2x32xf32>
    %292 = arith.negf %291 : vector<2x32xf32>
    %293 = math.exp %292 : vector<2x32xf32>
    %cst_114 = arith.constant 1.000000e+00 : f32
    %294 = vector.broadcast %cst_114 : f32 to vector<2x32xf32>
    %295 = arith.addf %294, %293 : vector<2x32xf32>
    %296 = arith.divf %294, %295 : vector<2x32xf32>
    %297 = vector.extract_strided_slice %290 {offsets = [0, 32], sizes = [2, 32], strides = [1, 1]} : vector<2x128xf32> to vector<2x32xf32>
    %298 = arith.negf %297 : vector<2x32xf32>
    %299 = math.exp %298 : vector<2x32xf32>
    %cst_115 = arith.constant 1.000000e+00 : f32
    %300 = vector.broadcast %cst_115 : f32 to vector<2x32xf32>
    %301 = arith.addf %300, %299 : vector<2x32xf32>
    %302 = arith.divf %300, %301 : vector<2x32xf32>
    %303 = vector.extract_strided_slice %290 {offsets = [0, 64], sizes = [2, 32], strides = [1, 1]} : vector<2x128xf32> to vector<2x32xf32>
    %304 = math.tanh %303 : vector<2x32xf32>
    %305 = vector.extract_strided_slice %290 {offsets = [0, 96], sizes = [2, 32], strides = [1, 1]} : vector<2x128xf32> to vector<2x32xf32>
    %306 = arith.negf %305 : vector<2x32xf32>
    %307 = math.exp %306 : vector<2x32xf32>
    %cst_116 = arith.constant 1.000000e+00 : f32
    %308 = vector.broadcast %cst_116 : f32 to vector<2x32xf32>
    %309 = arith.addf %308, %307 : vector<2x32xf32>
    %310 = arith.divf %308, %309 : vector<2x32xf32>
    %311 = arith.mulf %302, %287 : vector<2x32xf32>
    %312 = arith.mulf %296, %304 : vector<2x32xf32>
    %313 = arith.addf %311, %312 : vector<2x32xf32>
    %314 = math.tanh %313 : vector<2x32xf32>
    %315 = arith.mulf %310, %314 : vector<2x32xf32>
    %c0_117 = arith.constant 0 : index
    %c0_118 = arith.constant 0 : index
    %316 = vector.load %arg12[%c0_117, %c0_118] : memref<16x32xf32, #tpu.memory_space<vmem>>, vector<2x32xf32>
    tpu.vector_store %arg12[%c0_117, %c0_118], %315 {strides = array<i32>} : memref<16x32xf32, #tpu.memory_space<vmem>>, vector<2x32xf32>,
    %c2_119 = arith.constant 2 : index
    %c0_120 = arith.constant 0 : index
    %317 = vector.load %arg11[%c2_119, %c0_120] : memref<16x128xf32, #tpu.memory_space<vmem>>, vector<2x128xf32>
    %cst_121 = arith.constant dense<0.000000e+00> : vector<2x128xf32>
    %318 = tpu.matmul %315, %285, %cst_121 {dimension_numbers = #tpu.dot_dimension_numbers<[1], [0], [0], [1], [0, 0, 1, 1], [], []>} : vector<2x32xf32>, vector<32x128xf32>, vector<2x128xf32> -> vector<2x128xf32>
    %319 = arith.addf %317, %318 : vector<2x128xf32>
    %320 = vector.extract_strided_slice %319 {offsets = [0, 0], sizes = [2, 32], strides = [1, 1]} : vector<2x128xf32> to vector<2x32xf32>
    %321 = arith.negf %320 : vector<2x32xf32>
    %322 = math.exp %321 : vector<2x32xf32>
    %cst_122 = arith.constant 1.000000e+00 : f32
    %323 = vector.broadcast %cst_122 : f32 to vector<2x32xf32>
    %324 = arith.addf %323, %322 : vector<2x32xf32>
    %325 = arith.divf %323, %324 : vector<2x32xf32>
    %326 = vector.extract_strided_slice %319 {offsets = [0, 32], sizes = [2, 32], strides = [1, 1]} : vector<2x128xf32> to vector<2x32xf32>
    %327 = arith.negf %326 : vector<2x32xf32>
    %328 = math.exp %327 : vector<2x32xf32>
    %cst_123 = arith.constant 1.000000e+00 : f32
    %329 = vector.broadcast %cst_123 : f32 to vector<2x32xf32>
    %330 = arith.addf %329, %328 : vector<2x32xf32>
    %331 = arith.divf %329, %330 : vector<2x32xf32>
    %332 = vector.extract_strided_slice %319 {offsets = [0, 64], sizes = [2, 32], strides = [1, 1]} : vector<2x128xf32> to vector<2x32xf32>
    %333 = math.tanh %332 : vector<2x32xf32>
    %334 = vector.extract_strided_slice %319 {offsets = [0, 96], sizes = [2, 32], strides = [1, 1]} : vector<2x128xf32> to vector<2x32xf32>
    %335 = arith.negf %334 : vector<2x32xf32>
    %336 = math.exp %335 : vector<2x32xf32>
    %cst_124 = arith.constant 1.000000e+00 : f32
    %337 = vector.broadcast %cst_124 : f32 to vector<2x32xf32>
    %338 = arith.addf %337, %336 : vector<2x32xf32>
    %339 = arith.divf %337, %338 : vector<2x32xf32>
    %340 = arith.mulf %331, %313 : vector<2x32xf32>
    %341 = arith.mulf %325, %333 : vector<2x32xf32>
    %342 = arith.addf %340, %341 : vector<2x32xf32>
    %343 = math.tanh %342 : vector<2x32xf32>
    %344 = arith.mulf %339, %343 : vector<2x32xf32>
    %c2_125 = arith.constant 2 : index
    %c0_126 = arith.constant 0 : index
    %345 = vector.load %arg12[%c2_125, %c0_126] : memref<16x32xf32, #tpu.memory_space<vmem>>, vector<2x32xf32>
    tpu.vector_store %arg12[%c2_125, %c0_126], %344 {strides = array<i32>} : memref<16x32xf32, #tpu.memory_space<vmem>>, vector<2x32xf32>,
    %c4_127 = arith.constant 4 : index
    %c0_128 = arith.constant 0 : index
    %346 = vector.load %arg11[%c4_127, %c0_128] : memref<16x128xf32, #tpu.memory_space<vmem>>, vector<2x128xf32>
    %cst_129 = arith.constant dense<0.000000e+00> : vector<2x128xf32>
    %347 = tpu.matmul %344, %285, %cst_129 {dimension_numbers = #tpu.dot_dimension_numbers<[1], [0], [0], [1], [0, 0, 1, 1], [], []>} : vector<2x32xf32>, vector<32x128xf32>, vector<2x128xf32> -> vector<2x128xf32>
    %348 = arith.addf %346, %347 : vector<2x128xf32>
    %349 = vector.extract_strided_slice %348 {offsets = [0, 0], sizes = [2, 32], strides = [1, 1]} : vector<2x128xf32> to vector<2x32xf32>
    %350 = arith.negf %349 : vector<2x32xf32>
    %351 = math.exp %350 : vector<2x32xf32>
    %cst_130 = arith.constant 1.000000e+00 : f32
    %352 = vector.broadcast %cst_130 : f32 to vector<2x32xf32>
    %353 = arith.addf %352, %351 : vector<2x32xf32>
    %354 = arith.divf %352, %353 : vector<2x32xf32>
    %355 = vector.extract_strided_slice %348 {offsets = [0, 32], sizes = [2, 32], strides = [1, 1]} : vector<2x128xf32> to vector<2x32xf32>
    %356 = arith.negf %355 : vector<2x32xf32>
    %357 = math.exp %356 : vector<2x32xf32>
    %cst_131 = arith.constant 1.000000e+00 : f32
    %358 = vector.broadcast %cst_131 : f32 to vector<2x32xf32>
    %359 = arith.addf %358, %357 : vector<2x32xf32>
    %360 = arith.divf %358, %359 : vector<2x32xf32>
    %361 = vector.extract_strided_slice %348 {offsets = [0, 64], sizes = [2, 32], strides = [1, 1]} : vector<2x128xf32> to vector<2x32xf32>
    %362 = math.tanh %361 : vector<2x32xf32>
    %363 = vector.extract_strided_slice %348 {offsets = [0, 96], sizes = [2, 32], strides = [1, 1]} : vector<2x128xf32> to vector<2x32xf32>
    %364 = arith.negf %363 : vector<2x32xf32>
    %365 = math.exp %364 : vector<2x32xf32>
    %cst_132 = arith.constant 1.000000e+00 : f32
    %366 = vector.broadcast %cst_132 : f32 to vector<2x32xf32>
    %367 = arith.addf %366, %365 : vector<2x32xf32>
    %368 = arith.divf %366, %367 : vector<2x32xf32>
    %369 = arith.mulf %360, %342 : vector<2x32xf32>
    %370 = arith.mulf %354, %362 : vector<2x32xf32>
    %371 = arith.addf %369, %370 : vector<2x32xf32>
    %372 = math.tanh %371 : vector<2x32xf32>
    %373 = arith.mulf %368, %372 : vector<2x32xf32>
    %c4_133 = arith.constant 4 : index
    %c0_134 = arith.constant 0 : index
    %374 = vector.load %arg12[%c4_133, %c0_134] : memref<16x32xf32, #tpu.memory_space<vmem>>, vector<2x32xf32>
    tpu.vector_store %arg12[%c4_133, %c0_134], %373 {strides = array<i32>} : memref<16x32xf32, #tpu.memory_space<vmem>>, vector<2x32xf32>,
    %c6_135 = arith.constant 6 : index
    %c0_136 = arith.constant 0 : index
    %375 = vector.load %arg11[%c6_135, %c0_136] : memref<16x128xf32, #tpu.memory_space<vmem>>, vector<2x128xf32>
    %cst_137 = arith.constant dense<0.000000e+00> : vector<2x128xf32>
    %376 = tpu.matmul %373, %285, %cst_137 {dimension_numbers = #tpu.dot_dimension_numbers<[1], [0], [0], [1], [0, 0, 1, 1], [], []>} : vector<2x32xf32>, vector<32x128xf32>, vector<2x128xf32> -> vector<2x128xf32>
    %377 = arith.addf %375, %376 : vector<2x128xf32>
    %378 = vector.extract_strided_slice %377 {offsets = [0, 0], sizes = [2, 32], strides = [1, 1]} : vector<2x128xf32> to vector<2x32xf32>
    %379 = arith.negf %378 : vector<2x32xf32>
    %380 = math.exp %379 : vector<2x32xf32>
    %cst_138 = arith.constant 1.000000e+00 : f32
    %381 = vector.broadcast %cst_138 : f32 to vector<2x32xf32>
    %382 = arith.addf %381, %380 : vector<2x32xf32>
    %383 = arith.divf %381, %382 : vector<2x32xf32>
    %384 = vector.extract_strided_slice %377 {offsets = [0, 32], sizes = [2, 32], strides = [1, 1]} : vector<2x128xf32> to vector<2x32xf32>
    %385 = arith.negf %384 : vector<2x32xf32>
    %386 = math.exp %385 : vector<2x32xf32>
    %cst_139 = arith.constant 1.000000e+00 : f32
    %387 = vector.broadcast %cst_139 : f32 to vector<2x32xf32>
    %388 = arith.addf %387, %386 : vector<2x32xf32>
    %389 = arith.divf %387, %388 : vector<2x32xf32>
    %390 = vector.extract_strided_slice %377 {offsets = [0, 64], sizes = [2, 32], strides = [1, 1]} : vector<2x128xf32> to vector<2x32xf32>
    %391 = math.tanh %390 : vector<2x32xf32>
    %392 = vector.extract_strided_slice %377 {offsets = [0, 96], sizes = [2, 32], strides = [1, 1]} : vector<2x128xf32> to vector<2x32xf32>
    %393 = arith.negf %392 : vector<2x32xf32>
    %394 = math.exp %393 : vector<2x32xf32>
    %cst_140 = arith.constant 1.000000e+00 : f32
    %395 = vector.broadcast %cst_140 : f32 to vector<2x32xf32>
    %396 = arith.addf %395, %394 : vector<2x32xf32>
    %397 = arith.divf %395, %396 : vector<2x32xf32>
    %398 = arith.mulf %389, %371 : vector<2x32xf32>
    %399 = arith.mulf %383, %391 : vector<2x32xf32>
    %400 = arith.addf %398, %399 : vector<2x32xf32>
    %401 = math.tanh %400 : vector<2x32xf32>
    %402 = arith.mulf %397, %401 : vector<2x32xf32>
    %c6_141 = arith.constant 6 : index
    %c0_142 = arith.constant 0 : index
    %403 = vector.load %arg12[%c6_141, %c0_142] : memref<16x32xf32, #tpu.memory_space<vmem>>, vector<2x32xf32>
    tpu.vector_store %arg12[%c6_141, %c0_142], %402 {strides = array<i32>} : memref<16x32xf32, #tpu.memory_space<vmem>>, vector<2x32xf32>,
    %c8_143 = arith.constant 8 : index
    %c0_144 = arith.constant 0 : index
    %404 = vector.load %arg11[%c8_143, %c0_144] : memref<16x128xf32, #tpu.memory_space<vmem>>, vector<2x128xf32>
    %cst_145 = arith.constant dense<0.000000e+00> : vector<2x128xf32>
    %405 = tpu.matmul %402, %285, %cst_145 {dimension_numbers = #tpu.dot_dimension_numbers<[1], [0], [0], [1], [0, 0, 1, 1], [], []>} : vector<2x32xf32>, vector<32x128xf32>, vector<2x128xf32> -> vector<2x128xf32>
    %406 = arith.addf %404, %405 : vector<2x128xf32>
    %407 = vector.extract_strided_slice %406 {offsets = [0, 0], sizes = [2, 32], strides = [1, 1]} : vector<2x128xf32> to vector<2x32xf32>
    %408 = arith.negf %407 : vector<2x32xf32>
    %409 = math.exp %408 : vector<2x32xf32>
    %cst_146 = arith.constant 1.000000e+00 : f32
    %410 = vector.broadcast %cst_146 : f32 to vector<2x32xf32>
    %411 = arith.addf %410, %409 : vector<2x32xf32>
    %412 = arith.divf %410, %411 : vector<2x32xf32>
    %413 = vector.extract_strided_slice %406 {offsets = [0, 32], sizes = [2, 32], strides = [1, 1]} : vector<2x128xf32> to vector<2x32xf32>
    %414 = arith.negf %413 : vector<2x32xf32>
    %415 = math.exp %414 : vector<2x32xf32>
    %cst_147 = arith.constant 1.000000e+00 : f32
    %416 = vector.broadcast %cst_147 : f32 to vector<2x32xf32>
    %417 = arith.addf %416, %415 : vector<2x32xf32>
    %418 = arith.divf %416, %417 : vector<2x32xf32>
    %419 = vector.extract_strided_slice %406 {offsets = [0, 64], sizes = [2, 32], strides = [1, 1]} : vector<2x128xf32> to vector<2x32xf32>
    %420 = math.tanh %419 : vector<2x32xf32>
    %421 = vector.extract_strided_slice %406 {offsets = [0, 96], sizes = [2, 32], strides = [1, 1]} : vector<2x128xf32> to vector<2x32xf32>
    %422 = arith.negf %421 : vector<2x32xf32>
    %423 = math.exp %422 : vector<2x32xf32>
    %cst_148 = arith.constant 1.000000e+00 : f32
    %424 = vector.broadcast %cst_148 : f32 to vector<2x32xf32>
    %425 = arith.addf %424, %423 : vector<2x32xf32>
    %426 = arith.divf %424, %425 : vector<2x32xf32>
    %427 = arith.mulf %418, %400 : vector<2x32xf32>
    %428 = arith.mulf %412, %420 : vector<2x32xf32>
    %429 = arith.addf %427, %428 : vector<2x32xf32>
    %430 = math.tanh %429 : vector<2x32xf32>
    %431 = arith.mulf %426, %430 : vector<2x32xf32>
    %c8_149 = arith.constant 8 : index
    %c0_150 = arith.constant 0 : index
    %432 = vector.load %arg12[%c8_149, %c0_150] : memref<16x32xf32, #tpu.memory_space<vmem>>, vector<2x32xf32>
    tpu.vector_store %arg12[%c8_149, %c0_150], %431 {strides = array<i32>} : memref<16x32xf32, #tpu.memory_space<vmem>>, vector<2x32xf32>,
    %c10_151 = arith.constant 10 : index
    %c0_152 = arith.constant 0 : index
    %433 = vector.load %arg11[%c10_151, %c0_152] : memref<16x128xf32, #tpu.memory_space<vmem>>, vector<2x128xf32>
    %cst_153 = arith.constant dense<0.000000e+00> : vector<2x128xf32>
    %434 = tpu.matmul %431, %285, %cst_153 {dimension_numbers = #tpu.dot_dimension_numbers<[1], [0], [0], [1], [0, 0, 1, 1], [], []>} : vector<2x32xf32>, vector<32x128xf32>, vector<2x128xf32> -> vector<2x128xf32>
    %435 = arith.addf %433, %434 : vector<2x128xf32>
    %436 = vector.extract_strided_slice %435 {offsets = [0, 0], sizes = [2, 32], strides = [1, 1]} : vector<2x128xf32> to vector<2x32xf32>
    %437 = arith.negf %436 : vector<2x32xf32>
    %438 = math.exp %437 : vector<2x32xf32>
    %cst_154 = arith.constant 1.000000e+00 : f32
    %439 = vector.broadcast %cst_154 : f32 to vector<2x32xf32>
    %440 = arith.addf %439, %438 : vector<2x32xf32>
    %441 = arith.divf %439, %440 : vector<2x32xf32>
    %442 = vector.extract_strided_slice %435 {offsets = [0, 32], sizes = [2, 32], strides = [1, 1]} : vector<2x128xf32> to vector<2x32xf32>
    %443 = arith.negf %442 : vector<2x32xf32>
    %444 = math.exp %443 : vector<2x32xf32>
    %cst_155 = arith.constant 1.000000e+00 : f32
    %445 = vector.broadcast %cst_155 : f32 to vector<2x32xf32>
    %446 = arith.addf %445, %444 : vector<2x32xf32>
    %447 = arith.divf %445, %446 : vector<2x32xf32>
    %448 = vector.extract_strided_slice %435 {offsets = [0, 64], sizes = [2, 32], strides = [1, 1]} : vector<2x128xf32> to vector<2x32xf32>
    %449 = math.tanh %448 : vector<2x32xf32>
    %450 = vector.extract_strided_slice %435 {offsets = [0, 96], sizes = [2, 32], strides = [1, 1]} : vector<2x128xf32> to vector<2x32xf32>
    %451 = arith.negf %450 : vector<2x32xf32>
    %452 = math.exp %451 : vector<2x32xf32>
    %cst_156 = arith.constant 1.000000e+00 : f32
    %453 = vector.broadcast %cst_156 : f32 to vector<2x32xf32>
    %454 = arith.addf %453, %452 : vector<2x32xf32>
    %455 = arith.divf %453, %454 : vector<2x32xf32>
    %456 = arith.mulf %447, %429 : vector<2x32xf32>
    %457 = arith.mulf %441, %449 : vector<2x32xf32>
    %458 = arith.addf %456, %457 : vector<2x32xf32>
    %459 = math.tanh %458 : vector<2x32xf32>
    %460 = arith.mulf %455, %459 : vector<2x32xf32>
    %c10_157 = arith.constant 10 : index
    %c0_158 = arith.constant 0 : index
    %461 = vector.load %arg12[%c10_157, %c0_158] : memref<16x32xf32, #tpu.memory_space<vmem>>, vector<2x32xf32>
    tpu.vector_store %arg12[%c10_157, %c0_158], %460 {strides = array<i32>} : memref<16x32xf32, #tpu.memory_space<vmem>>, vector<2x32xf32>,
    %c12_159 = arith.constant 12 : index
    %c0_160 = arith.constant 0 : index
    %462 = vector.load %arg11[%c12_159, %c0_160] : memref<16x128xf32, #tpu.memory_space<vmem>>, vector<2x128xf32>
    %cst_161 = arith.constant dense<0.000000e+00> : vector<2x128xf32>
    %463 = tpu.matmul %460, %285, %cst_161 {dimension_numbers = #tpu.dot_dimension_numbers<[1], [0], [0], [1], [0, 0, 1, 1], [], []>} : vector<2x32xf32>, vector<32x128xf32>, vector<2x128xf32> -> vector<2x128xf32>
    %464 = arith.addf %462, %463 : vector<2x128xf32>
    %465 = vector.extract_strided_slice %464 {offsets = [0, 0], sizes = [2, 32], strides = [1, 1]} : vector<2x128xf32> to vector<2x32xf32>
    %466 = arith.negf %465 : vector<2x32xf32>
    %467 = math.exp %466 : vector<2x32xf32>
    %cst_162 = arith.constant 1.000000e+00 : f32
    %468 = vector.broadcast %cst_162 : f32 to vector<2x32xf32>
    %469 = arith.addf %468, %467 : vector<2x32xf32>
    %470 = arith.divf %468, %469 : vector<2x32xf32>
    %471 = vector.extract_strided_slice %464 {offsets = [0, 32], sizes = [2, 32], strides = [1, 1]} : vector<2x128xf32> to vector<2x32xf32>
    %472 = arith.negf %471 : vector<2x32xf32>
    %473 = math.exp %472 : vector<2x32xf32>
    %cst_163 = arith.constant 1.000000e+00 : f32
    %474 = vector.broadcast %cst_163 : f32 to vector<2x32xf32>
    %475 = arith.addf %474, %473 : vector<2x32xf32>
    %476 = arith.divf %474, %475 : vector<2x32xf32>
    %477 = vector.extract_strided_slice %464 {offsets = [0, 64], sizes = [2, 32], strides = [1, 1]} : vector<2x128xf32> to vector<2x32xf32>
    %478 = math.tanh %477 : vector<2x32xf32>
    %479 = vector.extract_strided_slice %464 {offsets = [0, 96], sizes = [2, 32], strides = [1, 1]} : vector<2x128xf32> to vector<2x32xf32>
    %480 = arith.negf %479 : vector<2x32xf32>
    %481 = math.exp %480 : vector<2x32xf32>
    %cst_164 = arith.constant 1.000000e+00 : f32
    %482 = vector.broadcast %cst_164 : f32 to vector<2x32xf32>
    %483 = arith.addf %482, %481 : vector<2x32xf32>
    %484 = arith.divf %482, %483 : vector<2x32xf32>
    %485 = arith.mulf %476, %458 : vector<2x32xf32>
    %486 = arith.mulf %470, %478 : vector<2x32xf32>
    %487 = arith.addf %485, %486 : vector<2x32xf32>
    %488 = math.tanh %487 : vector<2x32xf32>
    %489 = arith.mulf %484, %488 : vector<2x32xf32>
    %c12_165 = arith.constant 12 : index
    %c0_166 = arith.constant 0 : index
    %490 = vector.load %arg12[%c12_165, %c0_166] : memref<16x32xf32, #tpu.memory_space<vmem>>, vector<2x32xf32>
    tpu.vector_store %arg12[%c12_165, %c0_166], %489 {strides = array<i32>} : memref<16x32xf32, #tpu.memory_space<vmem>>, vector<2x32xf32>,
    %c14_167 = arith.constant 14 : index
    %c0_168 = arith.constant 0 : index
    %491 = vector.load %arg11[%c14_167, %c0_168] : memref<16x128xf32, #tpu.memory_space<vmem>>, vector<2x128xf32>
    %cst_169 = arith.constant dense<0.000000e+00> : vector<2x128xf32>
    %492 = tpu.matmul %489, %285, %cst_169 {dimension_numbers = #tpu.dot_dimension_numbers<[1], [0], [0], [1], [0, 0, 1, 1], [], []>} : vector<2x32xf32>, vector<32x128xf32>, vector<2x128xf32> -> vector<2x128xf32>
    %493 = arith.addf %491, %492 : vector<2x128xf32>
    %494 = vector.extract_strided_slice %493 {offsets = [0, 0], sizes = [2, 32], strides = [1, 1]} : vector<2x128xf32> to vector<2x32xf32>
    %495 = arith.negf %494 : vector<2x32xf32>
    %496 = math.exp %495 : vector<2x32xf32>
    %cst_170 = arith.constant 1.000000e+00 : f32
    %497 = vector.broadcast %cst_170 : f32 to vector<2x32xf32>
    %498 = arith.addf %497, %496 : vector<2x32xf32>
    %499 = arith.divf %497, %498 : vector<2x32xf32>
    %500 = vector.extract_strided_slice %493 {offsets = [0, 32], sizes = [2, 32], strides = [1, 1]} : vector<2x128xf32> to vector<2x32xf32>
    %501 = arith.negf %500 : vector<2x32xf32>
    %502 = math.exp %501 : vector<2x32xf32>
    %cst_171 = arith.constant 1.000000e+00 : f32
    %503 = vector.broadcast %cst_171 : f32 to vector<2x32xf32>
    %504 = arith.addf %503, %502 : vector<2x32xf32>
    %505 = arith.divf %503, %504 : vector<2x32xf32>
    %506 = vector.extract_strided_slice %493 {offsets = [0, 64], sizes = [2, 32], strides = [1, 1]} : vector<2x128xf32> to vector<2x32xf32>
    %507 = math.tanh %506 : vector<2x32xf32>
    %508 = vector.extract_strided_slice %493 {offsets = [0, 96], sizes = [2, 32], strides = [1, 1]} : vector<2x128xf32> to vector<2x32xf32>
    %509 = arith.negf %508 : vector<2x32xf32>
    %510 = math.exp %509 : vector<2x32xf32>
    %cst_172 = arith.constant 1.000000e+00 : f32
    %511 = vector.broadcast %cst_172 : f32 to vector<2x32xf32>
    %512 = arith.addf %511, %510 : vector<2x32xf32>
    %513 = arith.divf %511, %512 : vector<2x32xf32>
    %514 = arith.mulf %505, %487 : vector<2x32xf32>
    %515 = arith.mulf %499, %507 : vector<2x32xf32>
    %516 = arith.addf %514, %515 : vector<2x32xf32>
    %517 = math.tanh %516 : vector<2x32xf32>
    %518 = arith.mulf %513, %517 : vector<2x32xf32>
    %c14_173 = arith.constant 14 : index
    %c0_174 = arith.constant 0 : index
    %519 = vector.load %arg12[%c14_173, %c0_174] : memref<16x32xf32, #tpu.memory_space<vmem>>, vector<2x32xf32>
    tpu.vector_store %arg12[%c14_173, %c0_174], %518 {strides = array<i32>} : memref<16x32xf32, #tpu.memory_space<vmem>>, vector<2x32xf32>,
    %c0_175 = arith.constant 0 : index
    %c0_176 = arith.constant 0 : index
    %520 = vector.load %arg6[%c0_175, %c0_176] : memref<32x32xf32, #tpu.memory_space<vmem>>, vector<32x32xf32>
    %c0_177 = arith.constant 0 : index
    %c0_178 = arith.constant 0 : index
    %521 = vector.load %arg7[%c0_177, %c0_178] : memref<1x32xf32, #tpu.memory_space<vmem>>, vector<1x32xf32>
    %c0_179 = arith.constant 0 : index
    %c0_180 = arith.constant 0 : index
    %522 = vector.load %arg8[%c0_179, %c0_180] : memref<32x1xf32, #tpu.memory_space<vmem>>, vector<32x1xf32>
    %c0_181 = arith.constant 0 : index
    %c0_182 = arith.constant 0 : index
    %523 = vector.load %arg9[%c0_181, %c0_182] : memref<1x1xf32, #tpu.memory_space<vmem>>, vector<1x1xf32>
    %cst_183 = arith.constant 0xFF800000 : f32
    %524 = vector.broadcast %cst_183 : f32 to vector<2x1xf32>
    %cst_184 = arith.constant 0.000000e+00 : f32
    %525 = vector.broadcast %cst_184 : f32 to vector<2x1xf32>
    %cst_185 = arith.constant 0.000000e+00 : f32
    %526 = vector.broadcast %cst_185 : f32 to vector<2x32xf32>
    %c0_186 = arith.constant 0 : index
    %c0_187 = arith.constant 0 : index
    %527 = vector.load %arg12[%c0_186, %c0_187] : memref<16x32xf32, #tpu.memory_space<vmem>>, vector<2x32xf32>
    %cst_188 = arith.constant dense<0.000000e+00> : vector<2x32xf32>
    %528 = tpu.matmul %527, %520, %cst_188 {dimension_numbers = #tpu.dot_dimension_numbers<[1], [0], [0], [1], [0, 0, 1, 1], [], []>} : vector<2x32xf32>, vector<32x32xf32>, vector<2x32xf32> -> vector<2x32xf32>
    %529 = vector.broadcast %521 : vector<1x32xf32> to vector<2x32xf32>
    %530 = arith.addf %528, %529 : vector<2x32xf32>
    %531 = math.tanh %530 : vector<2x32xf32>
    %cst_189 = arith.constant dense<0.000000e+00> : vector<2x1xf32>
    %532 = tpu.matmul %531, %522, %cst_189 {dimension_numbers = #tpu.dot_dimension_numbers<[1], [0], [0], [1], [0, 0, 1, 1], [], []>} : vector<2x32xf32>, vector<32x1xf32>, vector<2x1xf32> -> vector<2x1xf32>
    %533 = vector.broadcast %523 : vector<1x1xf32> to vector<2x1xf32>
    %534 = arith.addf %532, %533 : vector<2x1xf32>
    %535 = arith.maximumf %524, %534 : vector<2x1xf32>
    %536 = arith.subf %524, %535 : vector<2x1xf32>
    %537 = math.exp %536 : vector<2x1xf32>
    %538 = arith.subf %534, %535 : vector<2x1xf32>
    %539 = math.exp %538 : vector<2x1xf32>
    %540 = arith.mulf %537, %525 : vector<2x1xf32>
    %541 = arith.addf %540, %539 : vector<2x1xf32>
    %542 = vector.broadcast %537 : vector<2x1xf32> to vector<2x32xf32>
    %543 = arith.mulf %542, %526 : vector<2x32xf32>
    %544 = vector.broadcast %539 : vector<2x1xf32> to vector<2x32xf32>
    %545 = arith.mulf %544, %527 : vector<2x32xf32>
    %546 = arith.addf %543, %545 : vector<2x32xf32>
    %c2_190 = arith.constant 2 : index
    %c0_191 = arith.constant 0 : index
    %547 = vector.load %arg12[%c2_190, %c0_191] : memref<16x32xf32, #tpu.memory_space<vmem>>, vector<2x32xf32>
    %cst_192 = arith.constant dense<0.000000e+00> : vector<2x32xf32>
    %548 = tpu.matmul %547, %520, %cst_192 {dimension_numbers = #tpu.dot_dimension_numbers<[1], [0], [0], [1], [0, 0, 1, 1], [], []>} : vector<2x32xf32>, vector<32x32xf32>, vector<2x32xf32> -> vector<2x32xf32>
    %549 = vector.broadcast %521 : vector<1x32xf32> to vector<2x32xf32>
    %550 = arith.addf %548, %549 : vector<2x32xf32>
    %551 = math.tanh %550 : vector<2x32xf32>
    %cst_193 = arith.constant dense<0.000000e+00> : vector<2x1xf32>
    %552 = tpu.matmul %551, %522, %cst_193 {dimension_numbers = #tpu.dot_dimension_numbers<[1], [0], [0], [1], [0, 0, 1, 1], [], []>} : vector<2x32xf32>, vector<32x1xf32>, vector<2x1xf32> -> vector<2x1xf32>
    %553 = vector.broadcast %523 : vector<1x1xf32> to vector<2x1xf32>
    %554 = arith.addf %552, %553 : vector<2x1xf32>
    %555 = arith.maximumf %535, %554 : vector<2x1xf32>
    %556 = arith.subf %535, %555 : vector<2x1xf32>
    %557 = math.exp %556 : vector<2x1xf32>
    %558 = arith.subf %554, %555 : vector<2x1xf32>
    %559 = math.exp %558 : vector<2x1xf32>
    %560 = arith.mulf %557, %541 : vector<2x1xf32>
    %561 = arith.addf %560, %559 : vector<2x1xf32>
    %562 = vector.broadcast %557 : vector<2x1xf32> to vector<2x32xf32>
    %563 = arith.mulf %562, %546 : vector<2x32xf32>
    %564 = vector.broadcast %559 : vector<2x1xf32> to vector<2x32xf32>
    %565 = arith.mulf %564, %547 : vector<2x32xf32>
    %566 = arith.addf %563, %565 : vector<2x32xf32>
    %c4_194 = arith.constant 4 : index
    %c0_195 = arith.constant 0 : index
    %567 = vector.load %arg12[%c4_194, %c0_195] : memref<16x32xf32, #tpu.memory_space<vmem>>, vector<2x32xf32>
    %cst_196 = arith.constant dense<0.000000e+00> : vector<2x32xf32>
    %568 = tpu.matmul %567, %520, %cst_196 {dimension_numbers = #tpu.dot_dimension_numbers<[1], [0], [0], [1], [0, 0, 1, 1], [], []>} : vector<2x32xf32>, vector<32x32xf32>, vector<2x32xf32> -> vector<2x32xf32>
    %569 = vector.broadcast %521 : vector<1x32xf32> to vector<2x32xf32>
    %570 = arith.addf %568, %569 : vector<2x32xf32>
    %571 = math.tanh %570 : vector<2x32xf32>
    %cst_197 = arith.constant dense<0.000000e+00> : vector<2x1xf32>
    %572 = tpu.matmul %571, %522, %cst_197 {dimension_numbers = #tpu.dot_dimension_numbers<[1], [0], [0], [1], [0, 0, 1, 1], [], []>} : vector<2x32xf32>, vector<32x1xf32>, vector<2x1xf32> -> vector<2x1xf32>
    %573 = vector.broadcast %523 : vector<1x1xf32> to vector<2x1xf32>
    %574 = arith.addf %572, %573 : vector<2x1xf32>
    %575 = arith.maximumf %555, %574 : vector<2x1xf32>
    %576 = arith.subf %555, %575 : vector<2x1xf32>
    %577 = math.exp %576 : vector<2x1xf32>
    %578 = arith.subf %574, %575 : vector<2x1xf32>
    %579 = math.exp %578 : vector<2x1xf32>
    %580 = arith.mulf %577, %561 : vector<2x1xf32>
    %581 = arith.addf %580, %579 : vector<2x1xf32>
    %582 = vector.broadcast %577 : vector<2x1xf32> to vector<2x32xf32>
    %583 = arith.mulf %582, %566 : vector<2x32xf32>
    %584 = vector.broadcast %579 : vector<2x1xf32> to vector<2x32xf32>
    %585 = arith.mulf %584, %567 : vector<2x32xf32>
    %586 = arith.addf %583, %585 : vector<2x32xf32>
    %c6_198 = arith.constant 6 : index
    %c0_199 = arith.constant 0 : index
    %587 = vector.load %arg12[%c6_198, %c0_199] : memref<16x32xf32, #tpu.memory_space<vmem>>, vector<2x32xf32>
    %cst_200 = arith.constant dense<0.000000e+00> : vector<2x32xf32>
    %588 = tpu.matmul %587, %520, %cst_200 {dimension_numbers = #tpu.dot_dimension_numbers<[1], [0], [0], [1], [0, 0, 1, 1], [], []>} : vector<2x32xf32>, vector<32x32xf32>, vector<2x32xf32> -> vector<2x32xf32>
    %589 = vector.broadcast %521 : vector<1x32xf32> to vector<2x32xf32>
    %590 = arith.addf %588, %589 : vector<2x32xf32>
    %591 = math.tanh %590 : vector<2x32xf32>
    %cst_201 = arith.constant dense<0.000000e+00> : vector<2x1xf32>
    %592 = tpu.matmul %591, %522, %cst_201 {dimension_numbers = #tpu.dot_dimension_numbers<[1], [0], [0], [1], [0, 0, 1, 1], [], []>} : vector<2x32xf32>, vector<32x1xf32>, vector<2x1xf32> -> vector<2x1xf32>
    %593 = vector.broadcast %523 : vector<1x1xf32> to vector<2x1xf32>
    %594 = arith.addf %592, %593 : vector<2x1xf32>
    %595 = arith.maximumf %575, %594 : vector<2x1xf32>
    %596 = arith.subf %575, %595 : vector<2x1xf32>
    %597 = math.exp %596 : vector<2x1xf32>
    %598 = arith.subf %594, %595 : vector<2x1xf32>
    %599 = math.exp %598 : vector<2x1xf32>
    %600 = arith.mulf %597, %581 : vector<2x1xf32>
    %601 = arith.addf %600, %599 : vector<2x1xf32>
    %602 = vector.broadcast %597 : vector<2x1xf32> to vector<2x32xf32>
    %603 = arith.mulf %602, %586 : vector<2x32xf32>
    %604 = vector.broadcast %599 : vector<2x1xf32> to vector<2x32xf32>
    %605 = arith.mulf %604, %587 : vector<2x32xf32>
    %606 = arith.addf %603, %605 : vector<2x32xf32>
    %c8_202 = arith.constant 8 : index
    %c0_203 = arith.constant 0 : index
    %607 = vector.load %arg12[%c8_202, %c0_203] : memref<16x32xf32, #tpu.memory_space<vmem>>, vector<2x32xf32>
    %cst_204 = arith.constant dense<0.000000e+00> : vector<2x32xf32>
    %608 = tpu.matmul %607, %520, %cst_204 {dimension_numbers = #tpu.dot_dimension_numbers<[1], [0], [0], [1], [0, 0, 1, 1], [], []>} : vector<2x32xf32>, vector<32x32xf32>, vector<2x32xf32> -> vector<2x32xf32>
    %609 = vector.broadcast %521 : vector<1x32xf32> to vector<2x32xf32>
    %610 = arith.addf %608, %609 : vector<2x32xf32>
    %611 = math.tanh %610 : vector<2x32xf32>
    %cst_205 = arith.constant dense<0.000000e+00> : vector<2x1xf32>
    %612 = tpu.matmul %611, %522, %cst_205 {dimension_numbers = #tpu.dot_dimension_numbers<[1], [0], [0], [1], [0, 0, 1, 1], [], []>} : vector<2x32xf32>, vector<32x1xf32>, vector<2x1xf32> -> vector<2x1xf32>
    %613 = vector.broadcast %523 : vector<1x1xf32> to vector<2x1xf32>
    %614 = arith.addf %612, %613 : vector<2x1xf32>
    %615 = arith.maximumf %595, %614 : vector<2x1xf32>
    %616 = arith.subf %595, %615 : vector<2x1xf32>
    %617 = math.exp %616 : vector<2x1xf32>
    %618 = arith.subf %614, %615 : vector<2x1xf32>
    %619 = math.exp %618 : vector<2x1xf32>
    %620 = arith.mulf %617, %601 : vector<2x1xf32>
    %621 = arith.addf %620, %619 : vector<2x1xf32>
    %622 = vector.broadcast %617 : vector<2x1xf32> to vector<2x32xf32>
    %623 = arith.mulf %622, %606 : vector<2x32xf32>
    %624 = vector.broadcast %619 : vector<2x1xf32> to vector<2x32xf32>
    %625 = arith.mulf %624, %607 : vector<2x32xf32>
    %626 = arith.addf %623, %625 : vector<2x32xf32>
    %c10_206 = arith.constant 10 : index
    %c0_207 = arith.constant 0 : index
    %627 = vector.load %arg12[%c10_206, %c0_207] : memref<16x32xf32, #tpu.memory_space<vmem>>, vector<2x32xf32>
    %cst_208 = arith.constant dense<0.000000e+00> : vector<2x32xf32>
    %628 = tpu.matmul %627, %520, %cst_208 {dimension_numbers = #tpu.dot_dimension_numbers<[1], [0], [0], [1], [0, 0, 1, 1], [], []>} : vector<2x32xf32>, vector<32x32xf32>, vector<2x32xf32> -> vector<2x32xf32>
    %629 = vector.broadcast %521 : vector<1x32xf32> to vector<2x32xf32>
    %630 = arith.addf %628, %629 : vector<2x32xf32>
    %631 = math.tanh %630 : vector<2x32xf32>
    %cst_209 = arith.constant dense<0.000000e+00> : vector<2x1xf32>
    %632 = tpu.matmul %631, %522, %cst_209 {dimension_numbers = #tpu.dot_dimension_numbers<[1], [0], [0], [1], [0, 0, 1, 1], [], []>} : vector<2x32xf32>, vector<32x1xf32>, vector<2x1xf32> -> vector<2x1xf32>
    %633 = vector.broadcast %523 : vector<1x1xf32> to vector<2x1xf32>
    %634 = arith.addf %632, %633 : vector<2x1xf32>
    %635 = arith.maximumf %615, %634 : vector<2x1xf32>
    %636 = arith.subf %615, %635 : vector<2x1xf32>
    %637 = math.exp %636 : vector<2x1xf32>
    %638 = arith.subf %634, %635 : vector<2x1xf32>
    %639 = math.exp %638 : vector<2x1xf32>
    %640 = arith.mulf %637, %621 : vector<2x1xf32>
    %641 = arith.addf %640, %639 : vector<2x1xf32>
    %642 = vector.broadcast %637 : vector<2x1xf32> to vector<2x32xf32>
    %643 = arith.mulf %642, %626 : vector<2x32xf32>
    %644 = vector.broadcast %639 : vector<2x1xf32> to vector<2x32xf32>
    %645 = arith.mulf %644, %627 : vector<2x32xf32>
    %646 = arith.addf %643, %645 : vector<2x32xf32>
    %c12_210 = arith.constant 12 : index
    %c0_211 = arith.constant 0 : index
    %647 = vector.load %arg12[%c12_210, %c0_211] : memref<16x32xf32, #tpu.memory_space<vmem>>, vector<2x32xf32>
    %cst_212 = arith.constant dense<0.000000e+00> : vector<2x32xf32>
    %648 = tpu.matmul %647, %520, %cst_212 {dimension_numbers = #tpu.dot_dimension_numbers<[1], [0], [0], [1], [0, 0, 1, 1], [], []>} : vector<2x32xf32>, vector<32x32xf32>, vector<2x32xf32> -> vector<2x32xf32>
    %649 = vector.broadcast %521 : vector<1x32xf32> to vector<2x32xf32>
    %650 = arith.addf %648, %649 : vector<2x32xf32>
    %651 = math.tanh %650 : vector<2x32xf32>
    %cst_213 = arith.constant dense<0.000000e+00> : vector<2x1xf32>
    %652 = tpu.matmul %651, %522, %cst_213 {dimension_numbers = #tpu.dot_dimension_numbers<[1], [0], [0], [1], [0, 0, 1, 1], [], []>} : vector<2x32xf32>, vector<32x1xf32>, vector<2x1xf32> -> vector<2x1xf32>
    %653 = vector.broadcast %523 : vector<1x1xf32> to vector<2x1xf32>
    %654 = arith.addf %652, %653 : vector<2x1xf32>
    %655 = arith.maximumf %635, %654 : vector<2x1xf32>
    %656 = arith.subf %635, %655 : vector<2x1xf32>
    %657 = math.exp %656 : vector<2x1xf32>
    %658 = arith.subf %654, %655 : vector<2x1xf32>
    %659 = math.exp %658 : vector<2x1xf32>
    %660 = arith.mulf %657, %641 : vector<2x1xf32>
    %661 = arith.addf %660, %659 : vector<2x1xf32>
    %662 = vector.broadcast %657 : vector<2x1xf32> to vector<2x32xf32>
    %663 = arith.mulf %662, %646 : vector<2x32xf32>
    %664 = vector.broadcast %659 : vector<2x1xf32> to vector<2x32xf32>
    %665 = arith.mulf %664, %647 : vector<2x32xf32>
    %666 = arith.addf %663, %665 : vector<2x32xf32>
    %c14_214 = arith.constant 14 : index
    %c0_215 = arith.constant 0 : index
    %667 = vector.load %arg12[%c14_214, %c0_215] : memref<16x32xf32, #tpu.memory_space<vmem>>, vector<2x32xf32>
    %cst_216 = arith.constant dense<0.000000e+00> : vector<2x32xf32>
    %668 = tpu.matmul %667, %520, %cst_216 {dimension_numbers = #tpu.dot_dimension_numbers<[1], [0], [0], [1], [0, 0, 1, 1], [], []>} : vector<2x32xf32>, vector<32x32xf32>, vector<2x32xf32> -> vector<2x32xf32>
    %669 = vector.broadcast %521 : vector<1x32xf32> to vector<2x32xf32>
    %670 = arith.addf %668, %669 : vector<2x32xf32>
    %671 = math.tanh %670 : vector<2x32xf32>
    %cst_217 = arith.constant dense<0.000000e+00> : vector<2x1xf32>
    %672 = tpu.matmul %671, %522, %cst_217 {dimension_numbers = #tpu.dot_dimension_numbers<[1], [0], [0], [1], [0, 0, 1, 1], [], []>} : vector<2x32xf32>, vector<32x1xf32>, vector<2x1xf32> -> vector<2x1xf32>
    %673 = vector.broadcast %523 : vector<1x1xf32> to vector<2x1xf32>
    %674 = arith.addf %672, %673 : vector<2x1xf32>
    %675 = arith.maximumf %655, %674 : vector<2x1xf32>
    %676 = arith.subf %655, %675 : vector<2x1xf32>
    %677 = math.exp %676 : vector<2x1xf32>
    %678 = arith.subf %674, %675 : vector<2x1xf32>
    %679 = math.exp %678 : vector<2x1xf32>
    %680 = arith.mulf %677, %661 : vector<2x1xf32>
    %681 = arith.addf %680, %679 : vector<2x1xf32>
    %682 = vector.broadcast %677 : vector<2x1xf32> to vector<2x32xf32>
    %683 = arith.mulf %682, %666 : vector<2x32xf32>
    %684 = vector.broadcast %679 : vector<2x1xf32> to vector<2x32xf32>
    %685 = arith.mulf %684, %667 : vector<2x32xf32>
    %686 = arith.addf %683, %685 : vector<2x32xf32>
    %687 = vector.broadcast %681 : vector<2x1xf32> to vector<2x32xf32>
    %688 = arith.divf %686, %687 : vector<2x32xf32>
    %c0_218 = arith.constant 0 : index
    %c0_219 = arith.constant 0 : index
    %689 = vector.load %arg10[%c0_218, %c0_219] : memref<2x32xf32, #tpu.memory_space<vmem>>, vector<2x32xf32>
    tpu.vector_store %arg10[%c0_218, %c0_219], %688 {strides = array<i32>} : memref<2x32xf32, #tpu.memory_space<vmem>>, vector<2x32xf32>,
    return
  }
  func.func @transform_0(%arg0: i32) -> (i32, i32, i32) {
    %c0_i32 = arith.constant 0 : i32
    %c0_i32_0 = arith.constant 0 : i32
    %c0_i32_1 = arith.constant 0 : i32
    return %c0_i32, %arg0, %c0_i32_0 : i32, i32, i32
  }
  func.func @transform_1(%arg0: i32) -> (i32, i32) {
    %c0_i32 = arith.constant 0 : i32
    %c0_i32_0 = arith.constant 0 : i32
    %c0_i32_1 = arith.constant 0 : i32
    return %c0_i32, %c0_i32_0 : i32, i32
  }
  func.func @transform_2(%arg0: i32) -> (i32, i32) {
    %c0_i32 = arith.constant 0 : i32
    %c0_i32_0 = arith.constant 0 : i32
    %c0_i32_1 = arith.constant 0 : i32
    return %c0_i32, %c0_i32_0 : i32, i32
  }
  func.func @transform_3(%arg0: i32) -> (i32, i32) {
    %c0_i32 = arith.constant 0 : i32
    %c0_i32_0 = arith.constant 0 : i32
    %c0_i32_1 = arith.constant 0 : i32
    return %c0_i32, %c0_i32_0 : i32, i32
  }
  func.func @transform_4(%arg0: i32) -> (i32, i32) {
    %c0_i32 = arith.constant 0 : i32
    %c0_i32_0 = arith.constant 0 : i32
    %c0_i32_1 = arith.constant 0 : i32
    return %c0_i32, %c0_i32_0 : i32, i32
  }
  func.func @transform_5(%arg0: i32) -> (i32, i32) {
    %c0_i32 = arith.constant 0 : i32
    %c0_i32_0 = arith.constant 0 : i32
    %c0_i32_1 = arith.constant 0 : i32
    return %c0_i32, %c0_i32_0 : i32, i32
  }
  func.func @transform_6(%arg0: i32) -> (i32, i32) {
    %c0_i32 = arith.constant 0 : i32
    %c0_i32_0 = arith.constant 0 : i32
    %c0_i32_1 = arith.constant 0 : i32
    return %c0_i32, %c0_i32_0 : i32, i32
  }
  func.func @transform_7(%arg0: i32) -> (i32, i32) {
    %c0_i32 = arith.constant 0 : i32
    %c0_i32_0 = arith.constant 0 : i32
    %c0_i32_1 = arith.constant 0 : i32
    return %c0_i32, %c0_i32_0 : i32, i32
  }
  func.func @transform_8(%arg0: i32) -> (i32, i32) {
    %c0_i32 = arith.constant 0 : i32
    %c0_i32_0 = arith.constant 0 : i32
    %c0_i32_1 = arith.constant 0 : i32
    return %c0_i32, %c0_i32_0 : i32, i32
  }
  func.func @transform_9(%arg0: i32) -> (i32, i32) {
    %c0_i32 = arith.constant 0 : i32
    %c0_i32_0 = arith.constant 0 : i32
    return %arg0, %c0_i32 : i32, i32
  }
}

</mosaic_0001>

<llo_original>
// kernel: tpu_custom_call.1
$region0: #{tpu_custom_call.1}
  #allocation0 [shape = 'u32[]', space=smem, size = 0x4, offset = 0x4, fixed_abs, tag = 'smem constant byte address 0x4 - core index']
  #allocation1 [shape = 'u32[72,128]{1,0:T(1,128)}', space=vmem, size = 0x9000, scoped, tag = 'internal scratch']
  #allocation2 [shape = 'f32[16,128]{1,0:T(8,128)}', space=vmem, size = 0x2000, scoped, tag = 'scratch operand']
  #allocation3 [shape = 'f32[16,32]{1,0:T(8,128)}', space=vmem, size = 0x2000, scoped, tag = 'scratch operand']
  #allocation4 [shape = 'f32[1,1]{1,0:T(1,128)S(1)}', space=vmem, size = 0x200, scoped, tag = 'scoped memory for tpu_custom_call.1']
  %s0 = inlined_call_operand.hbm [shape: f32[8,2,128], index: 0, kind: input, shape index: {}]
  %s1 = inlined_call_operand.vmem [shape: f32[32,128], index: 1, kind: input, shape index: {}]
  %s2 = inlined_call_operand.hbm [shape: f32[32,128], index: 2, kind: input, shape index: {}]
  %s3 = inlined_call_operand.hbm [shape: f32[32,128], index: 3, kind: input, shape index: {}]
  %s4 = inlined_call_operand.vmem [shape: f32[1,128], index: 4, kind: input, shape index: {}]
  %s5 = inlined_call_operand.hbm [shape: f32[32,32], index: 5, kind: input, shape index: {}]
  %s6 = inlined_call_operand.vmem [shape: f32[1,32], index: 6, kind: input, shape index: {}]
  %s7 = inlined_call_operand.vmem [shape: f32[32,1], index: 7, kind: input, shape index: {}]
  %s8 = inlined_call_operand.<no memory space> [shape: f32[1,1], index: 8, kind: input, shape index: {}]
  %s9 = inlined_call_operand.hbm [shape: f32[2,32], index: 9, kind: output, shape index: {}]
  %s10 = sld [smem:[#allocation0]]
  $region62: #{tpu_custom_call.1} parent=0
    _
  %s12 = ssub.s32 1, %s10
  %s13 = scalar_select 0, %s12, %s10
  %v14 = vstv %s8
  %15 = vst [vmem:[#allocation4] sm:$0x1] %v14
  $region1: #{tpu_custom_call.1} parent=0
    #allocation5 [shape = 'u8[8192]{0}', space=vmem, size = 0x2000, scoped, tag = 'input window, operand 0, single buffered']
    #allocation6 [shape = 's32[1]{0}', space=sflag, size = 0x4, scoped, tag = 'scoped memory for tpu_custom_call.1']
    #allocation7 [shape = 's32[1]{0}', space=sflag, size = 0x4, scoped, tag = 'scoped memory for tpu_custom_call.1']
    #allocation8 [shape = 'u8[16384]{0}', space=vmem, size = 0x4000, scoped, tag = 'input window, operand 2, single buffered']
    #allocation9 [shape = 's32[1]{0}', space=sflag, size = 0x4, scoped, tag = 'scoped memory for tpu_custom_call.1']
    #allocation10 [shape = 'u8[16384]{0}', space=vmem, size = 0x4000, scoped, tag = 'input window, operand 3, single buffered']
    #allocation11 [shape = 'u8[16384]{0}', space=vmem, size = 0x4000, scoped, tag = 'input window, operand 5, single buffered']
    #allocation12 [shape = 's32[1]{0}', space=sflag, size = 0x4, scoped, tag = 'scoped memory for tpu_custom_call.1']
    #allocation13 [shape = 'u8[1024]{0}', space=vmem, size = 0x400, scoped, tag = 'output window, operand 0, single buffered']
    %16 = vsyncpa [#allocation6], 0
    %17 = vsyncpa [#allocation9], 0
    %18 = vsyncpa [#allocation12], 0
    %19 = vsyncpa [#allocation7], 0
    // Predicated region
    $region2: #{tpu_custom_call.1} parent=1 // pred_check
      _
    $region3: #{tpu_custom_call.1} parent=1 // pred_check_branch
      %21 = sbr.rel (0) target = $region5
    $region4: #{tpu_custom_call.1} parent=1 // pred_region
      %23 = vsyncadd [#allocation6], 0
      %s24 = sshll.u32 %s0, 4
      %s25 = int_to_ptr.hbm [resolvable:$true] %s24
      %s26 = sshll.u32 [#allocation5], 4
      %s27 = int_to_ptr.vmem [resolvable:$true] %s26
      %32 = dma.hbm_to_vmem [thread:$0]  %s25, 256, %s27, [#allocation6], 32, 32, 2
    $region5: #{tpu_custom_call.1} parent=1 // pred_fallthru
      _
    // Predicated region
    $region6: #{tpu_custom_call.1} parent=1 // pred_check
      _
    $region7: #{tpu_custom_call.1} parent=1 // pred_check_branch
      %34 = sbr.rel (0) target = $region9
    $region8: #{tpu_custom_call.1} parent=1 // pred_region
      _
    $region9: #{tpu_custom_call.1} parent=1 // pred_fallthru
      _
    // Predicated region
    $region10: #{tpu_custom_call.1} parent=1 // pred_check
      _
    $region11: #{tpu_custom_call.1} parent=1 // pred_check_branch
      %36 = sbr.rel (0) target = $region13
    $region12: #{tpu_custom_call.1} parent=1 // pred_region
      %38 = vsyncadd [#allocation9], 0
      %s39 = sshll.u32 %s2, 4
      %s40 = int_to_ptr.hbm [resolvable:$true] %s39
      %s41 = sshll.u32 [#allocation8], 4
      %s42 = int_to_ptr.vmem [resolvable:$true] %s41
      %47 = dma.hbm_to_vmem [thread:$0]  %s40, 512, %s42, [#allocation9], 128, 128, 8
    $region13: #{tpu_custom_call.1} parent=1 // pred_fallthru
      _
    // Predicated region
    $region14: #{tpu_custom_call.1} parent=1 // pred_check
      _
    $region15: #{tpu_custom_call.1} parent=1 // pred_check_branch
      %49 = sbr.rel (0) target = $region17
    $region16: #{tpu_custom_call.1} parent=1 // pred_region
      %51 = vsyncadd [#allocation9], 0
      %s52 = sshll.u32 %s3, 4
      %s53 = int_to_ptr.hbm [resolvable:$true] %s52
      %s54 = sshll.u32 [#allocation10], 4
      %s55 = int_to_ptr.vmem [resolvable:$true] %s54
      %60 = dma.hbm_to_vmem [thread:$0]  %s53, 512, %s55, [#allocation9], 128, 128, 8
    $region17: #{tpu_custom_call.1} parent=1 // pred_fallthru
      _
    // Predicated region
    $region18: #{tpu_custom_call.1} parent=1 // pred_check
      _
    $region19: #{tpu_custom_call.1} parent=1 // pred_check_branch
      %62 = sbr.rel (0) target = $region21
    $region20: #{tpu_custom_call.1} parent=1 // pred_region
      _
    $region21: #{tpu_custom_call.1} parent=1 // pred_fallthru
      _
    // Predicated region
    $region22: #{tpu_custom_call.1} parent=1 // pred_check
      _
    $region23: #{tpu_custom_call.1} parent=1 // pred_check_branch
      %64 = sbr.rel (0) target = $region25
    $region24: #{tpu_custom_call.1} parent=1 // pred_region
      %66 = vsyncadd [#allocation12], 0
      %s67 = sshll.u32 %s5, 4
      %s68 = int_to_ptr.hbm [resolvable:$true] %s67
      %s69 = sshll.u32 [#allocation11], 4
      %s70 = int_to_ptr.vmem [resolvable:$true] %s69
      %75 = dma.hbm_to_vmem [thread:$0]  %s68, 512, %s70, [#allocation12], 128, 128, 8
    $region25: #{tpu_custom_call.1} parent=1 // pred_fallthru
      _
    // Predicated region
    $region26: #{tpu_custom_call.1} parent=1 // pred_check
      _
    $region27: #{tpu_custom_call.1} parent=1 // pred_check_branch
      %77 = sbr.rel (0) target = $region29
    $region28: #{tpu_custom_call.1} parent=1 // pred_region
      _
    $region29: #{tpu_custom_call.1} parent=1 // pred_fallthru
      _
    // Predicated region
    $region30: #{tpu_custom_call.1} parent=1 // pred_check
      _
    $region31: #{tpu_custom_call.1} parent=1 // pred_check_branch
      %79 = sbr.rel (0) target = $region33
    $region32: #{tpu_custom_call.1} parent=1 // pred_region
      _
    $region33: #{tpu_custom_call.1} parent=1 // pred_fallthru
      _
    // Predicated region
    $region34: #{tpu_custom_call.1} parent=1 // pred_check
      _
    $region35: #{tpu_custom_call.1} parent=1 // pred_check_branch
      %81 = sbr.rel (0) target = $region37
    $region36: #{tpu_custom_call.1} parent=1 // pred_region
      _
    $region37: #{tpu_custom_call.1} parent=1 // pred_fallthru
      _
    // Predicated region
    $region38: #{tpu_custom_call.1} parent=1 // pred_check
      _
    $region39: #{tpu_custom_call.1} parent=1 // pred_check_branch
      %83 = sbr.rel (0) target = $region41
    $region40: #{tpu_custom_call.1} parent=1 // pred_region
      %85 = dma.done [#allocation6], 256
    $region41: #{tpu_custom_call.1} parent=1 // pred_fallthru
      _
    // Predicated region
    $region42: #{tpu_custom_call.1} parent=1 // pred_check
      _
    $region43: #{tpu_custom_call.1} parent=1 // pred_check_branch
      %87 = sbr.rel (0) target = $region45
    $region44: #{tpu_custom_call.1} parent=1 // pred_region
      %89 = dma.done [#allocation9], 512
    $region45: #{tpu_custom_call.1} parent=1 // pred_fallthru
      _
    // Predicated region
    $region46: #{tpu_custom_call.1} parent=1 // pred_check
      _
    $region47: #{tpu_custom_call.1} parent=1 // pred_check_branch
      %91 = sbr.rel (0) target = $region49
    $region48: #{tpu_custom_call.1} parent=1 // pred_region
      %93 = dma.done [#allocation9], 512
    $region49: #{tpu_custom_call.1} parent=1 // pred_fallthru
      _
    // Predicated region
    $region50: #{tpu_custom_call.1} parent=1 // pred_check
      _
    $region51: #{tpu_custom_call.1} parent=1 // pred_check_branch
      %95 = sbr.rel (0) target = $region53
    $region52: #{tpu_custom_call.1} parent=1 // pred_region
      %97 = dma.done [#allocation12], 512
    $region53: #{tpu_custom_call.1} parent=1 // pred_fallthru
      _
    %v98 = vld [vmem:[%s1] sm:$0xff]
    %v99 = vld [vmem:[%s1 + $0x8] sm:$0xff]
    %v100 = vld [vmem:[%s1 + $0x10] sm:$0xff]
    %v101 = vld [vmem:[%s1 + $0x18] sm:$0xff]
    %v102 = vld [vmem:[#allocation5] sm:$0x3]
    %vm103 = vcmask 261120
    %v105 = vsel %vm103, 0.0, 0
    %107 = vmatpush.msra.mxu0 0.0
    %108 = vmatpush.msra.mxu0 0.0
    %109 = vmatpush.msra.mxu0 0.0
    %110 = vmatpush.msra.mxu0 0.0
    %111 = vmatpush.msra.mxu0 0.0
    %112 = vmatpush.msra.mxu0 0.0
    %113 = vmatpush.msra.mxu0 0.0
    %114 = vmatpush.msra.mxu0 0.0
    %115 = vmatpush.msra.mxu0 0.0
    %116 = vmatpush.msra.mxu0 0.0
    %117 = vmatpush.msra.mxu0 0.0
    %118 = vmatpush.msra.mxu0 0.0
    %119 = vmatpush.msra.mxu0 %v101
    %120 = vmatpush.msra.mxu0 %v100
    %121 = vmatpush.msra.mxu0 %v99
    %122 = vmatpush.msra.mxu0 %v98
    %123 = vmatmul.f32.gmra.mxu0 %v105
    %v124 = vpop.f32.mrf.mxu0
    %v125 = vadd.f32 0.0, %v124
    %126 = vdwg.mxu0
    %v127 = vadd.f32 %v102, %v125
    %v128 = vxor.u32 %v127, 2147483648
    %v129 = vmul.f32 %v128, 1.442695
    %v130 = vpow.pop %v129
    %v131 = vadd.f32 %v130, 1.0
    %v132 = vrcp.pop %v131
    %v133 = vmul.f32 %v131, %v132
    %v134 = vsub.f32 1.0, %v133
    %v135 = vmul.f32 %v132, %v134
    %v136 = vadd.f32 %v132, %v135
    %vm137 = vweird.f32 %v131
    %vm138 = vweird.f32 %v132
    %vm139 = vmor %vm137, %vm138
    %v140 = vsel %vm139, %v132, %v136
    %v141 = vand.u32 2147483647, %v131
    %vm142 = vcmp.eq.f32.partialorder %v141, 8.507059e+37
    %v143 = vand.u32 %v131, 2147483648
    %v144 = vor.u32 1.1754944e-38, %v143
    %v145 = vsel %vm142, %v144, %v140
    %v146 = vmul.f32 1.0, %v145
    %v147 = vtanh.pop %v127
    %v148 = vmul.f32 %v146, 0.0
    %150 = vrot.lane.b32.xlu0 %v147, 64
    %v151 = vpop.permute.xlu0 %150
    %v153 = vmul.f32 %v146, %v151
    %155 = vrot.lane.b32.xlu0 %v153, 32
    %v156 = vpop.permute.xlu0 %155
    %v158 = vadd.f32 %v148, %v156
    %v159 = vtanh.pop %v158
    %161 = vrot.lane.b32.xlu0 %v159, 64
    %v162 = vpop.permute.xlu0 %161
    %v164 = vmul.f32 %v146, %v162
    %166 = vrot.lane.b32.xlu0 %v164, 32
    %v167 = vpop.permute.xlu0 %166
    %vm169 = vcmask 254976
    %170 = vst.msk [vmem:[#allocation3] sm:$0x3] %vm169, %v167
    %s171 = scalar_lea.vmem [#allocation5], 2
    %v172 = vld [vmem:[%s171] sm:$0x3]
    %v173 = vsel %vm103, %v167, 0
    %175 = vmatpush.msra.mxu0 0.0
    %176 = vmatpush.msra.mxu0 0.0
    %177 = vmatpush.msra.mxu0 0.0
    %178 = vmatpush.msra.mxu0 0.0
    %179 = vmatpush.msra.mxu0 0.0
    %180 = vmatpush.msra.mxu0 0.0
    %181 = vmatpush.msra.mxu0 0.0
    %182 = vmatpush.msra.mxu0 0.0
    %183 = vmatpush.msra.mxu0 0.0
    %184 = vmatpush.msra.mxu0 0.0
    %185 = vmatpush.msra.mxu0 0.0
    %186 = vmatpush.msra.mxu0 0.0
    %187 = vmatpush.msra.mxu0 %v101
    %188 = vmatpush.msra.mxu0 %v100
    %189 = vmatpush.msra.mxu0 %v99
    %190 = vmatpush.msra.mxu0 %v98
    %191 = vmatmul.f32.gmra.mxu0 %v173
    %v192 = vpop.f32.mrf.mxu0
    %v193 = vadd.f32 0.0, %v192
    %194 = vdwg.mxu0
    %v195 = vadd.f32 %v172, %v193
    %v196 = vxor.u32 %v195, 2147483648
    %v197 = vmul.f32 %v196, 1.442695
    %v198 = vpow.pop %v197
    %v199 = vadd.f32 %v198, 1.0
    %v200 = vrcp.pop %v199
    %v201 = vmul.f32 %v199, %v200
    %v202 = vsub.f32 1.0, %v201
    %v203 = vmul.f32 %v200, %v202
    %v204 = vadd.f32 %v200, %v203
    %vm205 = vweird.f32 %v199
    %vm206 = vweird.f32 %v200
    %vm207 = vmor %vm205, %vm206
    %v208 = vsel %vm207, %v200, %v204
    %v209 = vand.u32 2147483647, %v199
    %vm210 = vcmp.eq.f32.partialorder %v209, 8.507059e+37
    %v211 = vand.u32 %v199, 2147483648
    %v212 = vor.u32 1.1754944e-38, %v211
    %v213 = vsel %vm210, %v212, %v208
    %v214 = vmul.f32 1.0, %v213
    %v215 = vtanh.pop %v195
    %v216 = vmul.f32 %v214, %v158
    %218 = vrot.lane.b32.xlu0 %v215, 64
    %v219 = vpop.permute.xlu0 %218
    %v221 = vmul.f32 %v214, %v219
    %223 = vrot.lane.b32.xlu0 %v221, 32
    %v224 = vpop.permute.xlu0 %223
    %v226 = vadd.f32 %v216, %v224
    %v227 = vtanh.pop %v226
    %229 = vrot.lane.b32.xlu0 %v227, 64
    %v230 = vpop.permute.xlu0 %229
    %v232 = vmul.f32 %v214, %v230
    %234 = vrot.lane.b32.xlu0 %v232, 32
    %v235 = vpop.permute.xlu0 %234
    %237 = vst.msk [vmem:[#allocation3 + $0x2] sm:$0x3] %vm169, %v235
    %s238 = scalar_lea.vmem [#allocation5], 4
    %v239 = vld [vmem:[%s238] sm:$0x3]
    %v240 = vsel %vm103, %v235, 0
    %242 = vmatpush.msra.mxu0 0.0
    %243 = vmatpush.msra.mxu0 0.0
    %244 = vmatpush.msra.mxu0 0.0
    %245 = vmatpush.msra.mxu0 0.0
    %246 = vmatpush.msra.mxu0 0.0
    %247 = vmatpush.msra.mxu0 0.0
    %248 = vmatpush.msra.mxu0 0.0
    %249 = vmatpush.msra.mxu0 0.0
    %250 = vmatpush.msra.mxu0 0.0
    %251 = vmatpush.msra.mxu0 0.0
    %252 = vmatpush.msra.mxu0 0.0
    %253 = vmatpush.msra.mxu0 0.0
    %254 = vmatpush.msra.mxu0 %v101
    %255 = vmatpush.msra.mxu0 %v100
    %256 = vmatpush.msra.mxu0 %v99
    %257 = vmatpush.msra.mxu0 %v98
    %258 = vmatmul.f32.gmra.mxu0 %v240
    %v259 = vpop.f32.mrf.mxu0
    %v260 = vadd.f32 0.0, %v259
    %261 = vdwg.mxu0
    %v262 = vadd.f32 %v239, %v260
    %v263 = vxor.u32 %v262, 2147483648
    %v264 = vmul.f32 %v263, 1.442695
    %v265 = vpow.pop %v264
    %v266 = vadd.f32 %v265, 1.0
    %v267 = vrcp.pop %v266
    %v268 = vmul.f32 %v266, %v267
    %v269 = vsub.f32 1.0, %v268
    %v270 = vmul.f32 %v267, %v269
    %v271 = vadd.f32 %v267, %v270
    %vm272 = vweird.f32 %v266
    %vm273 = vweird.f32 %v267
    %vm274 = vmor %vm272, %vm273
    %v275 = vsel %vm274, %v267, %v271
    %v276 = vand.u32 2147483647, %v266
    %vm277 = vcmp.eq.f32.partialorder %v276, 8.507059e+37
    %v278 = vand.u32 %v266, 2147483648
    %v279 = vor.u32 1.1754944e-38, %v278
    %v280 = vsel %vm277, %v279, %v275
    %v281 = vmul.f32 1.0, %v280
    %v282 = vtanh.pop %v262
    %v283 = vmul.f32 %v281, %v226
    %285 = vrot.lane.b32.xlu0 %v282, 64
    %v286 = vpop.permute.xlu0 %285
    %v288 = vmul.f32 %v281, %v286
    %290 = vrot.lane.b32.xlu0 %v288, 32
    %v291 = vpop.permute.xlu0 %290
    %v293 = vadd.f32 %v283, %v291
    %v294 = vtanh.pop %v293
    %296 = vrot.lane.b32.xlu0 %v294, 64
    %v297 = vpop.permute.xlu0 %296
    %v299 = vmul.f32 %v281, %v297
    %301 = vrot.lane.b32.xlu0 %v299, 32
    %v302 = vpop.permute.xlu0 %301
    %304 = vst.msk [vmem:[#allocation3 + $0x4] sm:$0x3] %vm169, %v302
    %s305 = scalar_lea.vmem [#allocation5], 6
    %v306 = vld [vmem:[%s305] sm:$0x3]
    %v307 = vsel %vm103, %v302, 0
    %309 = vmatpush.msra.mxu0 0.0
    %310 = vmatpush.msra.mxu0 0.0
    %311 = vmatpush.msra.mxu0 0.0
    %312 = vmatpush.msra.mxu0 0.0
    %313 = vmatpush.msra.mxu0 0.0
    %314 = vmatpush.msra.mxu0 0.0
    %315 = vmatpush.msra.mxu0 0.0
    %316 = vmatpush.msra.mxu0 0.0
    %317 = vmatpush.msra.mxu0 0.0
    %318 = vmatpush.msra.mxu0 0.0
    %319 = vmatpush.msra.mxu0 0.0
    %320 = vmatpush.msra.mxu0 0.0
    %321 = vmatpush.msra.mxu0 %v101
    %322 = vmatpush.msra.mxu0 %v100
    %323 = vmatpush.msra.mxu0 %v99
    %324 = vmatpush.msra.mxu0 %v98
    %325 = vmatmul.f32.gmra.mxu0 %v307
    %v326 = vpop.f32.mrf.mxu0
    %v327 = vadd.f32 0.0, %v326
    %328 = vdwg.mxu0
    %v329 = vadd.f32 %v306, %v327
    %v330 = vxor.u32 %v329, 2147483648
    %v331 = vmul.f32 %v330, 1.442695
    %v332 = vpow.pop %v331
    %v333 = vadd.f32 %v332, 1.0
    %v334 = vrcp.pop %v333
    %v335 = vmul.f32 %v333, %v334
    %v336 = vsub.f32 1.0, %v335
    %v337 = vmul.f32 %v334, %v336
    %v338 = vadd.f32 %v334, %v337
    %vm339 = vweird.f32 %v333
    %vm340 = vweird.f32 %v334
    %vm341 = vmor %vm339, %vm340
    %v342 = vsel %vm341, %v334, %v338
    %v343 = vand.u32 2147483647, %v333
    %vm344 = vcmp.eq.f32.partialorder %v343, 8.507059e+37
    %v345 = vand.u32 %v333, 2147483648
    %v346 = vor.u32 1.1754944e-38, %v345
    %v347 = vsel %vm344, %v346, %v342
    %v348 = vmul.f32 1.0, %v347
    %v349 = vtanh.pop %v329
    %v350 = vmul.f32 %v348, %v293
    %352 = vrot.lane.b32.xlu0 %v349, 64
    %v353 = vpop.permute.xlu0 %352
    %v355 = vmul.f32 %v348, %v353
    %357 = vrot.lane.b32.xlu0 %v355, 32
    %v358 = vpop.permute.xlu0 %357
    %v360 = vadd.f32 %v350, %v358
    %v361 = vtanh.pop %v360
    %363 = vrot.lane.b32.xlu0 %v361, 64
    %v364 = vpop.permute.xlu0 %363
    %v366 = vmul.f32 %v348, %v364
    %368 = vrot.lane.b32.xlu0 %v366, 32
    %v369 = vpop.permute.xlu0 %368
    %371 = vst.msk [vmem:[#allocation3 + $0x6] sm:$0x3] %vm169, %v369
    %s372 = scalar_lea.vmem [#allocation5], 8
    %v373 = vld [vmem:[%s372] sm:$0x3]
    %v374 = vsel %vm103, %v369, 0
    %376 = vmatpush.msra.mxu0 0.0
    %377 = vmatpush.msra.mxu0 0.0
    %378 = vmatpush.msra.mxu0 0.0
    %379 = vmatpush.msra.mxu0 0.0
    %380 = vmatpush.msra.mxu0 0.0
    %381 = vmatpush.msra.mxu0 0.0
    %382 = vmatpush.msra.mxu0 0.0
    %383 = vmatpush.msra.mxu0 0.0
    %384 = vmatpush.msra.mxu0 0.0
    %385 = vmatpush.msra.mxu0 0.0
    %386 = vmatpush.msra.mxu0 0.0
    %387 = vmatpush.msra.mxu0 0.0
    %388 = vmatpush.msra.mxu0 %v101
    %389 = vmatpush.msra.mxu0 %v100
    %390 = vmatpush.msra.mxu0 %v99
    %391 = vmatpush.msra.mxu0 %v98
    %392 = vmatmul.f32.gmra.mxu0 %v374
    %v393 = vpop.f32.mrf.mxu0
    %v394 = vadd.f32 0.0, %v393
    %395 = vdwg.mxu0
    %v396 = vadd.f32 %v373, %v394
    %v397 = vxor.u32 %v396, 2147483648
    %v398 = vmul.f32 %v397, 1.442695
    %v399 = vpow.pop %v398
    %v400 = vadd.f32 %v399, 1.0
    %v401 = vrcp.pop %v400
    %v402 = vmul.f32 %v400, %v401
    %v403 = vsub.f32 1.0, %v402
    %v404 = vmul.f32 %v401, %v403
    %v405 = vadd.f32 %v401, %v404
    %vm406 = vweird.f32 %v400
    %vm407 = vweird.f32 %v401
    %vm408 = vmor %vm406, %vm407
    %v409 = vsel %vm408, %v401, %v405
    %v410 = vand.u32 2147483647, %v400
    %vm411 = vcmp.eq.f32.partialorder %v410, 8.507059e+37
    %v412 = vand.u32 %v400, 2147483648
    %v413 = vor.u32 1.1754944e-38, %v412
    %v414 = vsel %vm411, %v413, %v409
    %v415 = vmul.f32 1.0, %v414
    %v416 = vtanh.pop %v396
    %v417 = vmul.f32 %v415, %v360
    %419 = vrot.lane.b32.xlu0 %v416, 64
    %v420 = vpop.permute.xlu0 %419
    %v422 = vmul.f32 %v415, %v420
    %424 = vrot.lane.b32.xlu0 %v422, 32
    %v425 = vpop.permute.xlu0 %424
    %v427 = vadd.f32 %v417, %v425
    %v428 = vtanh.pop %v427
    %430 = vrot.lane.b32.xlu0 %v428, 64
    %v431 = vpop.permute.xlu0 %430
    %v433 = vmul.f32 %v415, %v431
    %435 = vrot.lane.b32.xlu0 %v433, 32
    %v436 = vpop.permute.xlu0 %435
    %438 = vst.msk [vmem:[#allocation3 + $0x8] sm:$0x3] %vm169, %v436
    %s439 = scalar_lea.vmem [#allocation5], 10
    %v440 = vld [vmem:[%s439] sm:$0x3]
    %v441 = vsel %vm103, %v436, 0
    %443 = vmatpush.msra.mxu0 0.0
    %444 = vmatpush.msra.mxu0 0.0
    %445 = vmatpush.msra.mxu0 0.0
    %446 = vmatpush.msra.mxu0 0.0
    %447 = vmatpush.msra.mxu0 0.0
    %448 = vmatpush.msra.mxu0 0.0
    %449 = vmatpush.msra.mxu0 0.0
    %450 = vmatpush.msra.mxu0 0.0
    %451 = vmatpush.msra.mxu0 0.0
    %452 = vmatpush.msra.mxu0 0.0
    %453 = vmatpush.msra.mxu0 0.0
    %454 = vmatpush.msra.mxu0 0.0
    %455 = vmatpush.msra.mxu0 %v101
    %456 = vmatpush.msra.mxu0 %v100
    %457 = vmatpush.msra.mxu0 %v99
    %458 = vmatpush.msra.mxu0 %v98
    %459 = vmatmul.f32.gmra.mxu0 %v441
    %v460 = vpop.f32.mrf.mxu0
    %v461 = vadd.f32 0.0, %v460
    %462 = vdwg.mxu0
    %v463 = vadd.f32 %v440, %v461
    %v464 = vxor.u32 %v463, 2147483648
    %v465 = vmul.f32 %v464, 1.442695
    %v466 = vpow.pop %v465
    %v467 = vadd.f32 %v466, 1.0
    %v468 = vrcp.pop %v467
    %v469 = vmul.f32 %v467, %v468
    %v470 = vsub.f32 1.0, %v469
    %v471 = vmul.f32 %v468, %v470
    %v472 = vadd.f32 %v468, %v471
    %vm473 = vweird.f32 %v467
    %vm474 = vweird.f32 %v468
    %vm475 = vmor %vm473, %vm474
    %v476 = vsel %vm475, %v468, %v472
    %v477 = vand.u32 2147483647, %v467
    %vm478 = vcmp.eq.f32.partialorder %v477, 8.507059e+37
    %v479 = vand.u32 %v467, 2147483648
    %v480 = vor.u32 1.1754944e-38, %v479
    %v481 = vsel %vm478, %v480, %v476
    %v482 = vmul.f32 1.0, %v481
    %v483 = vtanh.pop %v463
    %v484 = vmul.f32 %v482, %v427
    %486 = vrot.lane.b32.xlu0 %v483, 64
    %v487 = vpop.permute.xlu0 %486
    %v489 = vmul.f32 %v482, %v487
    %491 = vrot.lane.b32.xlu0 %v489, 32
    %v492 = vpop.permute.xlu0 %491
    %v494 = vadd.f32 %v484, %v492
    %v495 = vtanh.pop %v494
    %497 = vrot.lane.b32.xlu0 %v495, 64
    %v498 = vpop.permute.xlu0 %497
    %v500 = vmul.f32 %v482, %v498
    %502 = vrot.lane.b32.xlu0 %v500, 32
    %v503 = vpop.permute.xlu0 %502
    %505 = vst.msk [vmem:[#allocation3 + $0xa] sm:$0x3] %vm169, %v503
    %s506 = scalar_lea.vmem [#allocation5], 12
    %v507 = vld [vmem:[%s506] sm:$0x3]
    %v508 = vsel %vm103, %v503, 0
    %510 = vmatpush.msra.mxu0 0.0
    %511 = vmatpush.msra.mxu0 0.0
    %512 = vmatpush.msra.mxu0 0.0
    %513 = vmatpush.msra.mxu0 0.0
    %514 = vmatpush.msra.mxu0 0.0
    %515 = vmatpush.msra.mxu0 0.0
    %516 = vmatpush.msra.mxu0 0.0
    %517 = vmatpush.msra.mxu0 0.0
    %518 = vmatpush.msra.mxu0 0.0
    %519 = vmatpush.msra.mxu0 0.0
    %520 = vmatpush.msra.mxu0 0.0
    %521 = vmatpush.msra.mxu0 0.0
    %522 = vmatpush.msra.mxu0 %v101
    %523 = vmatpush.msra.mxu0 %v100
    %524 = vmatpush.msra.mxu0 %v99
    %525 = vmatpush.msra.mxu0 %v98
    %526 = vmatmul.f32.gmra.mxu0 %v508
    %v527 = vpop.f32.mrf.mxu0
    %v528 = vadd.f32 0.0, %v527
    %529 = vdwg.mxu0
    %v530 = vadd.f32 %v507, %v528
    %v531 = vxor.u32 %v530, 2147483648
    %v532 = vmul.f32 %v531, 1.442695
    %v533 = vpow.pop %v532
    %v534 = vadd.f32 %v533, 1.0
    %v535 = vrcp.pop %v534
    %v536 = vmul.f32 %v534, %v535
    %v537 = vsub.f32 1.0, %v536
    %v538 = vmul.f32 %v535, %v537
    %v539 = vadd.f32 %v535, %v538
    %vm540 = vweird.f32 %v534
    %vm541 = vweird.f32 %v535
    %vm542 = vmor %vm540, %vm541
    %v543 = vsel %vm542, %v535, %v539
    %v544 = vand.u32 2147483647, %v534
    %vm545 = vcmp.eq.f32.partialorder %v544, 8.507059e+37
    %v546 = vand.u32 %v534, 2147483648
    %v547 = vor.u32 1.1754944e-38, %v546
    %v548 = vsel %vm545, %v547, %v543
    %v549 = vmul.f32 1.0, %v548
    %v550 = vtanh.pop %v530
    %v551 = vmul.f32 %v549, %v494
    %553 = vrot.lane.b32.xlu0 %v550, 64
    %v554 = vpop.permute.xlu0 %553
    %v556 = vmul.f32 %v549, %v554
    %558 = vrot.lane.b32.xlu0 %v556, 32
    %v559 = vpop.permute.xlu0 %558
    %v561 = vadd.f32 %v551, %v559
    %v562 = vtanh.pop %v561
    %564 = vrot.lane.b32.xlu0 %v562, 64
    %v565 = vpop.permute.xlu0 %564
    %v567 = vmul.f32 %v549, %v565
    %569 = vrot.lane.b32.xlu0 %v567, 32
    %v570 = vpop.permute.xlu0 %569
    %572 = vst.msk [vmem:[#allocation3 + $0xc] sm:$0x3] %vm169, %v570
    %s573 = scalar_lea.vmem [#allocation5], 14
    %v574 = vld [vmem:[%s573] sm:$0x3]
    %v575 = vsel %vm103, %v570, 0
    %577 = vmatpush.msra.mxu0 0.0
    %578 = vmatpush.msra.mxu0 0.0
    %579 = vmatpush.msra.mxu0 0.0
    %580 = vmatpush.msra.mxu0 0.0
    %581 = vmatpush.msra.mxu0 0.0
    %582 = vmatpush.msra.mxu0 0.0
    %583 = vmatpush.msra.mxu0 0.0
    %584 = vmatpush.msra.mxu0 0.0
    %585 = vmatpush.msra.mxu0 0.0
    %586 = vmatpush.msra.mxu0 0.0
    %587 = vmatpush.msra.mxu0 0.0
    %588 = vmatpush.msra.mxu0 0.0
    %589 = vmatpush.msra.mxu0 %v101
    %590 = vmatpush.msra.mxu0 %v100
    %591 = vmatpush.msra.mxu0 %v99
    %592 = vmatpush.msra.mxu0 %v98
    %593 = vmatmul.f32.gmra.mxu0 %v575
    %v594 = vpop.f32.mrf.mxu0
    %v595 = vadd.f32 0.0, %v594
    %596 = vdwg.mxu0
    %v597 = vadd.f32 %v574, %v595
    %v598 = vxor.u32 %v597, 2147483648
    %v599 = vmul.f32 %v598, 1.442695
    %v600 = vpow.pop %v599
    %v601 = vadd.f32 %v600, 1.0
    %v602 = vrcp.pop %v601
    %v603 = vmul.f32 %v601, %v602
    %v604 = vsub.f32 1.0, %v603
    %v605 = vmul.f32 %v602, %v604
    %v606 = vadd.f32 %v602, %v605
    %vm607 = vweird.f32 %v601
    %vm608 = vweird.f32 %v602
    %vm609 = vmor %vm607, %vm608
    %v610 = vsel %vm609, %v602, %v606
    %v611 = vand.u32 2147483647, %v601
    %vm612 = vcmp.eq.f32.partialorder %v611, 8.507059e+37
    %v613 = vand.u32 %v601, 2147483648
    %v614 = vor.u32 1.1754944e-38, %v613
    %v615 = vsel %vm612, %v614, %v610
    %v616 = vmul.f32 1.0, %v615
    %v617 = vtanh.pop %v597
    %v618 = vmul.f32 %v616, %v561
    %620 = vrot.lane.b32.xlu0 %v617, 64
    %v621 = vpop.permute.xlu0 %620
    %v623 = vmul.f32 %v616, %v621
    %625 = vrot.lane.b32.xlu0 %v623, 32
    %v626 = vpop.permute.xlu0 %625
    %v628 = vadd.f32 %v618, %v626
    %v629 = vtanh.pop %v628
    %631 = vrot.lane.b32.xlu0 %v629, 64
    %v632 = vpop.permute.xlu0 %631
    %v634 = vmul.f32 %v616, %v632
    %636 = vrot.lane.b32.xlu0 %v634, 32
    %v637 = vpop.permute.xlu0 %636
    %639 = vst.msk [vmem:[#allocation3 + $0xe] sm:$0x3] %vm169, %v637
    %v640 = vld [vmem:[#allocation8] sm:$0xff]
    %v641 = vld [vmem:[#allocation8 + $0x8] sm:$0xff]
    %v642 = vld [vmem:[#allocation8 + $0x10] sm:$0xff]
    %v643 = vld [vmem:[#allocation8 + $0x18] sm:$0xff]
    %v644 = vld [vmem:[%s4] sm:$0x1]
    %v645 = vld [vmem:[#allocation3] sm:$0x3]
    %v647 = vperm.slane %v644, 0
    %v650 = vsel %vm103, %v645, 0
    %652 = vmatpush.msra.mxu0 0.0
    %653 = vmatpush.msra.mxu0 0.0
    %654 = vmatpush.msra.mxu0 0.0
    %655 = vmatpush.msra.mxu0 0.0
    %656 = vmatpush.msra.mxu0 0.0
    %657 = vmatpush.msra.mxu0 0.0
    %658 = vmatpush.msra.mxu0 0.0
    %659 = vmatpush.msra.mxu0 0.0
    %660 = vmatpush.msra.mxu0 0.0
    %661 = vmatpush.msra.mxu0 0.0
    %662 = vmatpush.msra.mxu0 0.0
    %663 = vmatpush.msra.mxu0 0.0
    %664 = vmatpush.msra.mxu0 %v643
    %665 = vmatpush.msra.mxu0 %v642
    %666 = vmatpush.msra.mxu0 %v641
    %667 = vmatpush.msra.mxu0 %v640
    %668 = vmatmul.f32.gmra.mxu0 %v650
    %v669 = vpop.f32.mrf.mxu0
    %v670 = vadd.f32 %v647, %v669
    %671 = vdwg.mxu0
    %672 = vst [vmem:[#allocation2] sm:$0x3] %v670
    %v673 = vld [vmem:[#allocation3 + $0x2] sm:$0x3]
    %v675 = vsel %vm103, %v673, 0
    %677 = vmatpush.msra.mxu0 0.0
    %678 = vmatpush.msra.mxu0 0.0
    %679 = vmatpush.msra.mxu0 0.0
    %680 = vmatpush.msra.mxu0 0.0
    %681 = vmatpush.msra.mxu0 0.0
    %682 = vmatpush.msra.mxu0 0.0
    %683 = vmatpush.msra.mxu0 0.0
    %684 = vmatpush.msra.mxu0 0.0
    %685 = vmatpush.msra.mxu0 0.0
    %686 = vmatpush.msra.mxu0 0.0
    %687 = vmatpush.msra.mxu0 0.0
    %688 = vmatpush.msra.mxu0 0.0
    %689 = vmatpush.msra.mxu0 %v643
    %690 = vmatpush.msra.mxu0 %v642
    %691 = vmatpush.msra.mxu0 %v641
    %692 = vmatpush.msra.mxu0 %v640
    %693 = vmatmul.f32.gmra.mxu0 %v675
    %v694 = vpop.f32.mrf.mxu0
    %v695 = vadd.f32 %v647, %v694
    %696 = vdwg.mxu0
    %697 = vst [vmem:[#allocation2 + $0x2] sm:$0x3] %v695
    %v698 = vld [vmem:[#allocation3 + $0x4] sm:$0x3]
    %v700 = vsel %vm103, %v698, 0
    %702 = vmatpush.msra.mxu0 0.0
    %703 = vmatpush.msra.mxu0 0.0
    %704 = vmatpush.msra.mxu0 0.0
    %705 = vmatpush.msra.mxu0 0.0
    %706 = vmatpush.msra.mxu0 0.0
    %707 = vmatpush.msra.mxu0 0.0
    %708 = vmatpush.msra.mxu0 0.0
    %709 = vmatpush.msra.mxu0 0.0
    %710 = vmatpush.msra.mxu0 0.0
    %711 = vmatpush.msra.mxu0 0.0
    %712 = vmatpush.msra.mxu0 0.0
    %713 = vmatpush.msra.mxu0 0.0
    %714 = vmatpush.msra.mxu0 %v643
    %715 = vmatpush.msra.mxu0 %v642
    %716 = vmatpush.msra.mxu0 %v641
    %717 = vmatpush.msra.mxu0 %v640
    %718 = vmatmul.f32.gmra.mxu0 %v700
    %v719 = vpop.f32.mrf.mxu0
    %v720 = vadd.f32 %v647, %v719
    %721 = vdwg.mxu0
    %722 = vst [vmem:[#allocation2 + $0x4] sm:$0x3] %v720
    %v723 = vld [vmem:[#allocation3 + $0x6] sm:$0x3]
    %v725 = vsel %vm103, %v723, 0
    %727 = vmatpush.msra.mxu0 0.0
    %728 = vmatpush.msra.mxu0 0.0
    %729 = vmatpush.msra.mxu0 0.0
    %730 = vmatpush.msra.mxu0 0.0
    %731 = vmatpush.msra.mxu0 0.0
    %732 = vmatpush.msra.mxu0 0.0
    %733 = vmatpush.msra.mxu0 0.0
    %734 = vmatpush.msra.mxu0 0.0
    %735 = vmatpush.msra.mxu0 0.0
    %736 = vmatpush.msra.mxu0 0.0
    %737 = vmatpush.msra.mxu0 0.0
    %738 = vmatpush.msra.mxu0 0.0
    %739 = vmatpush.msra.mxu0 %v643
    %740 = vmatpush.msra.mxu0 %v642
    %741 = vmatpush.msra.mxu0 %v641
    %742 = vmatpush.msra.mxu0 %v640
    %743 = vmatmul.f32.gmra.mxu0 %v725
    %v744 = vpop.f32.mrf.mxu0
    %v745 = vadd.f32 %v647, %v744
    %746 = vdwg.mxu0
    %747 = vst [vmem:[#allocation2 + $0x6] sm:$0x3] %v745
    %v748 = vld [vmem:[#allocation3 + $0x8] sm:$0x3]
    %v750 = vsel %vm103, %v748, 0
    %752 = vmatpush.msra.mxu0 0.0
    %753 = vmatpush.msra.mxu0 0.0
    %754 = vmatpush.msra.mxu0 0.0
    %755 = vmatpush.msra.mxu0 0.0
    %756 = vmatpush.msra.mxu0 0.0
    %757 = vmatpush.msra.mxu0 0.0
    %758 = vmatpush.msra.mxu0 0.0
    %759 = vmatpush.msra.mxu0 0.0
    %760 = vmatpush.msra.mxu0 0.0
    %761 = vmatpush.msra.mxu0 0.0
    %762 = vmatpush.msra.mxu0 0.0
    %763 = vmatpush.msra.mxu0 0.0
    %764 = vmatpush.msra.mxu0 %v643
    %765 = vmatpush.msra.mxu0 %v642
    %766 = vmatpush.msra.mxu0 %v641
    %767 = vmatpush.msra.mxu0 %v640
    %768 = vmatmul.f32.gmra.mxu0 %v750
    %v769 = vpop.f32.mrf.mxu0
    %v770 = vadd.f32 %v647, %v769
    %771 = vdwg.mxu0
    %772 = vst [vmem:[#allocation2 + $0x8] sm:$0x3] %v770
    %v773 = vld [vmem:[#allocation3 + $0xa] sm:$0x3]
    %v775 = vsel %vm103, %v773, 0
    %777 = vmatpush.msra.mxu0 0.0
    %778 = vmatpush.msra.mxu0 0.0
    %779 = vmatpush.msra.mxu0 0.0
    %780 = vmatpush.msra.mxu0 0.0
    %781 = vmatpush.msra.mxu0 0.0
    %782 = vmatpush.msra.mxu0 0.0
    %783 = vmatpush.msra.mxu0 0.0
    %784 = vmatpush.msra.mxu0 0.0
    %785 = vmatpush.msra.mxu0 0.0
    %786 = vmatpush.msra.mxu0 0.0
    %787 = vmatpush.msra.mxu0 0.0
    %788 = vmatpush.msra.mxu0 0.0
    %789 = vmatpush.msra.mxu0 %v643
    %790 = vmatpush.msra.mxu0 %v642
    %791 = vmatpush.msra.mxu0 %v641
    %792 = vmatpush.msra.mxu0 %v640
    %793 = vmatmul.f32.gmra.mxu0 %v775
    %v794 = vpop.f32.mrf.mxu0
    %v795 = vadd.f32 %v647, %v794
    %796 = vdwg.mxu0
    %797 = vst [vmem:[#allocation2 + $0xa] sm:$0x3] %v795
    %v798 = vld [vmem:[#allocation3 + $0xc] sm:$0x3]
    %v800 = vsel %vm103, %v798, 0
    %802 = vmatpush.msra.mxu0 0.0
    %803 = vmatpush.msra.mxu0 0.0
    %804 = vmatpush.msra.mxu0 0.0
    %805 = vmatpush.msra.mxu0 0.0
    %806 = vmatpush.msra.mxu0 0.0
    %807 = vmatpush.msra.mxu0 0.0
    %808 = vmatpush.msra.mxu0 0.0
    %809 = vmatpush.msra.mxu0 0.0
    %810 = vmatpush.msra.mxu0 0.0
    %811 = vmatpush.msra.mxu0 0.0
    %812 = vmatpush.msra.mxu0 0.0
    %813 = vmatpush.msra.mxu0 0.0
    %814 = vmatpush.msra.mxu0 %v643
    %815 = vmatpush.msra.mxu0 %v642
    %816 = vmatpush.msra.mxu0 %v641
    %817 = vmatpush.msra.mxu0 %v640
    %818 = vmatmul.f32.gmra.mxu0 %v800
    %v819 = vpop.f32.mrf.mxu0
    %v820 = vadd.f32 %v647, %v819
    %821 = vdwg.mxu0
    %822 = vst [vmem:[#allocation2 + $0xc] sm:$0x3] %v820
    %v823 = vld [vmem:[#allocation3 + $0xe] sm:$0x3]
    %v825 = vsel %vm103, %v823, 0
    %827 = vmatpush.msra.mxu0 0.0
    %828 = vmatpush.msra.mxu0 0.0
    %829 = vmatpush.msra.mxu0 0.0
    %830 = vmatpush.msra.mxu0 0.0
    %831 = vmatpush.msra.mxu0 0.0
    %832 = vmatpush.msra.mxu0 0.0
    %833 = vmatpush.msra.mxu0 0.0
    %834 = vmatpush.msra.mxu0 0.0
    %835 = vmatpush.msra.mxu0 0.0
    %836 = vmatpush.msra.mxu0 0.0
    %837 = vmatpush.msra.mxu0 0.0
    %838 = vmatpush.msra.mxu0 0.0
    %839 = vmatpush.msra.mxu0 %v643
    %840 = vmatpush.msra.mxu0 %v642
    %841 = vmatpush.msra.mxu0 %v641
    %842 = vmatpush.msra.mxu0 %v640
    %843 = vmatmul.f32.gmra.mxu0 %v825
    %v844 = vpop.f32.mrf.mxu0
    %v845 = vadd.f32 %v647, %v844
    %846 = vdwg.mxu0
    %847 = vst [vmem:[#allocation2 + $0xe] sm:$0x3] %v845
    %v848 = vld [vmem:[#allocation10] sm:$0xff]
    %v849 = vld [vmem:[#allocation10 + $0x8] sm:$0xff]
    %v850 = vld [vmem:[#allocation10 + $0x10] sm:$0xff]
    %v851 = vld [vmem:[#allocation10 + $0x18] sm:$0xff]
    %v852 = vld [vmem:[#allocation2] sm:$0x3]
    %853 = vmatpush.msra.mxu0 0.0
    %854 = vmatpush.msra.mxu0 0.0
    %855 = vmatpush.msra.mxu0 0.0
    %856 = vmatpush.msra.mxu0 0.0
    %857 = vmatpush.msra.mxu0 0.0
    %858 = vmatpush.msra.mxu0 0.0
    %859 = vmatpush.msra.mxu0 0.0
    %860 = vmatpush.msra.mxu0 0.0
    %861 = vmatpush.msra.mxu0 0.0
    %862 = vmatpush.msra.mxu0 0.0
    %863 = vmatpush.msra.mxu0 0.0
    %864 = vmatpush.msra.mxu0 0.0
    %865 = vmatpush.msra.mxu0 %v851
    %866 = vmatpush.msra.mxu0 %v850
    %867 = vmatpush.msra.mxu0 %v849
    %868 = vmatpush.msra.mxu0 %v848
    %869 = vmatmul.f32.gmra.mxu0 %v105
    %v870 = vpop.f32.mrf.mxu0
    %v871 = vadd.f32 0.0, %v870
    %872 = vdwg.mxu0
    %v873 = vadd.f32 %v852, %v871
    %v874 = vxor.u32 %v873, 2147483648
    %v875 = vmul.f32 %v874, 1.442695
    %v876 = vpow.pop %v875
    %v877 = vadd.f32 %v876, 1.0
    %v878 = vrcp.pop %v877
    %v879 = vmul.f32 %v877, %v878
    %v880 = vsub.f32 1.0, %v879
    %v881 = vmul.f32 %v878, %v880
    %v882 = vadd.f32 %v878, %v881
    %vm883 = vweird.f32 %v877
    %vm884 = vweird.f32 %v878
    %vm885 = vmor %vm883, %vm884
    %v886 = vsel %vm885, %v878, %v882
    %v887 = vand.u32 2147483647, %v877
    %vm888 = vcmp.eq.f32.partialorder %v887, 8.507059e+37
    %v889 = vand.u32 %v877, 2147483648
    %v890 = vor.u32 1.1754944e-38, %v889
    %v891 = vsel %vm888, %v890, %v886
    %v892 = vmul.f32 1.0, %v891
    %v893 = vtanh.pop %v873
    %v894 = vmul.f32 %v892, 0.0
    %896 = vrot.lane.b32.xlu0 %v893, 64
    %v897 = vpop.permute.xlu0 %896
    %v899 = vmul.f32 %v892, %v897
    %901 = vrot.lane.b32.xlu0 %v899, 32
    %v902 = vpop.permute.xlu0 %901
    %v904 = vadd.f32 %v894, %v902
    %v905 = vtanh.pop %v904
    %907 = vrot.lane.b32.xlu0 %v905, 64
    %v908 = vpop.permute.xlu0 %907
    %v910 = vmul.f32 %v892, %v908
    %912 = vrot.lane.b32.xlu0 %v910, 32
    %v913 = vpop.permute.xlu0 %912
    %915 = vst.msk [vmem:[#allocation3] sm:$0x3] %vm169, %v913
    %v916 = vld [vmem:[#allocation2 + $0x2] sm:$0x3]
    %v917 = vsel %vm103, %v913, 0
    %919 = vmatpush.msra.mxu0 0.0
    %920 = vmatpush.msra.mxu0 0.0
    %921 = vmatpush.msra.mxu0 0.0
    %922 = vmatpush.msra.mxu0 0.0
    %923 = vmatpush.msra.mxu0 0.0
    %924 = vmatpush.msra.mxu0 0.0
    %925 = vmatpush.msra.mxu0 0.0
    %926 = vmatpush.msra.mxu0 0.0
    %927 = vmatpush.msra.mxu0 0.0
    %928 = vmatpush.msra.mxu0 0.0
    %929 = vmatpush.msra.mxu0 0.0
    %930 = vmatpush.msra.mxu0 0.0
    %931 = vmatpush.msra.mxu0 %v851
    %932 = vmatpush.msra.mxu0 %v850
    %933 = vmatpush.msra.mxu0 %v849
    %934 = vmatpush.msra.mxu0 %v848
    %935 = vmatmul.f32.gmra.mxu0 %v917
    %v936 = vpop.f32.mrf.mxu0
    %v937 = vadd.f32 0.0, %v936
    %938 = vdwg.mxu0
    %v939 = vadd.f32 %v916, %v937
    %v940 = vxor.u32 %v939, 2147483648
    %v941 = vmul.f32 %v940, 1.442695
    %v942 = vpow.pop %v941
    %v943 = vadd.f32 %v942, 1.0
    %v944 = vrcp.pop %v943
    %v945 = vmul.f32 %v943, %v944
    %v946 = vsub.f32 1.0, %v945
    %v947 = vmul.f32 %v944, %v946
    %v948 = vadd.f32 %v944, %v947
    %vm949 = vweird.f32 %v943
    %vm950 = vweird.f32 %v944
    %vm951 = vmor %vm949, %vm950
    %v952 = vsel %vm951, %v944, %v948
    %v953 = vand.u32 2147483647, %v943
    %vm954 = vcmp.eq.f32.partialorder %v953, 8.507059e+37
    %v955 = vand.u32 %v943, 2147483648
    %v956 = vor.u32 1.1754944e-38, %v955
    %v957 = vsel %vm954, %v956, %v952
    %v958 = vmul.f32 1.0, %v957
    %v959 = vtanh.pop %v939
    %v960 = vmul.f32 %v958, %v904
    %962 = vrot.lane.b32.xlu0 %v959, 64
    %v963 = vpop.permute.xlu0 %962
    %v965 = vmul.f32 %v958, %v963
    %967 = vrot.lane.b32.xlu0 %v965, 32
    %v968 = vpop.permute.xlu0 %967
    %v970 = vadd.f32 %v960, %v968
    %v971 = vtanh.pop %v970
    %973 = vrot.lane.b32.xlu0 %v971, 64
    %v974 = vpop.permute.xlu0 %973
    %v976 = vmul.f32 %v958, %v974
    %978 = vrot.lane.b32.xlu0 %v976, 32
    %v979 = vpop.permute.xlu0 %978
    %981 = vst.msk [vmem:[#allocation3 + $0x2] sm:$0x3] %vm169, %v979
    %v982 = vld [vmem:[#allocation2 + $0x4] sm:$0x3]
    %v983 = vsel %vm103, %v979, 0
    %985 = vmatpush.msra.mxu0 0.0
    %986 = vmatpush.msra.mxu0 0.0
    %987 = vmatpush.msra.mxu0 0.0
    %988 = vmatpush.msra.mxu0 0.0
    %989 = vmatpush.msra.mxu0 0.0
    %990 = vmatpush.msra.mxu0 0.0
    %991 = vmatpush.msra.mxu0 0.0
    %992 = vmatpush.msra.mxu0 0.0
    %993 = vmatpush.msra.mxu0 0.0
    %994 = vmatpush.msra.mxu0 0.0
    %995 = vmatpush.msra.mxu0 0.0
    %996 = vmatpush.msra.mxu0 0.0
    %997 = vmatpush.msra.mxu0 %v851
    %998 = vmatpush.msra.mxu0 %v850
    %999 = vmatpush.msra.mxu0 %v849
    %1000 = vmatpush.msra.mxu0 %v848
    %1001 = vmatmul.f32.gmra.mxu0 %v983
    %v1002 = vpop.f32.mrf.mxu0
    %v1003 = vadd.f32 0.0, %v1002
    %1004 = vdwg.mxu0
    %v1005 = vadd.f32 %v982, %v1003
    %v1006 = vxor.u32 %v1005, 2147483648
    %v1007 = vmul.f32 %v1006, 1.442695
    %v1008 = vpow.pop %v1007
    %v1009 = vadd.f32 %v1008, 1.0
    %v1010 = vrcp.pop %v1009
    %v1011 = vmul.f32 %v1009, %v1010
    %v1012 = vsub.f32 1.0, %v1011
    %v1013 = vmul.f32 %v1010, %v1012
    %v1014 = vadd.f32 %v1010, %v1013
    %vm1015 = vweird.f32 %v1009
    %vm1016 = vweird.f32 %v1010
    %vm1017 = vmor %vm1015, %vm1016
    %v1018 = vsel %vm1017, %v1010, %v1014
    %v1019 = vand.u32 2147483647, %v1009
    %vm1020 = vcmp.eq.f32.partialorder %v1019, 8.507059e+37
    %v1021 = vand.u32 %v1009, 2147483648
    %v1022 = vor.u32 1.1754944e-38, %v1021
    %v1023 = vsel %vm1020, %v1022, %v1018
    %v1024 = vmul.f32 1.0, %v1023
    %v1025 = vtanh.pop %v1005
    %v1026 = vmul.f32 %v1024, %v970
    %1028 = vrot.lane.b32.xlu0 %v1025, 64
    %v1029 = vpop.permute.xlu0 %1028
    %v1031 = vmul.f32 %v1024, %v1029
    %1033 = vrot.lane.b32.xlu0 %v1031, 32
    %v1034 = vpop.permute.xlu0 %1033
    %v1036 = vadd.f32 %v1026, %v1034
    %v1037 = vtanh.pop %v1036
    %1039 = vrot.lane.b32.xlu0 %v1037, 64
    %v1040 = vpop.permute.xlu0 %1039
    %v1042 = vmul.f32 %v1024, %v1040
    %1044 = vrot.lane.b32.xlu0 %v1042, 32
    %v1045 = vpop.permute.xlu0 %1044
    %1047 = vst.msk [vmem:[#allocation3 + $0x4] sm:$0x3] %vm169, %v1045
    %v1048 = vld [vmem:[#allocation2 + $0x6] sm:$0x3]
    %v1049 = vsel %vm103, %v1045, 0
    %1051 = vmatpush.msra.mxu0 0.0
    %1052 = vmatpush.msra.mxu0 0.0
    %1053 = vmatpush.msra.mxu0 0.0
    %1054 = vmatpush.msra.mxu0 0.0
    %1055 = vmatpush.msra.mxu0 0.0
    %1056 = vmatpush.msra.mxu0 0.0
    %1057 = vmatpush.msra.mxu0 0.0
    %1058 = vmatpush.msra.mxu0 0.0
    %1059 = vmatpush.msra.mxu0 0.0
    %1060 = vmatpush.msra.mxu0 0.0
    %1061 = vmatpush.msra.mxu0 0.0
    %1062 = vmatpush.msra.mxu0 0.0
    %1063 = vmatpush.msra.mxu0 %v851
    %1064 = vmatpush.msra.mxu0 %v850
    %1065 = vmatpush.msra.mxu0 %v849
    %1066 = vmatpush.msra.mxu0 %v848
    %1067 = vmatmul.f32.gmra.mxu0 %v1049
    %v1068 = vpop.f32.mrf.mxu0
    %v1069 = vadd.f32 0.0, %v1068
    %1070 = vdwg.mxu0
    %v1071 = vadd.f32 %v1048, %v1069
    %v1072 = vxor.u32 %v1071, 2147483648
    %v1073 = vmul.f32 %v1072, 1.442695
    %v1074 = vpow.pop %v1073
    %v1075 = vadd.f32 %v1074, 1.0
    %v1076 = vrcp.pop %v1075
    %v1077 = vmul.f32 %v1075, %v1076
    %v1078 = vsub.f32 1.0, %v1077
    %v1079 = vmul.f32 %v1076, %v1078
    %v1080 = vadd.f32 %v1076, %v1079
    %vm1081 = vweird.f32 %v1075
    %vm1082 = vweird.f32 %v1076
    %vm1083 = vmor %vm1081, %vm1082
    %v1084 = vsel %vm1083, %v1076, %v1080
    %v1085 = vand.u32 2147483647, %v1075
    %vm1086 = vcmp.eq.f32.partialorder %v1085, 8.507059e+37
    %v1087 = vand.u32 %v1075, 2147483648
    %v1088 = vor.u32 1.1754944e-38, %v1087
    %v1089 = vsel %vm1086, %v1088, %v1084
    %v1090 = vmul.f32 1.0, %v1089
    %v1091 = vtanh.pop %v1071
    %v1092 = vmul.f32 %v1090, %v1036
    %1094 = vrot.lane.b32.xlu0 %v1091, 64
    %v1095 = vpop.permute.xlu0 %1094
    %v1097 = vmul.f32 %v1090, %v1095
    %1099 = vrot.lane.b32.xlu0 %v1097, 32
    %v1100 = vpop.permute.xlu0 %1099
    %v1102 = vadd.f32 %v1092, %v1100
    %v1103 = vtanh.pop %v1102
    %1105 = vrot.lane.b32.xlu0 %v1103, 64
    %v1106 = vpop.permute.xlu0 %1105
    %v1108 = vmul.f32 %v1090, %v1106
    %1110 = vrot.lane.b32.xlu0 %v1108, 32
    %v1111 = vpop.permute.xlu0 %1110
    %1113 = vst.msk [vmem:[#allocation3 + $0x6] sm:$0x3] %vm169, %v1111
    %v1114 = vld [vmem:[#allocation2 + $0x8] sm:$0x3]
    %v1115 = vsel %vm103, %v1111, 0
    %1117 = vmatpush.msra.mxu0 0.0
    %1118 = vmatpush.msra.mxu0 0.0
    %1119 = vmatpush.msra.mxu0 0.0
    %1120 = vmatpush.msra.mxu0 0.0
    %1121 = vmatpush.msra.mxu0 0.0
    %1122 = vmatpush.msra.mxu0 0.0
    %1123 = vmatpush.msra.mxu0 0.0
    %1124 = vmatpush.msra.mxu0 0.0
    %1125 = vmatpush.msra.mxu0 0.0
    %1126 = vmatpush.msra.mxu0 0.0
    %1127 = vmatpush.msra.mxu0 0.0
    %1128 = vmatpush.msra.mxu0 0.0
    %1129 = vmatpush.msra.mxu0 %v851
    %1130 = vmatpush.msra.mxu0 %v850
    %1131 = vmatpush.msra.mxu0 %v849
    %1132 = vmatpush.msra.mxu0 %v848
    %1133 = vmatmul.f32.gmra.mxu0 %v1115
    %v1134 = vpop.f32.mrf.mxu0
    %v1135 = vadd.f32 0.0, %v1134
    %1136 = vdwg.mxu0
    %v1137 = vadd.f32 %v1114, %v1135
    %v1138 = vxor.u32 %v1137, 2147483648
    %v1139 = vmul.f32 %v1138, 1.442695
    %v1140 = vpow.pop %v1139
    %v1141 = vadd.f32 %v1140, 1.0
    %v1142 = vrcp.pop %v1141
    %v1143 = vmul.f32 %v1141, %v1142
    %v1144 = vsub.f32 1.0, %v1143
    %v1145 = vmul.f32 %v1142, %v1144
    %v1146 = vadd.f32 %v1142, %v1145
    %vm1147 = vweird.f32 %v1141
    %vm1148 = vweird.f32 %v1142
    %vm1149 = vmor %vm1147, %vm1148
    %v1150 = vsel %vm1149, %v1142, %v1146
    %v1151 = vand.u32 2147483647, %v1141
    %vm1152 = vcmp.eq.f32.partialorder %v1151, 8.507059e+37
    %v1153 = vand.u32 %v1141, 2147483648
    %v1154 = vor.u32 1.1754944e-38, %v1153
    %v1155 = vsel %vm1152, %v1154, %v1150
    %v1156 = vmul.f32 1.0, %v1155
    %v1157 = vtanh.pop %v1137
    %v1158 = vmul.f32 %v1156, %v1102
    %1160 = vrot.lane.b32.xlu0 %v1157, 64
    %v1161 = vpop.permute.xlu0 %1160
    %v1163 = vmul.f32 %v1156, %v1161
    %1165 = vrot.lane.b32.xlu0 %v1163, 32
    %v1166 = vpop.permute.xlu0 %1165
    %v1168 = vadd.f32 %v1158, %v1166
    %v1169 = vtanh.pop %v1168
    %1171 = vrot.lane.b32.xlu0 %v1169, 64
    %v1172 = vpop.permute.xlu0 %1171
    %v1174 = vmul.f32 %v1156, %v1172
    %1176 = vrot.lane.b32.xlu0 %v1174, 32
    %v1177 = vpop.permute.xlu0 %1176
    %1179 = vst.msk [vmem:[#allocation3 + $0x8] sm:$0x3] %vm169, %v1177
    %v1180 = vld [vmem:[#allocation2 + $0xa] sm:$0x3]
    %v1181 = vsel %vm103, %v1177, 0
    %1183 = vmatpush.msra.mxu0 0.0
    %1184 = vmatpush.msra.mxu0 0.0
    %1185 = vmatpush.msra.mxu0 0.0
    %1186 = vmatpush.msra.mxu0 0.0
    %1187 = vmatpush.msra.mxu0 0.0
    %1188 = vmatpush.msra.mxu0 0.0
    %1189 = vmatpush.msra.mxu0 0.0
    %1190 = vmatpush.msra.mxu0 0.0
    %1191 = vmatpush.msra.mxu0 0.0
    %1192 = vmatpush.msra.mxu0 0.0
    %1193 = vmatpush.msra.mxu0 0.0
    %1194 = vmatpush.msra.mxu0 0.0
    %1195 = vmatpush.msra.mxu0 %v851
    %1196 = vmatpush.msra.mxu0 %v850
    %1197 = vmatpush.msra.mxu0 %v849
    %1198 = vmatpush.msra.mxu0 %v848
    %1199 = vmatmul.f32.gmra.mxu0 %v1181
    %v1200 = vpop.f32.mrf.mxu0
    %v1201 = vadd.f32 0.0, %v1200
    %1202 = vdwg.mxu0
    %v1203 = vadd.f32 %v1180, %v1201
    %v1204 = vxor.u32 %v1203, 2147483648
    %v1205 = vmul.f32 %v1204, 1.442695
    %v1206 = vpow.pop %v1205
    %v1207 = vadd.f32 %v1206, 1.0
    %v1208 = vrcp.pop %v1207
    %v1209 = vmul.f32 %v1207, %v1208
    %v1210 = vsub.f32 1.0, %v1209
    %v1211 = vmul.f32 %v1208, %v1210
    %v1212 = vadd.f32 %v1208, %v1211
    %vm1213 = vweird.f32 %v1207
    %vm1214 = vweird.f32 %v1208
    %vm1215 = vmor %vm1213, %vm1214
    %v1216 = vsel %vm1215, %v1208, %v1212
    %v1217 = vand.u32 2147483647, %v1207
    %vm1218 = vcmp.eq.f32.partialorder %v1217, 8.507059e+37
    %v1219 = vand.u32 %v1207, 2147483648
    %v1220 = vor.u32 1.1754944e-38, %v1219
    %v1221 = vsel %vm1218, %v1220, %v1216
    %v1222 = vmul.f32 1.0, %v1221
    %v1223 = vtanh.pop %v1203
    %v1224 = vmul.f32 %v1222, %v1168
    %1226 = vrot.lane.b32.xlu0 %v1223, 64
    %v1227 = vpop.permute.xlu0 %1226
    %v1229 = vmul.f32 %v1222, %v1227
    %1231 = vrot.lane.b32.xlu0 %v1229, 32
    %v1232 = vpop.permute.xlu0 %1231
    %v1234 = vadd.f32 %v1224, %v1232
    %v1235 = vtanh.pop %v1234
    %1237 = vrot.lane.b32.xlu0 %v1235, 64
    %v1238 = vpop.permute.xlu0 %1237
    %v1240 = vmul.f32 %v1222, %v1238
    %1242 = vrot.lane.b32.xlu0 %v1240, 32
    %v1243 = vpop.permute.xlu0 %1242
    %1245 = vst.msk [vmem:[#allocation3 + $0xa] sm:$0x3] %vm169, %v1243
    %v1246 = vld [vmem:[#allocation2 + $0xc] sm:$0x3]
    %v1247 = vsel %vm103, %v1243, 0
    %1249 = vmatpush.msra.mxu0 0.0
    %1250 = vmatpush.msra.mxu0 0.0
    %1251 = vmatpush.msra.mxu0 0.0
    %1252 = vmatpush.msra.mxu0 0.0
    %1253 = vmatpush.msra.mxu0 0.0
    %1254 = vmatpush.msra.mxu0 0.0
    %1255 = vmatpush.msra.mxu0 0.0
    %1256 = vmatpush.msra.mxu0 0.0
    %1257 = vmatpush.msra.mxu0 0.0
    %1258 = vmatpush.msra.mxu0 0.0
    %1259 = vmatpush.msra.mxu0 0.0
    %1260 = vmatpush.msra.mxu0 0.0
    %1261 = vmatpush.msra.mxu0 %v851
    %1262 = vmatpush.msra.mxu0 %v850
    %1263 = vmatpush.msra.mxu0 %v849
    %1264 = vmatpush.msra.mxu0 %v848
    %1265 = vmatmul.f32.gmra.mxu0 %v1247
    %v1266 = vpop.f32.mrf.mxu0
    %v1267 = vadd.f32 0.0, %v1266
    %1268 = vdwg.mxu0
    %v1269 = vadd.f32 %v1246, %v1267
    %v1270 = vxor.u32 %v1269, 2147483648
    %v1271 = vmul.f32 %v1270, 1.442695
    %v1272 = vpow.pop %v1271
    %v1273 = vadd.f32 %v1272, 1.0
    %v1274 = vrcp.pop %v1273
    %v1275 = vmul.f32 %v1273, %v1274
    %v1276 = vsub.f32 1.0, %v1275
    %v1277 = vmul.f32 %v1274, %v1276
    %v1278 = vadd.f32 %v1274, %v1277
    %vm1279 = vweird.f32 %v1273
    %vm1280 = vweird.f32 %v1274
    %vm1281 = vmor %vm1279, %vm1280
    %v1282 = vsel %vm1281, %v1274, %v1278
    %v1283 = vand.u32 2147483647, %v1273
    %vm1284 = vcmp.eq.f32.partialorder %v1283, 8.507059e+37
    %v1285 = vand.u32 %v1273, 2147483648
    %v1286 = vor.u32 1.1754944e-38, %v1285
    %v1287 = vsel %vm1284, %v1286, %v1282
    %v1288 = vmul.f32 1.0, %v1287
    %v1289 = vtanh.pop %v1269
    %v1290 = vmul.f32 %v1288, %v1234
    %1292 = vrot.lane.b32.xlu0 %v1289, 64
    %v1293 = vpop.permute.xlu0 %1292
    %v1295 = vmul.f32 %v1288, %v1293
    %1297 = vrot.lane.b32.xlu0 %v1295, 32
    %v1298 = vpop.permute.xlu0 %1297
    %v1300 = vadd.f32 %v1290, %v1298
    %v1301 = vtanh.pop %v1300
    %1303 = vrot.lane.b32.xlu0 %v1301, 64
    %v1304 = vpop.permute.xlu0 %1303
    %v1306 = vmul.f32 %v1288, %v1304
    %1308 = vrot.lane.b32.xlu0 %v1306, 32
    %v1309 = vpop.permute.xlu0 %1308
    %1311 = vst.msk [vmem:[#allocation3 + $0xc] sm:$0x3] %vm169, %v1309
    %v1312 = vld [vmem:[#allocation2 + $0xe] sm:$0x3]
    %v1313 = vsel %vm103, %v1309, 0
    %1315 = vmatpush.msra.mxu0 0.0
    %1316 = vmatpush.msra.mxu0 0.0
    %1317 = vmatpush.msra.mxu0 0.0
    %1318 = vmatpush.msra.mxu0 0.0
    %1319 = vmatpush.msra.mxu0 0.0
    %1320 = vmatpush.msra.mxu0 0.0
    %1321 = vmatpush.msra.mxu0 0.0
    %1322 = vmatpush.msra.mxu0 0.0
    %1323 = vmatpush.msra.mxu0 0.0
    %1324 = vmatpush.msra.mxu0 0.0
    %1325 = vmatpush.msra.mxu0 0.0
    %1326 = vmatpush.msra.mxu0 0.0
    %1327 = vmatpush.msra.mxu0 %v851
    %1328 = vmatpush.msra.mxu0 %v850
    %1329 = vmatpush.msra.mxu0 %v849
    %1330 = vmatpush.msra.mxu0 %v848
    %1331 = vmatmul.f32.gmra.mxu0 %v1313
    %v1332 = vpop.f32.mrf.mxu0
    %v1333 = vadd.f32 0.0, %v1332
    %1334 = vdwg.mxu0
    %v1335 = vadd.f32 %v1312, %v1333
    %v1336 = vxor.u32 %v1335, 2147483648
    %v1337 = vmul.f32 %v1336, 1.442695
    %v1338 = vpow.pop %v1337
    %v1339 = vadd.f32 %v1338, 1.0
    %v1340 = vrcp.pop %v1339
    %v1341 = vmul.f32 %v1339, %v1340
    %v1342 = vsub.f32 1.0, %v1341
    %v1343 = vmul.f32 %v1340, %v1342
    %v1344 = vadd.f32 %v1340, %v1343
    %vm1345 = vweird.f32 %v1339
    %vm1346 = vweird.f32 %v1340
    %vm1347 = vmor %vm1345, %vm1346
    %v1348 = vsel %vm1347, %v1340, %v1344
    %v1349 = vand.u32 2147483647, %v1339
    %vm1350 = vcmp.eq.f32.partialorder %v1349, 8.507059e+37
    %v1351 = vand.u32 %v1339, 2147483648
    %v1352 = vor.u32 1.1754944e-38, %v1351
    %v1353 = vsel %vm1350, %v1352, %v1348
    %v1354 = vmul.f32 1.0, %v1353
    %v1355 = vtanh.pop %v1335
    %v1356 = vmul.f32 %v1354, %v1300
    %1358 = vrot.lane.b32.xlu0 %v1355, 64
    %v1359 = vpop.permute.xlu0 %1358
    %v1361 = vmul.f32 %v1354, %v1359
    %1363 = vrot.lane.b32.xlu0 %v1361, 32
    %v1364 = vpop.permute.xlu0 %1363
    %v1366 = vadd.f32 %v1356, %v1364
    %v1367 = vtanh.pop %v1366
    %1369 = vrot.lane.b32.xlu0 %v1367, 64
    %v1370 = vpop.permute.xlu0 %1369
    %v1372 = vmul.f32 %v1354, %v1370
    %1374 = vrot.lane.b32.xlu0 %v1372, 32
    %v1375 = vpop.permute.xlu0 %1374
    %1377 = vst.msk [vmem:[#allocation3 + $0xe] sm:$0x3] %vm169, %v1375
    %v1378 = vld [vmem:[#allocation11] sm:$0xff]
    %v1379 = vld [vmem:[#allocation11 + $0x8] sm:$0xff]
    %v1380 = vld [vmem:[#allocation11 + $0x10] sm:$0xff]
    %v1381 = vld [vmem:[#allocation11 + $0x18] sm:$0xff]
    %v1382 = vld [vmem:[%s6] sm:$0x1]
    %v1383 = vld [vmem:[%s7] sm:$0xff]
    %v1384 = vld [vmem:[%s7 + $0x8] sm:$0xff]
    %v1385 = vld [vmem:[%s7 + $0x10] sm:$0xff]
    %v1386 = vld [vmem:[%s7 + $0x18] sm:$0xff]
    %v1387 = vld [vmem:[#allocation4] sm:$0x1]
    %v1388 = vld [vmem:[#allocation3] sm:$0x3]
    %v1390 = vperm.slane %v1382, 0
    %v1393 = vsel %vm103, %v1388, 0
    %1395 = vmatpush.msra.mxu0 0.0
    %1396 = vmatpush.msra.mxu0 0.0
    %1397 = vmatpush.msra.mxu0 0.0
    %1398 = vmatpush.msra.mxu0 0.0
    %1399 = vmatpush.msra.mxu0 0.0
    %1400 = vmatpush.msra.mxu0 0.0
    %1401 = vmatpush.msra.mxu0 0.0
    %1402 = vmatpush.msra.mxu0 0.0
    %1403 = vmatpush.msra.mxu0 0.0
    %1404 = vmatpush.msra.mxu0 0.0
    %1405 = vmatpush.msra.mxu0 0.0
    %1406 = vmatpush.msra.mxu0 0.0
    %1407 = vmatpush.msra.mxu0 %v1381
    %1408 = vmatpush.msra.mxu0 %v1380
    %1409 = vmatpush.msra.mxu0 %v1379
    %1410 = vmatpush.msra.mxu0 %v1378
    %1411 = vmatmul.f32.gmra.mxu0 %v1393
    %v1412 = vpop.f32.mrf.mxu0
    %v1413 = vadd.f32 %v1390, %v1412
    %1414 = vdwg.mxu0
    %v1415 = vtanh.pop %v1413
    %v1417 = vperm.slane %v1387, 0
    %v1420 = vsel %vm103, %v1415, 0
    %1422 = vmatpush.msra.mxu0 0.0
    %1423 = vmatpush.msra.mxu0 0.0
    %1424 = vmatpush.msra.mxu0 0.0
    %1425 = vmatpush.msra.mxu0 0.0
    %1426 = vmatpush.msra.mxu0 0.0
    %1427 = vmatpush.msra.mxu0 0.0
    %1428 = vmatpush.msra.mxu0 0.0
    %1429 = vmatpush.msra.mxu0 0.0
    %1430 = vmatpush.msra.mxu0 0.0
    %1431 = vmatpush.msra.mxu0 0.0
    %1432 = vmatpush.msra.mxu0 0.0
    %1433 = vmatpush.msra.mxu0 0.0
    %1434 = vmatpush.msra.mxu0 %v1386
    %1435 = vmatpush.msra.mxu0 %v1385
    %1436 = vmatpush.msra.mxu0 %v1384
    %1437 = vmatpush.msra.mxu0 %v1383
    %1438 = vmatmul.f32.gmra.mxu0 %v1420
    %v1439 = vpop.f32.mrf.mxu0
    %v1440 = vadd.f32 %v1417, %v1439
    %1441 = vdwg.mxu0
    %v1442 = vsub.f32 -inf, %v1440
    %v1443 = vmul.f32 %v1442, 1.442695
    %v1444 = vpow.pop %v1443
    %v1445 = vsub.f32 %v1440, %v1440
    %v1446 = vmul.f32 %v1445, 1.442695
    %v1447 = vpow.pop %v1446
    %v1448 = vmul.f32 %v1444, 0.0
    %v1449 = vadd.f32 %v1448, %v1447
    %1451 = vset.pattern.permute.xlu0 0
    %1452 = vperm.xlu0 %1451, %v1444
    %v1453 = vpop.permute.xlu0 %1452
    %v1455 = vmul.f32 %v1453, 0.0
    %1457 = vset.pattern.permute.xlu0 0
    %1458 = vperm.xlu0 %1457, %v1447
    %v1459 = vpop.permute.xlu0 %1458
    %v1461 = vmul.f32 %v1459, %v1388
    %v1462 = vadd.f32 %v1455, %v1461
    %v1463 = vld [vmem:[#allocation3 + $0x2] sm:$0x3]
    %v1465 = vsel %vm103, %v1463, 0
    %1467 = vmatpush.msra.mxu0 0.0
    %1468 = vmatpush.msra.mxu0 0.0
    %1469 = vmatpush.msra.mxu0 0.0
    %1470 = vmatpush.msra.mxu0 0.0
    %1471 = vmatpush.msra.mxu0 0.0
    %1472 = vmatpush.msra.mxu0 0.0
    %1473 = vmatpush.msra.mxu0 0.0
    %1474 = vmatpush.msra.mxu0 0.0
    %1475 = vmatpush.msra.mxu0 0.0
    %1476 = vmatpush.msra.mxu0 0.0
    %1477 = vmatpush.msra.mxu0 0.0
    %1478 = vmatpush.msra.mxu0 0.0
    %1479 = vmatpush.msra.mxu0 %v1381
    %1480 = vmatpush.msra.mxu0 %v1380
    %1481 = vmatpush.msra.mxu0 %v1379
    %1482 = vmatpush.msra.mxu0 %v1378
    %1483 = vmatmul.f32.gmra.mxu0 %v1465
    %v1484 = vpop.f32.mrf.mxu0
    %v1485 = vadd.f32 %v1390, %v1484
    %1486 = vdwg.mxu0
    %v1487 = vtanh.pop %v1485
    %v1489 = vsel %vm103, %v1487, 0
    %1491 = vmatpush.msra.mxu0 0.0
    %1492 = vmatpush.msra.mxu0 0.0
    %1493 = vmatpush.msra.mxu0 0.0
    %1494 = vmatpush.msra.mxu0 0.0
    %1495 = vmatpush.msra.mxu0 0.0
    %1496 = vmatpush.msra.mxu0 0.0
    %1497 = vmatpush.msra.mxu0 0.0
    %1498 = vmatpush.msra.mxu0 0.0
    %1499 = vmatpush.msra.mxu0 0.0
    %1500 = vmatpush.msra.mxu0 0.0
    %1501 = vmatpush.msra.mxu0 0.0
    %1502 = vmatpush.msra.mxu0 0.0
    %1503 = vmatpush.msra.mxu0 %v1386
    %1504 = vmatpush.msra.mxu0 %v1385
    %1505 = vmatpush.msra.mxu0 %v1384
    %1506 = vmatpush.msra.mxu0 %v1383
    %1507 = vmatmul.f32.gmra.mxu0 %v1489
    %v1508 = vpop.f32.mrf.mxu0
    %v1509 = vadd.f32 %v1417, %v1508
    %1510 = vdwg.mxu0
    %v1511 = vmax.f32 %v1440, %v1509
    %v1512 = vsub.f32 %v1440, %v1511
    %v1513 = vmul.f32 %v1512, 1.442695
    %v1514 = vpow.pop %v1513
    %v1515 = vsub.f32 %v1509, %v1511
    %v1516 = vmul.f32 %v1515, 1.442695
    %v1517 = vpow.pop %v1516
    %v1518 = vmul.f32 %v1514, %v1449
    %v1519 = vadd.f32 %v1518, %v1517
    %1521 = vset.pattern.permute.xlu0 0
    %1522 = vperm.xlu0 %1521, %v1514
    %v1523 = vpop.permute.xlu0 %1522
    %v1525 = vmul.f32 %v1523, %v1462
    %1527 = vset.pattern.permute.xlu0 0
    %1528 = vperm.xlu0 %1527, %v1517
    %v1529 = vpop.permute.xlu0 %1528
    %v1531 = vmul.f32 %v1529, %v1463
    %v1532 = vadd.f32 %v1525, %v1531
    %v1533 = vld [vmem:[#allocation3 + $0x4] sm:$0x3]
    %v1535 = vsel %vm103, %v1533, 0
    %1537 = vmatpush.msra.mxu0 0.0
    %1538 = vmatpush.msra.mxu0 0.0
    %1539 = vmatpush.msra.mxu0 0.0
    %1540 = vmatpush.msra.mxu0 0.0
    %1541 = vmatpush.msra.mxu0 0.0
    %1542 = vmatpush.msra.mxu0 0.0
    %1543 = vmatpush.msra.mxu0 0.0
    %1544 = vmatpush.msra.mxu0 0.0
    %1545 = vmatpush.msra.mxu0 0.0
    %1546 = vmatpush.msra.mxu0 0.0
    %1547 = vmatpush.msra.mxu0 0.0
    %1548 = vmatpush.msra.mxu0 0.0
    %1549 = vmatpush.msra.mxu0 %v1381
    %1550 = vmatpush.msra.mxu0 %v1380
    %1551 = vmatpush.msra.mxu0 %v1379
    %1552 = vmatpush.msra.mxu0 %v1378
    %1553 = vmatmul.f32.gmra.mxu0 %v1535
    %v1554 = vpop.f32.mrf.mxu0
    %v1555 = vadd.f32 %v1390, %v1554
    %1556 = vdwg.mxu0
    %v1557 = vtanh.pop %v1555
    %v1559 = vsel %vm103, %v1557, 0
    %1561 = vmatpush.msra.mxu0 0.0
    %1562 = vmatpush.msra.mxu0 0.0
    %1563 = vmatpush.msra.mxu0 0.0
    %1564 = vmatpush.msra.mxu0 0.0
    %1565 = vmatpush.msra.mxu0 0.0
    %1566 = vmatpush.msra.mxu0 0.0
    %1567 = vmatpush.msra.mxu0 0.0
    %1568 = vmatpush.msra.mxu0 0.0
    %1569 = vmatpush.msra.mxu0 0.0
    %1570 = vmatpush.msra.mxu0 0.0
    %1571 = vmatpush.msra.mxu0 0.0
    %1572 = vmatpush.msra.mxu0 0.0
    %1573 = vmatpush.msra.mxu0 %v1386
    %1574 = vmatpush.msra.mxu0 %v1385
    %1575 = vmatpush.msra.mxu0 %v1384
    %1576 = vmatpush.msra.mxu0 %v1383
    %1577 = vmatmul.f32.gmra.mxu0 %v1559
    %v1578 = vpop.f32.mrf.mxu0
    %v1579 = vadd.f32 %v1417, %v1578
    %1580 = vdwg.mxu0
    %v1581 = vmax.f32 %v1511, %v1579
    %v1582 = vsub.f32 %v1511, %v1581
    %v1583 = vmul.f32 %v1582, 1.442695
    %v1584 = vpow.pop %v1583
    %v1585 = vsub.f32 %v1579, %v1581
    %v1586 = vmul.f32 %v1585, 1.442695
    %v1587 = vpow.pop %v1586
    %v1588 = vmul.f32 %v1584, %v1519
    %v1589 = vadd.f32 %v1588, %v1587
    %1591 = vset.pattern.permute.xlu0 0
    %1592 = vperm.xlu0 %1591, %v1584
    %v1593 = vpop.permute.xlu0 %1592
    %v1595 = vmul.f32 %v1593, %v1532
    %1597 = vset.pattern.permute.xlu0 0
    %1598 = vperm.xlu0 %1597, %v1587
    %v1599 = vpop.permute.xlu0 %1598
    %v1601 = vmul.f32 %v1599, %v1533
    %v1602 = vadd.f32 %v1595, %v1601
    %v1603 = vld [vmem:[#allocation3 + $0x6] sm:$0x3]
    %v1605 = vsel %vm103, %v1603, 0
    %1607 = vmatpush.msra.mxu0 0.0
    %1608 = vmatpush.msra.mxu0 0.0
    %1609 = vmatpush.msra.mxu0 0.0
    %1610 = vmatpush.msra.mxu0 0.0
    %1611 = vmatpush.msra.mxu0 0.0
    %1612 = vmatpush.msra.mxu0 0.0
    %1613 = vmatpush.msra.mxu0 0.0
    %1614 = vmatpush.msra.mxu0 0.0
    %1615 = vmatpush.msra.mxu0 0.0
    %1616 = vmatpush.msra.mxu0 0.0
    %1617 = vmatpush.msra.mxu0 0.0
    %1618 = vmatpush.msra.mxu0 0.0
    %1619 = vmatpush.msra.mxu0 %v1381
    %1620 = vmatpush.msra.mxu0 %v1380
    %1621 = vmatpush.msra.mxu0 %v1379
    %1622 = vmatpush.msra.mxu0 %v1378
    %1623 = vmatmul.f32.gmra.mxu0 %v1605
    %v1624 = vpop.f32.mrf.mxu0
    %v1625 = vadd.f32 %v1390, %v1624
    %1626 = vdwg.mxu0
    %v1627 = vtanh.pop %v1625
    %v1629 = vsel %vm103, %v1627, 0
    %1631 = vmatpush.msra.mxu0 0.0
    %1632 = vmatpush.msra.mxu0 0.0
    %1633 = vmatpush.msra.mxu0 0.0
    %1634 = vmatpush.msra.mxu0 0.0
    %1635 = vmatpush.msra.mxu0 0.0
    %1636 = vmatpush.msra.mxu0 0.0
    %1637 = vmatpush.msra.mxu0 0.0
    %1638 = vmatpush.msra.mxu0 0.0
    %1639 = vmatpush.msra.mxu0 0.0
    %1640 = vmatpush.msra.mxu0 0.0
    %1641 = vmatpush.msra.mxu0 0.0
    %1642 = vmatpush.msra.mxu0 0.0
    %1643 = vmatpush.msra.mxu0 %v1386
    %1644 = vmatpush.msra.mxu0 %v1385
    %1645 = vmatpush.msra.mxu0 %v1384
    %1646 = vmatpush.msra.mxu0 %v1383
    %1647 = vmatmul.f32.gmra.mxu0 %v1629
    %v1648 = vpop.f32.mrf.mxu0
    %v1649 = vadd.f32 %v1417, %v1648
    %1650 = vdwg.mxu0
    %v1651 = vmax.f32 %v1581, %v1649
    %v1652 = vsub.f32 %v1581, %v1651
    %v1653 = vmul.f32 %v1652, 1.442695
    %v1654 = vpow.pop %v1653
    %v1655 = vsub.f32 %v1649, %v1651
    %v1656 = vmul.f32 %v1655, 1.442695
    %v1657 = vpow.pop %v1656
    %v1658 = vmul.f32 %v1654, %v1589
    %v1659 = vadd.f32 %v1658, %v1657
    %1661 = vset.pattern.permute.xlu0 0
    %1662 = vperm.xlu0 %1661, %v1654
    %v1663 = vpop.permute.xlu0 %1662
    %v1665 = vmul.f32 %v1663, %v1602
    %1667 = vset.pattern.permute.xlu0 0
    %1668 = vperm.xlu0 %1667, %v1657
    %v1669 = vpop.permute.xlu0 %1668
    %v1671 = vmul.f32 %v1669, %v1603
    %v1672 = vadd.f32 %v1665, %v1671
    %v1673 = vld [vmem:[#allocation3 + $0x8] sm:$0x3]
    %v1675 = vsel %vm103, %v1673, 0
    %1677 = vmatpush.msra.mxu0 0.0
    %1678 = vmatpush.msra.mxu0 0.0
    %1679 = vmatpush.msra.mxu0 0.0
    %1680 = vmatpush.msra.mxu0 0.0
    %1681 = vmatpush.msra.mxu0 0.0
    %1682 = vmatpush.msra.mxu0 0.0
    %1683 = vmatpush.msra.mxu0 0.0
    %1684 = vmatpush.msra.mxu0 0.0
    %1685 = vmatpush.msra.mxu0 0.0
    %1686 = vmatpush.msra.mxu0 0.0
    %1687 = vmatpush.msra.mxu0 0.0
    %1688 = vmatpush.msra.mxu0 0.0
    %1689 = vmatpush.msra.mxu0 %v1381
    %1690 = vmatpush.msra.mxu0 %v1380
    %1691 = vmatpush.msra.mxu0 %v1379
    %1692 = vmatpush.msra.mxu0 %v1378
    %1693 = vmatmul.f32.gmra.mxu0 %v1675
    %v1694 = vpop.f32.mrf.mxu0
    %v1695 = vadd.f32 %v1390, %v1694
    %1696 = vdwg.mxu0
    %v1697 = vtanh.pop %v1695
    %v1699 = vsel %vm103, %v1697, 0
    %1701 = vmatpush.msra.mxu0 0.0
    %1702 = vmatpush.msra.mxu0 0.0
    %1703 = vmatpush.msra.mxu0 0.0
    %1704 = vmatpush.msra.mxu0 0.0
    %1705 = vmatpush.msra.mxu0 0.0
    %1706 = vmatpush.msra.mxu0 0.0
    %1707 = vmatpush.msra.mxu0 0.0
    %1708 = vmatpush.msra.mxu0 0.0
    %1709 = vmatpush.msra.mxu0 0.0
    %1710 = vmatpush.msra.mxu0 0.0
    %1711 = vmatpush.msra.mxu0 0.0
    %1712 = vmatpush.msra.mxu0 0.0
    %1713 = vmatpush.msra.mxu0 %v1386
    %1714 = vmatpush.msra.mxu0 %v1385
    %1715 = vmatpush.msra.mxu0 %v1384
    %1716 = vmatpush.msra.mxu0 %v1383
    %1717 = vmatmul.f32.gmra.mxu0 %v1699
    %v1718 = vpop.f32.mrf.mxu0
    %v1719 = vadd.f32 %v1417, %v1718
    %1720 = vdwg.mxu0
    %v1721 = vmax.f32 %v1651, %v1719
    %v1722 = vsub.f32 %v1651, %v1721
    %v1723 = vmul.f32 %v1722, 1.442695
    %v1724 = vpow.pop %v1723
    %v1725 = vsub.f32 %v1719, %v1721
    %v1726 = vmul.f32 %v1725, 1.442695
    %v1727 = vpow.pop %v1726
    %v1728 = vmul.f32 %v1724, %v1659
    %v1729 = vadd.f32 %v1728, %v1727
    %1731 = vset.pattern.permute.xlu0 0
    %1732 = vperm.xlu0 %1731, %v1724
    %v1733 = vpop.permute.xlu0 %1732
    %v1735 = vmul.f32 %v1733, %v1672
    %1737 = vset.pattern.permute.xlu0 0
    %1738 = vperm.xlu0 %1737, %v1727
    %v1739 = vpop.permute.xlu0 %1738
    %v1741 = vmul.f32 %v1739, %v1673
    %v1742 = vadd.f32 %v1735, %v1741
    %v1743 = vld [vmem:[#allocation3 + $0xa] sm:$0x3]
    %v1745 = vsel %vm103, %v1743, 0
    %1747 = vmatpush.msra.mxu0 0.0
    %1748 = vmatpush.msra.mxu0 0.0
    %1749 = vmatpush.msra.mxu0 0.0
    %1750 = vmatpush.msra.mxu0 0.0
    %1751 = vmatpush.msra.mxu0 0.0
    %1752 = vmatpush.msra.mxu0 0.0
    %1753 = vmatpush.msra.mxu0 0.0
    %1754 = vmatpush.msra.mxu0 0.0
    %1755 = vmatpush.msra.mxu0 0.0
    %1756 = vmatpush.msra.mxu0 0.0
    %1757 = vmatpush.msra.mxu0 0.0
    %1758 = vmatpush.msra.mxu0 0.0
    %1759 = vmatpush.msra.mxu0 %v1381
    %1760 = vmatpush.msra.mxu0 %v1380
    %1761 = vmatpush.msra.mxu0 %v1379
    %1762 = vmatpush.msra.mxu0 %v1378
    %1763 = vmatmul.f32.gmra.mxu0 %v1745
    %v1764 = vpop.f32.mrf.mxu0
    %v1765 = vadd.f32 %v1390, %v1764
    %1766 = vdwg.mxu0
    %v1767 = vtanh.pop %v1765
    %v1769 = vsel %vm103, %v1767, 0
    %1771 = vmatpush.msra.mxu0 0.0
    %1772 = vmatpush.msra.mxu0 0.0
    %1773 = vmatpush.msra.mxu0 0.0
    %1774 = vmatpush.msra.mxu0 0.0
    %1775 = vmatpush.msra.mxu0 0.0
    %1776 = vmatpush.msra.mxu0 0.0
    %1777 = vmatpush.msra.mxu0 0.0
    %1778 = vmatpush.msra.mxu0 0.0
    %1779 = vmatpush.msra.mxu0 0.0
    %1780 = vmatpush.msra.mxu0 0.0
    %1781 = vmatpush.msra.mxu0 0.0
    %1782 = vmatpush.msra.mxu0 0.0
    %1783 = vmatpush.msra.mxu0 %v1386
    %1784 = vmatpush.msra.mxu0 %v1385
    %1785 = vmatpush.msra.mxu0 %v1384
    %1786 = vmatpush.msra.mxu0 %v1383
    %1787 = vmatmul.f32.gmra.mxu0 %v1769
    %v1788 = vpop.f32.mrf.mxu0
    %v1789 = vadd.f32 %v1417, %v1788
    %1790 = vdwg.mxu0
    %v1791 = vmax.f32 %v1721, %v1789
    %v1792 = vsub.f32 %v1721, %v1791
    %v1793 = vmul.f32 %v1792, 1.442695
    %v1794 = vpow.pop %v1793
    %v1795 = vsub.f32 %v1789, %v1791
    %v1796 = vmul.f32 %v1795, 1.442695
    %v1797 = vpow.pop %v1796
    %v1798 = vmul.f32 %v1794, %v1729
    %v1799 = vadd.f32 %v1798, %v1797
    %1801 = vset.pattern.permute.xlu0 0
    %1802 = vperm.xlu0 %1801, %v1794
    %v1803 = vpop.permute.xlu0 %1802
    %v1805 = vmul.f32 %v1803, %v1742
    %1807 = vset.pattern.permute.xlu0 0
    %1808 = vperm.xlu0 %1807, %v1797
    %v1809 = vpop.permute.xlu0 %1808
    %v1811 = vmul.f32 %v1809, %v1743
    %v1812 = vadd.f32 %v1805, %v1811
    %v1813 = vld [vmem:[#allocation3 + $0xc] sm:$0x3]
    %v1815 = vsel %vm103, %v1813, 0
    %1817 = vmatpush.msra.mxu0 0.0
    %1818 = vmatpush.msra.mxu0 0.0
    %1819 = vmatpush.msra.mxu0 0.0
    %1820 = vmatpush.msra.mxu0 0.0
    %1821 = vmatpush.msra.mxu0 0.0
    %1822 = vmatpush.msra.mxu0 0.0
    %1823 = vmatpush.msra.mxu0 0.0
    %1824 = vmatpush.msra.mxu0 0.0
    %1825 = vmatpush.msra.mxu0 0.0
    %1826 = vmatpush.msra.mxu0 0.0
    %1827 = vmatpush.msra.mxu0 0.0
    %1828 = vmatpush.msra.mxu0 0.0
    %1829 = vmatpush.msra.mxu0 %v1381
    %1830 = vmatpush.msra.mxu0 %v1380
    %1831 = vmatpush.msra.mxu0 %v1379
    %1832 = vmatpush.msra.mxu0 %v1378
    %1833 = vmatmul.f32.gmra.mxu0 %v1815
    %v1834 = vpop.f32.mrf.mxu0
    %v1835 = vadd.f32 %v1390, %v1834
    %1836 = vdwg.mxu0
    %v1837 = vtanh.pop %v1835
    %v1839 = vsel %vm103, %v1837, 0
    %1841 = vmatpush.msra.mxu0 0.0
    %1842 = vmatpush.msra.mxu0 0.0
    %1843 = vmatpush.msra.mxu0 0.0
    %1844 = vmatpush.msra.mxu0 0.0
    %1845 = vmatpush.msra.mxu0 0.0
    %1846 = vmatpush.msra.mxu0 0.0
    %1847 = vmatpush.msra.mxu0 0.0
    %1848 = vmatpush.msra.mxu0 0.0
    %1849 = vmatpush.msra.mxu0 0.0
    %1850 = vmatpush.msra.mxu0 0.0
    %1851 = vmatpush.msra.mxu0 0.0
    %1852 = vmatpush.msra.mxu0 0.0
    %1853 = vmatpush.msra.mxu0 %v1386
    %1854 = vmatpush.msra.mxu0 %v1385
    %1855 = vmatpush.msra.mxu0 %v1384
    %1856 = vmatpush.msra.mxu0 %v1383
    %1857 = vmatmul.f32.gmra.mxu0 %v1839
    %v1858 = vpop.f32.mrf.mxu0
    %v1859 = vadd.f32 %v1417, %v1858
    %1860 = vdwg.mxu0
    %v1861 = vmax.f32 %v1791, %v1859
    %v1862 = vsub.f32 %v1791, %v1861
    %v1863 = vmul.f32 %v1862, 1.442695
    %v1864 = vpow.pop %v1863
    %v1865 = vsub.f32 %v1859, %v1861
    %v1866 = vmul.f32 %v1865, 1.442695
    %v1867 = vpow.pop %v1866
    %v1868 = vmul.f32 %v1864, %v1799
    %v1869 = vadd.f32 %v1868, %v1867
    %1871 = vset.pattern.permute.xlu0 0
    %1872 = vperm.xlu0 %1871, %v1864
    %v1873 = vpop.permute.xlu0 %1872
    %v1875 = vmul.f32 %v1873, %v1812
    %1877 = vset.pattern.permute.xlu0 0
    %1878 = vperm.xlu0 %1877, %v1867
    %v1879 = vpop.permute.xlu0 %1878
    %v1881 = vmul.f32 %v1879, %v1813
    %v1882 = vadd.f32 %v1875, %v1881
    %v1883 = vld [vmem:[#allocation3 + $0xe] sm:$0x3]
    %v1885 = vsel %vm103, %v1883, 0
    %1887 = vmatpush.msra.mxu0 0.0
    %1888 = vmatpush.msra.mxu0 0.0
    %1889 = vmatpush.msra.mxu0 0.0
    %1890 = vmatpush.msra.mxu0 0.0
    %1891 = vmatpush.msra.mxu0 0.0
    %1892 = vmatpush.msra.mxu0 0.0
    %1893 = vmatpush.msra.mxu0 0.0
    %1894 = vmatpush.msra.mxu0 0.0
    %1895 = vmatpush.msra.mxu0 0.0
    %1896 = vmatpush.msra.mxu0 0.0
    %1897 = vmatpush.msra.mxu0 0.0
    %1898 = vmatpush.msra.mxu0 0.0
    %1899 = vmatpush.msra.mxu0 %v1381
    %1900 = vmatpush.msra.mxu0 %v1380
    %1901 = vmatpush.msra.mxu0 %v1379
    %1902 = vmatpush.msra.mxu0 %v1378
    %1903 = vmatmul.f32.gmra.mxu0 %v1885
    %v1904 = vpop.f32.mrf.mxu0
    %v1905 = vadd.f32 %v1390, %v1904
    %1906 = vdwg.mxu0
    %v1907 = vtanh.pop %v1905
    %v1909 = vsel %vm103, %v1907, 0
    %1911 = vmatpush.msra.mxu0 0.0
    %1912 = vmatpush.msra.mxu0 0.0
    %1913 = vmatpush.msra.mxu0 0.0
    %1914 = vmatpush.msra.mxu0 0.0
    %1915 = vmatpush.msra.mxu0 0.0
    %1916 = vmatpush.msra.mxu0 0.0
    %1917 = vmatpush.msra.mxu0 0.0
    %1918 = vmatpush.msra.mxu0 0.0
    %1919 = vmatpush.msra.mxu0 0.0
    %1920 = vmatpush.msra.mxu0 0.0
    %1921 = vmatpush.msra.mxu0 0.0
    %1922 = vmatpush.msra.mxu0 0.0
    %1923 = vmatpush.msra.mxu0 %v1386
    %1924 = vmatpush.msra.mxu0 %v1385
    %1925 = vmatpush.msra.mxu0 %v1384
    %1926 = vmatpush.msra.mxu0 %v1383
    %1927 = vmatmul.f32.gmra.mxu0 %v1909
    %v1928 = vpop.f32.mrf.mxu0
    %v1929 = vadd.f32 %v1417, %v1928
    %1930 = vdwg.mxu0
    %v1931 = vmax.f32 %v1861, %v1929
    %v1932 = vsub.f32 %v1861, %v1931
    %v1933 = vmul.f32 %v1932, 1.442695
    %v1934 = vpow.pop %v1933
    %v1935 = vsub.f32 %v1929, %v1931
    %v1936 = vmul.f32 %v1935, 1.442695
    %v1937 = vpow.pop %v1936
    %v1938 = vmul.f32 %v1934, %v1869
    %v1939 = vadd.f32 %v1938, %v1937
    %1941 = vset.pattern.permute.xlu0 0
    %1942 = vperm.xlu0 %1941, %v1934
    %v1943 = vpop.permute.xlu0 %1942
    %v1945 = vmul.f32 %v1943, %v1882
    %1947 = vset.pattern.permute.xlu0 0
    %1948 = vperm.xlu0 %1947, %v1937
    %v1949 = vpop.permute.xlu0 %1948
    %v1951 = vmul.f32 %v1949, %v1883
    %v1952 = vadd.f32 %v1945, %v1951
    %1954 = vset.pattern.permute.xlu0 0
    %1955 = vperm.xlu0 %1954, %v1939
    %v1956 = vpop.permute.xlu0 %1955
    %v1958 = vrcp.pop %v1956
    %v1959 = vmul.f32 %v1956, %v1958
    %v1960 = vsub.f32 1.0, %v1959
    %v1961 = vmul.f32 %v1958, %v1960
    %v1962 = vadd.f32 %v1958, %v1961
    %vm1963 = vweird.f32 %v1956
    %vm1964 = vweird.f32 %v1958
    %vm1965 = vmor %vm1963, %vm1964
    %v1966 = vsel %vm1965, %v1958, %v1962
    %v1967 = vand.u32 2147483647, %v1956
    %vm1968 = vcmp.eq.f32.partialorder %v1967, 8.507059e+37
    %v1969 = vand.u32 %v1956, 2147483648
    %v1970 = vor.u32 1.1754944e-38, %v1969
    %v1971 = vsel %vm1968, %v1970, %v1966
    %v1972 = vmul.f32 %v1952, %v1971
    %1973 = vst.msk [vmem:[#allocation13] sm:$0x3] %vm169, %v1972
    // Predicated region
    $region54: #{tpu_custom_call.1} parent=1 // pred_check
      _
    $region55: #{tpu_custom_call.1} parent=1 // pred_check_branch
      %1975 = sbr.rel (0) target = $region57
    $region56: #{tpu_custom_call.1} parent=1 // pred_region
      %1977 = vsyncadd [#allocation7], 0
      %s1979 = sshll.u32 [#allocation13], 4
      %s1980 = int_to_ptr.vmem [resolvable:$true] %s1979
      %s1981 = sshll.u32 %s9, 4
      %s1982 = int_to_ptr.hbm [resolvable:$true] %s1981
      %1984 = dma.vmem_to_hbm [thread:$0]  %s1980, 32, %s1982, [#allocation7]
    $region57: #{tpu_custom_call.1} parent=1 // pred_fallthru
      _
    // Predicated region
    $region58: #{tpu_custom_call.1} parent=1 // pred_check
      _
    $region59: #{tpu_custom_call.1} parent=1 // pred_check_branch
      %1986 = sbr.rel (0) target = $region61
    $region60: #{tpu_custom_call.1} parent=1 // pred_region
      %1988 = dma.done [#allocation7], 32
    $region61: #{tpu_custom_call.1} parent=1 // pred_fallthru
      _
    %1989 = vsyncpa [#allocation6], 1
    %1990 = vsyncpa [#allocation9], 1
    %1991 = vsyncpa [#allocation12], 1
    %1992 = vsyncpa [#allocation7], 1

</llo_original>
